<compile_context>
chip_gen: v5e
topology: v5e:2x2
jax: 0.10.0
libtpu: 0.0.40
codegen_flags: <defaults>
</compile_context>

<pallas_src>
import functools

import jax
import jax.numpy as jnp
from jax import lax
from jax.experimental import pallas as pl
from jax.experimental.pallas import tpu as pltpu

_LANE = 128


def _round_up(v, m):
    return -(-v // m) * m


def _bigru_kernel(gi_ref, whh_ref, bhh_ref, ofw_ref, obw_ref):
    """Fused fwd+bwd GRU recurrence (input->gate matmul already hoisted).

    gi_ref  : (L, Bb, 6*Hp) precomputed x@W_ih + b_ih; lane layout per step is
              [r_f | r_b | z_f | z_b | n_f | n_b] (each Hp wide) and the backward
              stream is already time-reversed, so step t reads the right slice
              for both directions with a single load.
    whh_ref : (2*Hp, 6*Hp)  block-diagonal hidden->gate weights, both directions.
    bhh_ref : (1, 6*Hp)     hidden biases (kept separate from gi because the
                            n-gate bias sits inside the r-scaled term, as in
                            PyTorch's GRU).
    ofw_ref : (L, Bb, Hp)   forward outputs, time-aligned.
    obw_ref : (L, Bb, Hp)   backward outputs, time-aligned (obw[0] = final bwd h).
    """
    L, Bb, G6 = gi_ref.shape
    G2 = G6 // 3          # 2*Hp : one gate, both directions
    Hp = G2 // 2

    whh = whh_ref[...]                                     # loaded once
    bhh = jnp.broadcast_to(bhh_ref[...], (Bb, G6))         # broadcast hoisted out of loop

    def step(t, h):
        gi = gi_ref[t]                                     # (Bb, 6Hp), lane-dense load
        gh = jnp.dot(h, whh, preferred_element_type=jnp.float32) + bhh
        r = jax.nn.sigmoid(gi[:, 0:G2] + gh[:, 0:G2])
        z = jax.nn.sigmoid(gi[:, G2:2 * G2] + gh[:, G2:2 * G2])
        n = jnp.tanh(gi[:, 2 * G2:3 * G2] + r * gh[:, 2 * G2:3 * G2])
        h_new = (1.0 - z) * n + z * h
        ofw_ref[t] = h_new[:, 0:Hp]                        # fwd hidden at time t
        obw_ref[L - 1 - t] = h_new[:, Hp:G2]               # bwd hidden at time L-1-t
        return h_new

    # L is small and static (max_words / T-1): fully unroll for LLO scheduling.
    lax.fori_loop(0, L, step, jnp.zeros((Bb, G2), jnp.float32), unroll=True)


def bigru_fused(x_lbd, params_fw, params_bw, *, batch_block=256):
    """Bidirectional GRU over a time-major sequence.

    x_lbd: (L, Bk, Din) float32.  Returns (out_fw, out_bw), each (L, Bk, H),
    time-aligned (out_fw[-1] / out_bw[0] are the final hidden states).
    """
    L, Bk, Din = x_lbd.shape
    assert L >= 1, "empty sequence: GRU output would be undefined"
    wih_f, whh_f, bih_f, bhh_f = params_fw
    wih_b, whh_b, bih_b, bhh_b = params_bw
    H = whh_f.shape[0]
    Hp = _round_up(H, _LANE)          # lane-dense (zero-padded) gate width

    # ---- hoisted input->gate projection: one big MXU-friendly bf16 matmul ----
    x2 = x_lbd.reshape(L * Bk, Din).astype(jnp.bfloat16)
    wih_cat = jnp.concatenate([wih_f, wih_b], axis=1).astype(jnp.bfloat16)    # (Din, 6H)
    bih_cat = jnp.concatenate([bih_f, bih_b]).astype(jnp.float32)             # (6H,)
    gi = jnp.dot(x2, wih_cat, preferred_element_type=jnp.float32) + bih_cat   # (L*Bk, 6H)
    gi = gi.reshape(L, Bk, 2, 3, H)                       # (time, batch, dir, gate, H)
    gi_f = gi[:, :, 0]                                    # (L, Bk, 3, H)
    gi_b = jnp.flip(gi[:, :, 1], axis=0)                  # time-reverse backward stream
    gi = jnp.stack([gi_f, gi_b], axis=3)                  # (L, Bk, 3, 2, H)
    gi = jnp.pad(gi, ((0, 0),) * 4 + ((0, Hp - H),))      # zero-pad H -> Hp
    gi = gi.reshape(L, Bk, 6 * Hp)

    # ---- block-diagonal hidden->hidden weights / biases, lane-padded ---------
    def pack_whh(w_t, d):             # w_t: (H, 3H) transposed PyTorch W_hh
        w = w_t.reshape(H, 3, H).astype(jnp.float32)
        w = jnp.pad(w, ((0, Hp - H), (0, 0), (0, Hp - H)))        # (Hp, 3, Hp)
        full = jnp.zeros((2 * Hp, 3, 2, Hp), jnp.float32)
        return full.at[d * Hp:(d + 1) * Hp, :, d, :].set(w)

    def pack_bhh(b, d):               # b: (3H,)
        bb = jnp.pad(b.reshape(3, H).astype(jnp.float32), ((0, 0), (0, Hp - H)))
        full = jnp.zeros((3, 2, Hp), jnp.float32)
        return full.at[:, d, :].set(bb)

    whh_cat = (pack_whh(whh_f, 0) + pack_whh(whh_b, 1)).reshape(2 * Hp, 6 * Hp)
    bhh_cat = (pack_bhh(bhh_f, 0) + pack_bhh(bhh_b, 1)).reshape(1, 6 * Hp)

    # ---- Pallas recurrence, gridded over the (independent) batch dimension ---
    Bb = Bk if Bk <= batch_block else batch_block
    grid = (pl.cdiv(Bk, Bb),)
    out_fw, out_bw = pl.pallas_call(
        _bigru_kernel,
        out_shape=(jax.ShapeDtypeStruct((L, Bk, Hp), jnp.float32),
                   jax.ShapeDtypeStruct((L, Bk, Hp), jnp.float32)),
        grid=grid,
        in_specs=[
            pl.BlockSpec((L, Bb, 6 * Hp), lambda i: (0, i, 0)),
            pl.BlockSpec((2 * Hp, 6 * Hp), lambda i: (0, 0)),
            pl.BlockSpec((1, 6 * Hp), lambda i: (0, 0)),
        ],
        out_specs=(
            pl.BlockSpec((L, Bb, Hp), lambda i: (0, i, 0)),
            pl.BlockSpec((L, Bb, Hp), lambda i: (0, i, 0)),
        ),
        compiler_params=pltpu.CompilerParams(
            dimension_semantics=("parallel",),
            vmem_limit_bytes=32 * 1024 * 1024,
        ),
    )(gi, whh_cat, bhh_cat)
    return out_fw[:, :, :H], out_bw[:, :, :H]


def init_gru_params(key, din, h):
    """PyTorch-style GRU init U(-1/sqrt(h), 1/sqrt(h)); weights stored transposed."""
    k = 1.0 / jnp.sqrt(jnp.float32(h))
    ks = jax.random.split(key, 4)
    w_ih_t = jax.random.uniform(ks[0], (din, 3 * h), jnp.float32, -k, k)
    w_hh_t = jax.random.uniform(ks[1], (h, 3 * h), jnp.float32, -k, k)
    b_ih = jax.random.uniform(ks[2], (3 * h,), jnp.float32, -k, k)
    b_hh = jax.random.uniform(ks[3], (3 * h,), jnp.float32, -k, k)
    return (w_ih_t, w_hh_t, b_ih, b_hh)


def init_encoder_params(key, max_words, input_size, hidden_size):
    # TODO(synk): Face_Encoder is instantiated in the PyTorch __init__ but never
    # used in forward(); no parameters are created for it here.
    k_emb, k_tf, k_tb, k_hf, k_hb = jax.random.split(key, 5)
    return {
        # Text_Encoder: Embedding(max_words, input_size) + BiGRU(input, hidden)
        "emb": jax.random.normal(k_emb, (max_words, input_size), jnp.float32),
        "text_fw": init_gru_params(k_tf, input_size, hidden_size),
        "text_bw": init_gru_params(k_tb, input_size, hidden_size),
        # History_Encoder: BiGRU(2*hidden, hidden)
        "hist_fw": init_gru_params(k_hf, 2 * hidden_size, hidden_size),
        "hist_bw": init_gru_params(k_hb, 2 * hidden_size, hidden_size),
    }


def encoder_forward(params, x, *, hidden_size):
    """x: (B, T, max_words) int32 token ids -> (B, T, 2*hidden_size) f32."""
    B, T, L = x.shape
    H = hidden_size

    # ---- Text_Encoder on every turn (the PyTorch per-turn loop + the query) --
    tok = x.reshape(B * T, L)
    # TODO(synk): embedding gather + time-major transpose stay in XLA; a
    # scalar-prefetch DMA gather only pays off at large vocab/embedding sizes.
    emb = jnp.take(params["emb"], tok, axis=0)            # (B*T, L, D)
    emb_t = jnp.transpose(emb, (1, 0, 2))                 # (L, B*T, D) time-major
    tfw, tbw = bigru_fused(emb_t, params["text_fw"], params["text_bw"])
    # Bidirectional final hidden = [fwd hidden at t=L-1, bwd hidden at time 0].
    text_enc = jnp.concatenate([tfw[-1], tbw[0]], axis=-1).reshape(B, T, 2 * H)

    text_out = text_enc[:, : T - 1, :]                    # torch.cat(text_out_list[:T-1], dim=1)
    text_out_query = text_enc[:, T - 1:, :]               # encoder of x[:, T-1, :], (B, 1, 2H)

    # ---- History_Encoder over the history sequence ----------------------------
    # TODO(synk): History_Encoder.forward takes (text_out, text_out); its source is
    # unavailable, so it is modeled as a BiGRU over the sequence (the duplicated
    # second argument / any attention over it is not reproduced).
    hist_in = jnp.transpose(text_out, (1, 0, 2))          # (T-1, B, 2H)
    hfw, hbw = bigru_fused(hist_in, params["hist_fw"], params["hist_bw"])
    hist_out = jnp.transpose(jnp.concatenate([hfw, hbw], axis=-1), (1, 0, 2))   # (B, T-1, 2H)

    # ---- out = torch.cat([out, text_out_query], dim=1) ------------------------
    return jnp.concatenate([hist_out, text_out_query], axis=1)   # (B, T, 2H)


if __name__ == "__main__":
    # Small, module-consistent shapes.
    B, T = 2, 4                 # batch, dialogue turns (history + query)
    max_words = 8               # vocab size == tokens per utterance
    input_size = 32             # embedding / GRU input size
    hidden_size = 32            # GRU hidden size -> output feature dim 2*32 = 64

    key = jax.random.PRNGKey(0)
    k_param, k_x = jax.random.split(key)
    params = init_encoder_params(k_param, max_words, input_size, hidden_size)
    x = jax.random.randint(k_x, (B, T, max_words), 0, max_words, dtype=jnp.int32)

    fwd = jax.jit(functools.partial(encoder_forward, hidden_size=hidden_size))
    out = jax.block_until_ready(fwd(params, x))

    assert out.shape == (B, T, 2 * hidden_size), out.shape
    assert out.dtype == jnp.float32
    assert bool(jnp.all(jnp.isfinite(out)))
    print("KERNEL_OK")
</pallas_src>

<mosaic_0001>
module attributes {stable_mosaic.version = 11 : i64} {
  func.func @_bigru_kernel(%arg0: i32, %arg1: memref<8x8x768xf32, #tpu.memory_space<vmem>>, %arg2: memref<256x768xf32, #tpu.memory_space<vmem>>, %arg3: memref<1x768xf32, #tpu.memory_space<vmem>>, %arg4: memref<8x8x128xf32, #tpu.memory_space<vmem>>, %arg5: memref<8x8x128xf32, #tpu.memory_space<vmem>>) attributes {dimension_semantics = [#tpu.dimension_semantics<parallel>], iteration_bounds = array<i64: 1>, scalar_prefetch = 0 : i64, scratch_operands = 0 : i64, tpu.core_type = #tpu.core_type<tc>, window_params = [{transform_indices = @transform_0, window_bounds = array<i64: 8, 8, 768>}, {pipeline_mode = #tpu.pipeline_mode<synchronous>, transform_indices = @transform_1, window_bounds = array<i64: 256, 768>}, {pipeline_mode = #tpu.pipeline_mode<synchronous>, transform_indices = @transform_2, window_bounds = array<i64: 1, 768>}, {transform_indices = @transform_3, window_bounds = array<i64: 8, 8, 128>}, {transform_indices = @transform_4, window_bounds = array<i64: 8, 8, 128>}]} {
    %c0 = arith.constant 0 : index
    %c0_0 = arith.constant 0 : index
    %0 = vector.load %arg2[%c0, %c0_0] : memref<256x768xf32, #tpu.memory_space<vmem>>, vector<256x768xf32>
    %c0_1 = arith.constant 0 : index
    %c0_2 = arith.constant 0 : index
    %1 = vector.load %arg3[%c0_1, %c0_2] : memref<1x768xf32, #tpu.memory_space<vmem>>, vector<1x768xf32>
    %2 = vector.shape_cast %1 : vector<1x768xf32> to vector<1x768xf32>
    %3 = vector.broadcast %2 : vector<1x768xf32> to vector<8x768xf32>
    %cst = arith.constant 0.000000e+00 : f32
    %4 = vector.broadcast %cst : f32 to vector<8x256xf32>
    %c0_i32 = arith.constant 0 : i32
    %5 = arith.index_cast %c0_i32 : i32 to index
    %c0_3 = arith.constant 0 : index
    %c0_4 = arith.constant 0 : index
    %6 = vector.load %arg1[%5, %c0_3, %c0_4] : memref<8x8x768xf32, #tpu.memory_space<vmem>>, vector<1x8x768xf32>
    %7 = vector.shape_cast %6 : vector<1x8x768xf32> to vector<8x768xf32>
    %cst_5 = arith.constant dense<0.000000e+00> : vector<8x768xf32>
    %8 = tpu.matmul %4, %0, %cst_5 {dimension_numbers = #tpu.dot_dimension_numbers<[1], [0], [0], [1], [0, 0, 1, 1], [], []>} : vector<8x256xf32>, vector<256x768xf32>, vector<8x768xf32> -> vector<8x768xf32>
    %9 = arith.addf %8, %3 : vector<8x768xf32>
    %10 = vector.extract_strided_slice %7 {offsets = [0, 0], sizes = [8, 256], strides = [1, 1]} : vector<8x768xf32> to vector<8x256xf32>
    %11 = vector.extract_strided_slice %9 {offsets = [0, 0], sizes = [8, 256], strides = [1, 1]} : vector<8x768xf32> to vector<8x256xf32>
    %12 = arith.addf %10, %11 : vector<8x256xf32>
    %13 = arith.negf %12 : vector<8x256xf32>
    %14 = math.exp %13 : vector<8x256xf32>
    %cst_6 = arith.constant 1.000000e+00 : f32
    %15 = vector.broadcast %cst_6 : f32 to vector<8x256xf32>
    %16 = arith.addf %15, %14 : vector<8x256xf32>
    %17 = arith.divf %15, %16 : vector<8x256xf32>
    %18 = vector.extract_strided_slice %7 {offsets = [0, 256], sizes = [8, 256], strides = [1, 1]} : vector<8x768xf32> to vector<8x256xf32>
    %19 = vector.extract_strided_slice %9 {offsets = [0, 256], sizes = [8, 256], strides = [1, 1]} : vector<8x768xf32> to vector<8x256xf32>
    %20 = arith.addf %18, %19 : vector<8x256xf32>
    %21 = arith.negf %20 : vector<8x256xf32>
    %22 = math.exp %21 : vector<8x256xf32>
    %cst_7 = arith.constant 1.000000e+00 : f32
    %23 = vector.broadcast %cst_7 : f32 to vector<8x256xf32>
    %24 = arith.addf %23, %22 : vector<8x256xf32>
    %25 = arith.divf %23, %24 : vector<8x256xf32>
    %26 = vector.extract_strided_slice %7 {offsets = [0, 512], sizes = [8, 256], strides = [1, 1]} : vector<8x768xf32> to vector<8x256xf32>
    %27 = vector.extract_strided_slice %9 {offsets = [0, 512], sizes = [8, 256], strides = [1, 1]} : vector<8x768xf32> to vector<8x256xf32>
    %28 = arith.mulf %17, %27 : vector<8x256xf32>
    %29 = arith.addf %26, %28 : vector<8x256xf32>
    %30 = math.tanh %29 : vector<8x256xf32>
    %cst_8 = arith.constant 1.000000e+00 : f32
    %31 = vector.broadcast %cst_8 : f32 to vector<8x256xf32>
    %32 = arith.subf %31, %25 : vector<8x256xf32>
    %33 = arith.mulf %32, %30 : vector<8x256xf32>
    %34 = arith.mulf %25, %4 : vector<8x256xf32>
    %35 = arith.addf %33, %34 : vector<8x256xf32>
    %36 = vector.extract_strided_slice %35 {offsets = [0, 0], sizes = [8, 128], strides = [1, 1]} : vector<8x256xf32> to vector<8x128xf32>
    %37 = arith.index_cast %c0_i32 : i32 to index
    %c0_9 = arith.constant 0 : index
    %c0_10 = arith.constant 0 : index
    %38 = vector.load %arg4[%37, %c0_9, %c0_10] : memref<8x8x128xf32, #tpu.memory_space<vmem>>, vector<1x8x128xf32>
    %39 = vector.shape_cast %38 : vector<1x8x128xf32> to vector<8x128xf32>
    %40 = vector.shape_cast %36 : vector<8x128xf32> to vector<1x8x128xf32>
    tpu.vector_store %arg4[%37, %c0_9, %c0_10], %40 {strides = array<i32>} : memref<8x8x128xf32, #tpu.memory_space<vmem>>, vector<1x8x128xf32>,
    %41 = vector.extract_strided_slice %35 {offsets = [0, 128], sizes = [8, 128], strides = [1, 1]} : vector<8x256xf32> to vector<8x128xf32>
    %c7_i32 = arith.constant 7 : i32
    %42 = arith.subi %c7_i32, %c0_i32 : i32
    %43 = arith.index_cast %42 : i32 to index
    %c0_11 = arith.constant 0 : index
    %c0_12 = arith.constant 0 : index
    %44 = vector.load %arg5[%43, %c0_11, %c0_12] : memref<8x8x128xf32, #tpu.memory_space<vmem>>, vector<1x8x128xf32>
    %45 = vector.shape_cast %44 : vector<1x8x128xf32> to vector<8x128xf32>
    %46 = vector.shape_cast %41 : vector<8x128xf32> to vector<1x8x128xf32>
    tpu.vector_store %arg5[%43, %c0_11, %c0_12], %46 {strides = array<i32>} : memref<8x8x128xf32, #tpu.memory_space<vmem>>, vector<1x8x128xf32>,
    %c1_i32 = arith.constant 1 : i32
    %47 = arith.index_cast %c1_i32 : i32 to index
    %c0_13 = arith.constant 0 : index
    %c0_14 = arith.constant 0 : index
    %48 = vector.load %arg1[%47, %c0_13, %c0_14] : memref<8x8x768xf32, #tpu.memory_space<vmem>>, vector<1x8x768xf32>
    %49 = vector.shape_cast %48 : vector<1x8x768xf32> to vector<8x768xf32>
    %cst_15 = arith.constant dense<0.000000e+00> : vector<8x768xf32>
    %50 = tpu.matmul %35, %0, %cst_15 {dimension_numbers = #tpu.dot_dimension_numbers<[1], [0], [0], [1], [0, 0, 1, 1], [], []>} : vector<8x256xf32>, vector<256x768xf32>, vector<8x768xf32> -> vector<8x768xf32>
    %51 = arith.addf %50, %3 : vector<8x768xf32>
    %52 = vector.extract_strided_slice %49 {offsets = [0, 0], sizes = [8, 256], strides = [1, 1]} : vector<8x768xf32> to vector<8x256xf32>
    %53 = vector.extract_strided_slice %51 {offsets = [0, 0], sizes = [8, 256], strides = [1, 1]} : vector<8x768xf32> to vector<8x256xf32>
    %54 = arith.addf %52, %53 : vector<8x256xf32>
    %55 = arith.negf %54 : vector<8x256xf32>
    %56 = math.exp %55 : vector<8x256xf32>
    %cst_16 = arith.constant 1.000000e+00 : f32
    %57 = vector.broadcast %cst_16 : f32 to vector<8x256xf32>
    %58 = arith.addf %57, %56 : vector<8x256xf32>
    %59 = arith.divf %57, %58 : vector<8x256xf32>
    %60 = vector.extract_strided_slice %49 {offsets = [0, 256], sizes = [8, 256], strides = [1, 1]} : vector<8x768xf32> to vector<8x256xf32>
    %61 = vector.extract_strided_slice %51 {offsets = [0, 256], sizes = [8, 256], strides = [1, 1]} : vector<8x768xf32> to vector<8x256xf32>
    %62 = arith.addf %60, %61 : vector<8x256xf32>
    %63 = arith.negf %62 : vector<8x256xf32>
    %64 = math.exp %63 : vector<8x256xf32>
    %cst_17 = arith.constant 1.000000e+00 : f32
    %65 = vector.broadcast %cst_17 : f32 to vector<8x256xf32>
    %66 = arith.addf %65, %64 : vector<8x256xf32>
    %67 = arith.divf %65, %66 : vector<8x256xf32>
    %68 = vector.extract_strided_slice %49 {offsets = [0, 512], sizes = [8, 256], strides = [1, 1]} : vector<8x768xf32> to vector<8x256xf32>
    %69 = vector.extract_strided_slice %51 {offsets = [0, 512], sizes = [8, 256], strides = [1, 1]} : vector<8x768xf32> to vector<8x256xf32>
    %70 = arith.mulf %59, %69 : vector<8x256xf32>
    %71 = arith.addf %68, %70 : vector<8x256xf32>
    %72 = math.tanh %71 : vector<8x256xf32>
    %cst_18 = arith.constant 1.000000e+00 : f32
    %73 = vector.broadcast %cst_18 : f32 to vector<8x256xf32>
    %74 = arith.subf %73, %67 : vector<8x256xf32>
    %75 = arith.mulf %74, %72 : vector<8x256xf32>
    %76 = arith.mulf %67, %35 : vector<8x256xf32>
    %77 = arith.addf %75, %76 : vector<8x256xf32>
    %78 = vector.extract_strided_slice %77 {offsets = [0, 0], sizes = [8, 128], strides = [1, 1]} : vector<8x256xf32> to vector<8x128xf32>
    %79 = arith.index_cast %c1_i32 : i32 to index
    %c0_19 = arith.constant 0 : index
    %c0_20 = arith.constant 0 : index
    %80 = vector.load %arg4[%79, %c0_19, %c0_20] : memref<8x8x128xf32, #tpu.memory_space<vmem>>, vector<1x8x128xf32>
    %81 = vector.shape_cast %80 : vector<1x8x128xf32> to vector<8x128xf32>
    %82 = vector.shape_cast %78 : vector<8x128xf32> to vector<1x8x128xf32>
    tpu.vector_store %arg4[%79, %c0_19, %c0_20], %82 {strides = array<i32>} : memref<8x8x128xf32, #tpu.memory_space<vmem>>, vector<1x8x128xf32>,
    %83 = vector.extract_strided_slice %77 {offsets = [0, 128], sizes = [8, 128], strides = [1, 1]} : vector<8x256xf32> to vector<8x128xf32>
    %c7_i32_21 = arith.constant 7 : i32
    %84 = arith.subi %c7_i32_21, %c1_i32 : i32
    %85 = arith.index_cast %84 : i32 to index
    %c0_22 = arith.constant 0 : index
    %c0_23 = arith.constant 0 : index
    %86 = vector.load %arg5[%85, %c0_22, %c0_23] : memref<8x8x128xf32, #tpu.memory_space<vmem>>, vector<1x8x128xf32>
    %87 = vector.shape_cast %86 : vector<1x8x128xf32> to vector<8x128xf32>
    %88 = vector.shape_cast %83 : vector<8x128xf32> to vector<1x8x128xf32>
    tpu.vector_store %arg5[%85, %c0_22, %c0_23], %88 {strides = array<i32>} : memref<8x8x128xf32, #tpu.memory_space<vmem>>, vector<1x8x128xf32>,
    %c2_i32 = arith.constant 2 : i32
    %89 = arith.index_cast %c2_i32 : i32 to index
    %c0_24 = arith.constant 0 : index
    %c0_25 = arith.constant 0 : index
    %90 = vector.load %arg1[%89, %c0_24, %c0_25] : memref<8x8x768xf32, #tpu.memory_space<vmem>>, vector<1x8x768xf32>
    %91 = vector.shape_cast %90 : vector<1x8x768xf32> to vector<8x768xf32>
    %cst_26 = arith.constant dense<0.000000e+00> : vector<8x768xf32>
    %92 = tpu.matmul %77, %0, %cst_26 {dimension_numbers = #tpu.dot_dimension_numbers<[1], [0], [0], [1], [0, 0, 1, 1], [], []>} : vector<8x256xf32>, vector<256x768xf32>, vector<8x768xf32> -> vector<8x768xf32>
    %93 = arith.addf %92, %3 : vector<8x768xf32>
    %94 = vector.extract_strided_slice %91 {offsets = [0, 0], sizes = [8, 256], strides = [1, 1]} : vector<8x768xf32> to vector<8x256xf32>
    %95 = vector.extract_strided_slice %93 {offsets = [0, 0], sizes = [8, 256], strides = [1, 1]} : vector<8x768xf32> to vector<8x256xf32>
    %96 = arith.addf %94, %95 : vector<8x256xf32>
    %97 = arith.negf %96 : vector<8x256xf32>
    %98 = math.exp %97 : vector<8x256xf32>
    %cst_27 = arith.constant 1.000000e+00 : f32
    %99 = vector.broadcast %cst_27 : f32 to vector<8x256xf32>
    %100 = arith.addf %99, %98 : vector<8x256xf32>
    %101 = arith.divf %99, %100 : vector<8x256xf32>
    %102 = vector.extract_strided_slice %91 {offsets = [0, 256], sizes = [8, 256], strides = [1, 1]} : vector<8x768xf32> to vector<8x256xf32>
    %103 = vector.extract_strided_slice %93 {offsets = [0, 256], sizes = [8, 256], strides = [1, 1]} : vector<8x768xf32> to vector<8x256xf32>
    %104 = arith.addf %102, %103 : vector<8x256xf32>
    %105 = arith.negf %104 : vector<8x256xf32>
    %106 = math.exp %105 : vector<8x256xf32>
    %cst_28 = arith.constant 1.000000e+00 : f32
    %107 = vector.broadcast %cst_28 : f32 to vector<8x256xf32>
    %108 = arith.addf %107, %106 : vector<8x256xf32>
    %109 = arith.divf %107, %108 : vector<8x256xf32>
    %110 = vector.extract_strided_slice %91 {offsets = [0, 512], sizes = [8, 256], strides = [1, 1]} : vector<8x768xf32> to vector<8x256xf32>
    %111 = vector.extract_strided_slice %93 {offsets = [0, 512], sizes = [8, 256], strides = [1, 1]} : vector<8x768xf32> to vector<8x256xf32>
    %112 = arith.mulf %101, %111 : vector<8x256xf32>
    %113 = arith.addf %110, %112 : vector<8x256xf32>
    %114 = math.tanh %113 : vector<8x256xf32>
    %cst_29 = arith.constant 1.000000e+00 : f32
    %115 = vector.broadcast %cst_29 : f32 to vector<8x256xf32>
    %116 = arith.subf %115, %109 : vector<8x256xf32>
    %117 = arith.mulf %116, %114 : vector<8x256xf32>
    %118 = arith.mulf %109, %77 : vector<8x256xf32>
    %119 = arith.addf %117, %118 : vector<8x256xf32>
    %120 = vector.extract_strided_slice %119 {offsets = [0, 0], sizes = [8, 128], strides = [1, 1]} : vector<8x256xf32> to vector<8x128xf32>
    %121 = arith.index_cast %c2_i32 : i32 to index
    %c0_30 = arith.constant 0 : index
    %c0_31 = arith.constant 0 : index
    %122 = vector.load %arg4[%121, %c0_30, %c0_31] : memref<8x8x128xf32, #tpu.memory_space<vmem>>, vector<1x8x128xf32>
    %123 = vector.shape_cast %122 : vector<1x8x128xf32> to vector<8x128xf32>
    %124 = vector.shape_cast %120 : vector<8x128xf32> to vector<1x8x128xf32>
    tpu.vector_store %arg4[%121, %c0_30, %c0_31], %124 {strides = array<i32>} : memref<8x8x128xf32, #tpu.memory_space<vmem>>, vector<1x8x128xf32>,
    %125 = vector.extract_strided_slice %119 {offsets = [0, 128], sizes = [8, 128], strides = [1, 1]} : vector<8x256xf32> to vector<8x128xf32>
    %c7_i32_32 = arith.constant 7 : i32
    %126 = arith.subi %c7_i32_32, %c2_i32 : i32
    %127 = arith.index_cast %126 : i32 to index
    %c0_33 = arith.constant 0 : index
    %c0_34 = arith.constant 0 : index
    %128 = vector.load %arg5[%127, %c0_33, %c0_34] : memref<8x8x128xf32, #tpu.memory_space<vmem>>, vector<1x8x128xf32>
    %129 = vector.shape_cast %128 : vector<1x8x128xf32> to vector<8x128xf32>
    %130 = vector.shape_cast %125 : vector<8x128xf32> to vector<1x8x128xf32>
    tpu.vector_store %arg5[%127, %c0_33, %c0_34], %130 {strides = array<i32>} : memref<8x8x128xf32, #tpu.memory_space<vmem>>, vector<1x8x128xf32>,
    %c3_i32 = arith.constant 3 : i32
    %131 = arith.index_cast %c3_i32 : i32 to index
    %c0_35 = arith.constant 0 : index
    %c0_36 = arith.constant 0 : index
    %132 = vector.load %arg1[%131, %c0_35, %c0_36] : memref<8x8x768xf32, #tpu.memory_space<vmem>>, vector<1x8x768xf32>
    %133 = vector.shape_cast %132 : vector<1x8x768xf32> to vector<8x768xf32>
    %cst_37 = arith.constant dense<0.000000e+00> : vector<8x768xf32>
    %134 = tpu.matmul %119, %0, %cst_37 {dimension_numbers = #tpu.dot_dimension_numbers<[1], [0], [0], [1], [0, 0, 1, 1], [], []>} : vector<8x256xf32>, vector<256x768xf32>, vector<8x768xf32> -> vector<8x768xf32>
    %135 = arith.addf %134, %3 : vector<8x768xf32>
    %136 = vector.extract_strided_slice %133 {offsets = [0, 0], sizes = [8, 256], strides = [1, 1]} : vector<8x768xf32> to vector<8x256xf32>
    %137 = vector.extract_strided_slice %135 {offsets = [0, 0], sizes = [8, 256], strides = [1, 1]} : vector<8x768xf32> to vector<8x256xf32>
    %138 = arith.addf %136, %137 : vector<8x256xf32>
    %139 = arith.negf %138 : vector<8x256xf32>
    %140 = math.exp %139 : vector<8x256xf32>
    %cst_38 = arith.constant 1.000000e+00 : f32
    %141 = vector.broadcast %cst_38 : f32 to vector<8x256xf32>
    %142 = arith.addf %141, %140 : vector<8x256xf32>
    %143 = arith.divf %141, %142 : vector<8x256xf32>
    %144 = vector.extract_strided_slice %133 {offsets = [0, 256], sizes = [8, 256], strides = [1, 1]} : vector<8x768xf32> to vector<8x256xf32>
    %145 = vector.extract_strided_slice %135 {offsets = [0, 256], sizes = [8, 256], strides = [1, 1]} : vector<8x768xf32> to vector<8x256xf32>
    %146 = arith.addf %144, %145 : vector<8x256xf32>
    %147 = arith.negf %146 : vector<8x256xf32>
    %148 = math.exp %147 : vector<8x256xf32>
    %cst_39 = arith.constant 1.000000e+00 : f32
    %149 = vector.broadcast %cst_39 : f32 to vector<8x256xf32>
    %150 = arith.addf %149, %148 : vector<8x256xf32>
    %151 = arith.divf %149, %150 : vector<8x256xf32>
    %152 = vector.extract_strided_slice %133 {offsets = [0, 512], sizes = [8, 256], strides = [1, 1]} : vector<8x768xf32> to vector<8x256xf32>
    %153 = vector.extract_strided_slice %135 {offsets = [0, 512], sizes = [8, 256], strides = [1, 1]} : vector<8x768xf32> to vector<8x256xf32>
    %154 = arith.mulf %143, %153 : vector<8x256xf32>
    %155 = arith.addf %152, %154 : vector<8x256xf32>
    %156 = math.tanh %155 : vector<8x256xf32>
    %cst_40 = arith.constant 1.000000e+00 : f32
    %157 = vector.broadcast %cst_40 : f32 to vector<8x256xf32>
    %158 = arith.subf %157, %151 : vector<8x256xf32>
    %159 = arith.mulf %158, %156 : vector<8x256xf32>
    %160 = arith.mulf %151, %119 : vector<8x256xf32>
    %161 = arith.addf %159, %160 : vector<8x256xf32>
    %162 = vector.extract_strided_slice %161 {offsets = [0, 0], sizes = [8, 128], strides = [1, 1]} : vector<8x256xf32> to vector<8x128xf32>
    %163 = arith.index_cast %c3_i32 : i32 to index
    %c0_41 = arith.constant 0 : index
    %c0_42 = arith.constant 0 : index
    %164 = vector.load %arg4[%163, %c0_41, %c0_42] : memref<8x8x128xf32, #tpu.memory_space<vmem>>, vector<1x8x128xf32>
    %165 = vector.shape_cast %164 : vector<1x8x128xf32> to vector<8x128xf32>
    %166 = vector.shape_cast %162 : vector<8x128xf32> to vector<1x8x128xf32>
    tpu.vector_store %arg4[%163, %c0_41, %c0_42], %166 {strides = array<i32>} : memref<8x8x128xf32, #tpu.memory_space<vmem>>, vector<1x8x128xf32>,
    %167 = vector.extract_strided_slice %161 {offsets = [0, 128], sizes = [8, 128], strides = [1, 1]} : vector<8x256xf32> to vector<8x128xf32>
    %c7_i32_43 = arith.constant 7 : i32
    %168 = arith.subi %c7_i32_43, %c3_i32 : i32
    %169 = arith.index_cast %168 : i32 to index
    %c0_44 = arith.constant 0 : index
    %c0_45 = arith.constant 0 : index
    %170 = vector.load %arg5[%169, %c0_44, %c0_45] : memref<8x8x128xf32, #tpu.memory_space<vmem>>, vector<1x8x128xf32>
    %171 = vector.shape_cast %170 : vector<1x8x128xf32> to vector<8x128xf32>
    %172 = vector.shape_cast %167 : vector<8x128xf32> to vector<1x8x128xf32>
    tpu.vector_store %arg5[%169, %c0_44, %c0_45], %172 {strides = array<i32>} : memref<8x8x128xf32, #tpu.memory_space<vmem>>, vector<1x8x128xf32>,
    %c4_i32 = arith.constant 4 : i32
    %173 = arith.index_cast %c4_i32 : i32 to index
    %c0_46 = arith.constant 0 : index
    %c0_47 = arith.constant 0 : index
    %174 = vector.load %arg1[%173, %c0_46, %c0_47] : memref<8x8x768xf32, #tpu.memory_space<vmem>>, vector<1x8x768xf32>
    %175 = vector.shape_cast %174 : vector<1x8x768xf32> to vector<8x768xf32>
    %cst_48 = arith.constant dense<0.000000e+00> : vector<8x768xf32>
    %176 = tpu.matmul %161, %0, %cst_48 {dimension_numbers = #tpu.dot_dimension_numbers<[1], [0], [0], [1], [0, 0, 1, 1], [], []>} : vector<8x256xf32>, vector<256x768xf32>, vector<8x768xf32> -> vector<8x768xf32>
    %177 = arith.addf %176, %3 : vector<8x768xf32>
    %178 = vector.extract_strided_slice %175 {offsets = [0, 0], sizes = [8, 256], strides = [1, 1]} : vector<8x768xf32> to vector<8x256xf32>
    %179 = vector.extract_strided_slice %177 {offsets = [0, 0], sizes = [8, 256], strides = [1, 1]} : vector<8x768xf32> to vector<8x256xf32>
    %180 = arith.addf %178, %179 : vector<8x256xf32>
    %181 = arith.negf %180 : vector<8x256xf32>
    %182 = math.exp %181 : vector<8x256xf32>
    %cst_49 = arith.constant 1.000000e+00 : f32
    %183 = vector.broadcast %cst_49 : f32 to vector<8x256xf32>
    %184 = arith.addf %183, %182 : vector<8x256xf32>
    %185 = arith.divf %183, %184 : vector<8x256xf32>
    %186 = vector.extract_strided_slice %175 {offsets = [0, 256], sizes = [8, 256], strides = [1, 1]} : vector<8x768xf32> to vector<8x256xf32>
    %187 = vector.extract_strided_slice %177 {offsets = [0, 256], sizes = [8, 256], strides = [1, 1]} : vector<8x768xf32> to vector<8x256xf32>
    %188 = arith.addf %186, %187 : vector<8x256xf32>
    %189 = arith.negf %188 : vector<8x256xf32>
    %190 = math.exp %189 : vector<8x256xf32>
    %cst_50 = arith.constant 1.000000e+00 : f32
    %191 = vector.broadcast %cst_50 : f32 to vector<8x256xf32>
    %192 = arith.addf %191, %190 : vector<8x256xf32>
    %193 = arith.divf %191, %192 : vector<8x256xf32>
    %194 = vector.extract_strided_slice %175 {offsets = [0, 512], sizes = [8, 256], strides = [1, 1]} : vector<8x768xf32> to vector<8x256xf32>
    %195 = vector.extract_strided_slice %177 {offsets = [0, 512], sizes = [8, 256], strides = [1, 1]} : vector<8x768xf32> to vector<8x256xf32>
    %196 = arith.mulf %185, %195 : vector<8x256xf32>
    %197 = arith.addf %194, %196 : vector<8x256xf32>
    %198 = math.tanh %197 : vector<8x256xf32>
    %cst_51 = arith.constant 1.000000e+00 : f32
    %199 = vector.broadcast %cst_51 : f32 to vector<8x256xf32>
    %200 = arith.subf %199, %193 : vector<8x256xf32>
    %201 = arith.mulf %200, %198 : vector<8x256xf32>
    %202 = arith.mulf %193, %161 : vector<8x256xf32>
    %203 = arith.addf %201, %202 : vector<8x256xf32>
    %204 = vector.extract_strided_slice %203 {offsets = [0, 0], sizes = [8, 128], strides = [1, 1]} : vector<8x256xf32> to vector<8x128xf32>
    %205 = arith.index_cast %c4_i32 : i32 to index
    %c0_52 = arith.constant 0 : index
    %c0_53 = arith.constant 0 : index
    %206 = vector.load %arg4[%205, %c0_52, %c0_53] : memref<8x8x128xf32, #tpu.memory_space<vmem>>, vector<1x8x128xf32>
    %207 = vector.shape_cast %206 : vector<1x8x128xf32> to vector<8x128xf32>
    %208 = vector.shape_cast %204 : vector<8x128xf32> to vector<1x8x128xf32>
    tpu.vector_store %arg4[%205, %c0_52, %c0_53], %208 {strides = array<i32>} : memref<8x8x128xf32, #tpu.memory_space<vmem>>, vector<1x8x128xf32>,
    %209 = vector.extract_strided_slice %203 {offsets = [0, 128], sizes = [8, 128], strides = [1, 1]} : vector<8x256xf32> to vector<8x128xf32>
    %c7_i32_54 = arith.constant 7 : i32
    %210 = arith.subi %c7_i32_54, %c4_i32 : i32
    %211 = arith.index_cast %210 : i32 to index
    %c0_55 = arith.constant 0 : index
    %c0_56 = arith.constant 0 : index
    %212 = vector.load %arg5[%211, %c0_55, %c0_56] : memref<8x8x128xf32, #tpu.memory_space<vmem>>, vector<1x8x128xf32>
    %213 = vector.shape_cast %212 : vector<1x8x128xf32> to vector<8x128xf32>
    %214 = vector.shape_cast %209 : vector<8x128xf32> to vector<1x8x128xf32>
    tpu.vector_store %arg5[%211, %c0_55, %c0_56], %214 {strides = array<i32>} : memref<8x8x128xf32, #tpu.memory_space<vmem>>, vector<1x8x128xf32>,
    %c5_i32 = arith.constant 5 : i32
    %215 = arith.index_cast %c5_i32 : i32 to index
    %c0_57 = arith.constant 0 : index
    %c0_58 = arith.constant 0 : index
    %216 = vector.load %arg1[%215, %c0_57, %c0_58] : memref<8x8x768xf32, #tpu.memory_space<vmem>>, vector<1x8x768xf32>
    %217 = vector.shape_cast %216 : vector<1x8x768xf32> to vector<8x768xf32>
    %cst_59 = arith.constant dense<0.000000e+00> : vector<8x768xf32>
    %218 = tpu.matmul %203, %0, %cst_59 {dimension_numbers = #tpu.dot_dimension_numbers<[1], [0], [0], [1], [0, 0, 1, 1], [], []>} : vector<8x256xf32>, vector<256x768xf32>, vector<8x768xf32> -> vector<8x768xf32>
    %219 = arith.addf %218, %3 : vector<8x768xf32>
    %220 = vector.extract_strided_slice %217 {offsets = [0, 0], sizes = [8, 256], strides = [1, 1]} : vector<8x768xf32> to vector<8x256xf32>
    %221 = vector.extract_strided_slice %219 {offsets = [0, 0], sizes = [8, 256], strides = [1, 1]} : vector<8x768xf32> to vector<8x256xf32>
    %222 = arith.addf %220, %221 : vector<8x256xf32>
    %223 = arith.negf %222 : vector<8x256xf32>
    %224 = math.exp %223 : vector<8x256xf32>
    %cst_60 = arith.constant 1.000000e+00 : f32
    %225 = vector.broadcast %cst_60 : f32 to vector<8x256xf32>
    %226 = arith.addf %225, %224 : vector<8x256xf32>
    %227 = arith.divf %225, %226 : vector<8x256xf32>
    %228 = vector.extract_strided_slice %217 {offsets = [0, 256], sizes = [8, 256], strides = [1, 1]} : vector<8x768xf32> to vector<8x256xf32>
    %229 = vector.extract_strided_slice %219 {offsets = [0, 256], sizes = [8, 256], strides = [1, 1]} : vector<8x768xf32> to vector<8x256xf32>
    %230 = arith.addf %228, %229 : vector<8x256xf32>
    %231 = arith.negf %230 : vector<8x256xf32>
    %232 = math.exp %231 : vector<8x256xf32>
    %cst_61 = arith.constant 1.000000e+00 : f32
    %233 = vector.broadcast %cst_61 : f32 to vector<8x256xf32>
    %234 = arith.addf %233, %232 : vector<8x256xf32>
    %235 = arith.divf %233, %234 : vector<8x256xf32>
    %236 = vector.extract_strided_slice %217 {offsets = [0, 512], sizes = [8, 256], strides = [1, 1]} : vector<8x768xf32> to vector<8x256xf32>
    %237 = vector.extract_strided_slice %219 {offsets = [0, 512], sizes = [8, 256], strides = [1, 1]} : vector<8x768xf32> to vector<8x256xf32>
    %238 = arith.mulf %227, %237 : vector<8x256xf32>
    %239 = arith.addf %236, %238 : vector<8x256xf32>
    %240 = math.tanh %239 : vector<8x256xf32>
    %cst_62 = arith.constant 1.000000e+00 : f32
    %241 = vector.broadcast %cst_62 : f32 to vector<8x256xf32>
    %242 = arith.subf %241, %235 : vector<8x256xf32>
    %243 = arith.mulf %242, %240 : vector<8x256xf32>
    %244 = arith.mulf %235, %203 : vector<8x256xf32>
    %245 = arith.addf %243, %244 : vector<8x256xf32>
    %246 = vector.extract_strided_slice %245 {offsets = [0, 0], sizes = [8, 128], strides = [1, 1]} : vector<8x256xf32> to vector<8x128xf32>
    %247 = arith.index_cast %c5_i32 : i32 to index
    %c0_63 = arith.constant 0 : index
    %c0_64 = arith.constant 0 : index
    %248 = vector.load %arg4[%247, %c0_63, %c0_64] : memref<8x8x128xf32, #tpu.memory_space<vmem>>, vector<1x8x128xf32>
    %249 = vector.shape_cast %248 : vector<1x8x128xf32> to vector<8x128xf32>
    %250 = vector.shape_cast %246 : vector<8x128xf32> to vector<1x8x128xf32>
    tpu.vector_store %arg4[%247, %c0_63, %c0_64], %250 {strides = array<i32>} : memref<8x8x128xf32, #tpu.memory_space<vmem>>, vector<1x8x128xf32>,
    %251 = vector.extract_strided_slice %245 {offsets = [0, 128], sizes = [8, 128], strides = [1, 1]} : vector<8x256xf32> to vector<8x128xf32>
    %c7_i32_65 = arith.constant 7 : i32
    %252 = arith.subi %c7_i32_65, %c5_i32 : i32
    %253 = arith.index_cast %252 : i32 to index
    %c0_66 = arith.constant 0 : index
    %c0_67 = arith.constant 0 : index
    %254 = vector.load %arg5[%253, %c0_66, %c0_67] : memref<8x8x128xf32, #tpu.memory_space<vmem>>, vector<1x8x128xf32>
    %255 = vector.shape_cast %254 : vector<1x8x128xf32> to vector<8x128xf32>
    %256 = vector.shape_cast %251 : vector<8x128xf32> to vector<1x8x128xf32>
    tpu.vector_store %arg5[%253, %c0_66, %c0_67], %256 {strides = array<i32>} : memref<8x8x128xf32, #tpu.memory_space<vmem>>, vector<1x8x128xf32>,
    %c6_i32 = arith.constant 6 : i32
    %257 = arith.index_cast %c6_i32 : i32 to index
    %c0_68 = arith.constant 0 : index
    %c0_69 = arith.constant 0 : index
    %258 = vector.load %arg1[%257, %c0_68, %c0_69] : memref<8x8x768xf32, #tpu.memory_space<vmem>>, vector<1x8x768xf32>
    %259 = vector.shape_cast %258 : vector<1x8x768xf32> to vector<8x768xf32>
    %cst_70 = arith.constant dense<0.000000e+00> : vector<8x768xf32>
    %260 = tpu.matmul %245, %0, %cst_70 {dimension_numbers = #tpu.dot_dimension_numbers<[1], [0], [0], [1], [0, 0, 1, 1], [], []>} : vector<8x256xf32>, vector<256x768xf32>, vector<8x768xf32> -> vector<8x768xf32>
    %261 = arith.addf %260, %3 : vector<8x768xf32>
    %262 = vector.extract_strided_slice %259 {offsets = [0, 0], sizes = [8, 256], strides = [1, 1]} : vector<8x768xf32> to vector<8x256xf32>
    %263 = vector.extract_strided_slice %261 {offsets = [0, 0], sizes = [8, 256], strides = [1, 1]} : vector<8x768xf32> to vector<8x256xf32>
    %264 = arith.addf %262, %263 : vector<8x256xf32>
    %265 = arith.negf %264 : vector<8x256xf32>
    %266 = math.exp %265 : vector<8x256xf32>
    %cst_71 = arith.constant 1.000000e+00 : f32
    %267 = vector.broadcast %cst_71 : f32 to vector<8x256xf32>
    %268 = arith.addf %267, %266 : vector<8x256xf32>
    %269 = arith.divf %267, %268 : vector<8x256xf32>
    %270 = vector.extract_strided_slice %259 {offsets = [0, 256], sizes = [8, 256], strides = [1, 1]} : vector<8x768xf32> to vector<8x256xf32>
    %271 = vector.extract_strided_slice %261 {offsets = [0, 256], sizes = [8, 256], strides = [1, 1]} : vector<8x768xf32> to vector<8x256xf32>
    %272 = arith.addf %270, %271 : vector<8x256xf32>
    %273 = arith.negf %272 : vector<8x256xf32>
    %274 = math.exp %273 : vector<8x256xf32>
    %cst_72 = arith.constant 1.000000e+00 : f32
    %275 = vector.broadcast %cst_72 : f32 to vector<8x256xf32>
    %276 = arith.addf %275, %274 : vector<8x256xf32>
    %277 = arith.divf %275, %276 : vector<8x256xf32>
    %278 = vector.extract_strided_slice %259 {offsets = [0, 512], sizes = [8, 256], strides = [1, 1]} : vector<8x768xf32> to vector<8x256xf32>
    %279 = vector.extract_strided_slice %261 {offsets = [0, 512], sizes = [8, 256], strides = [1, 1]} : vector<8x768xf32> to vector<8x256xf32>
    %280 = arith.mulf %269, %279 : vector<8x256xf32>
    %281 = arith.addf %278, %280 : vector<8x256xf32>
    %282 = math.tanh %281 : vector<8x256xf32>
    %cst_73 = arith.constant 1.000000e+00 : f32
    %283 = vector.broadcast %cst_73 : f32 to vector<8x256xf32>
    %284 = arith.subf %283, %277 : vector<8x256xf32>
    %285 = arith.mulf %284, %282 : vector<8x256xf32>
    %286 = arith.mulf %277, %245 : vector<8x256xf32>
    %287 = arith.addf %285, %286 : vector<8x256xf32>
    %288 = vector.extract_strided_slice %287 {offsets = [0, 0], sizes = [8, 128], strides = [1, 1]} : vector<8x256xf32> to vector<8x128xf32>
    %289 = arith.index_cast %c6_i32 : i32 to index
    %c0_74 = arith.constant 0 : index
    %c0_75 = arith.constant 0 : index
    %290 = vector.load %arg4[%289, %c0_74, %c0_75] : memref<8x8x128xf32, #tpu.memory_space<vmem>>, vector<1x8x128xf32>
    %291 = vector.shape_cast %290 : vector<1x8x128xf32> to vector<8x128xf32>
    %292 = vector.shape_cast %288 : vector<8x128xf32> to vector<1x8x128xf32>
    tpu.vector_store %arg4[%289, %c0_74, %c0_75], %292 {strides = array<i32>} : memref<8x8x128xf32, #tpu.memory_space<vmem>>, vector<1x8x128xf32>,
    %293 = vector.extract_strided_slice %287 {offsets = [0, 128], sizes = [8, 128], strides = [1, 1]} : vector<8x256xf32> to vector<8x128xf32>
    %c7_i32_76 = arith.constant 7 : i32
    %294 = arith.subi %c7_i32_76, %c6_i32 : i32
    %295 = arith.index_cast %294 : i32 to index
    %c0_77 = arith.constant 0 : index
    %c0_78 = arith.constant 0 : index
    %296 = vector.load %arg5[%295, %c0_77, %c0_78] : memref<8x8x128xf32, #tpu.memory_space<vmem>>, vector<1x8x128xf32>
    %297 = vector.shape_cast %296 : vector<1x8x128xf32> to vector<8x128xf32>
    %298 = vector.shape_cast %293 : vector<8x128xf32> to vector<1x8x128xf32>
    tpu.vector_store %arg5[%295, %c0_77, %c0_78], %298 {strides = array<i32>} : memref<8x8x128xf32, #tpu.memory_space<vmem>>, vector<1x8x128xf32>,
    %c7_i32_79 = arith.constant 7 : i32
    %299 = arith.index_cast %c7_i32_79 : i32 to index
    %c0_80 = arith.constant 0 : index
    %c0_81 = arith.constant 0 : index
    %300 = vector.load %arg1[%299, %c0_80, %c0_81] : memref<8x8x768xf32, #tpu.memory_space<vmem>>, vector<1x8x768xf32>
    %301 = vector.shape_cast %300 : vector<1x8x768xf32> to vector<8x768xf32>
    %cst_82 = arith.constant dense<0.000000e+00> : vector<8x768xf32>
    %302 = tpu.matmul %287, %0, %cst_82 {dimension_numbers = #tpu.dot_dimension_numbers<[1], [0], [0], [1], [0, 0, 1, 1], [], []>} : vector<8x256xf32>, vector<256x768xf32>, vector<8x768xf32> -> vector<8x768xf32>
    %303 = arith.addf %302, %3 : vector<8x768xf32>
    %304 = vector.extract_strided_slice %301 {offsets = [0, 0], sizes = [8, 256], strides = [1, 1]} : vector<8x768xf32> to vector<8x256xf32>
    %305 = vector.extract_strided_slice %303 {offsets = [0, 0], sizes = [8, 256], strides = [1, 1]} : vector<8x768xf32> to vector<8x256xf32>
    %306 = arith.addf %304, %305 : vector<8x256xf32>
    %307 = arith.negf %306 : vector<8x256xf32>
    %308 = math.exp %307 : vector<8x256xf32>
    %cst_83 = arith.constant 1.000000e+00 : f32
    %309 = vector.broadcast %cst_83 : f32 to vector<8x256xf32>
    %310 = arith.addf %309, %308 : vector<8x256xf32>
    %311 = arith.divf %309, %310 : vector<8x256xf32>
    %312 = vector.extract_strided_slice %301 {offsets = [0, 256], sizes = [8, 256], strides = [1, 1]} : vector<8x768xf32> to vector<8x256xf32>
    %313 = vector.extract_strided_slice %303 {offsets = [0, 256], sizes = [8, 256], strides = [1, 1]} : vector<8x768xf32> to vector<8x256xf32>
    %314 = arith.addf %312, %313 : vector<8x256xf32>
    %315 = arith.negf %314 : vector<8x256xf32>
    %316 = math.exp %315 : vector<8x256xf32>
    %cst_84 = arith.constant 1.000000e+00 : f32
    %317 = vector.broadcast %cst_84 : f32 to vector<8x256xf32>
    %318 = arith.addf %317, %316 : vector<8x256xf32>
    %319 = arith.divf %317, %318 : vector<8x256xf32>
    %320 = vector.extract_strided_slice %301 {offsets = [0, 512], sizes = [8, 256], strides = [1, 1]} : vector<8x768xf32> to vector<8x256xf32>
    %321 = vector.extract_strided_slice %303 {offsets = [0, 512], sizes = [8, 256], strides = [1, 1]} : vector<8x768xf32> to vector<8x256xf32>
    %322 = arith.mulf %311, %321 : vector<8x256xf32>
    %323 = arith.addf %320, %322 : vector<8x256xf32>
    %324 = math.tanh %323 : vector<8x256xf32>
    %cst_85 = arith.constant 1.000000e+00 : f32
    %325 = vector.broadcast %cst_85 : f32 to vector<8x256xf32>
    %326 = arith.subf %325, %319 : vector<8x256xf32>
    %327 = arith.mulf %326, %324 : vector<8x256xf32>
    %328 = arith.mulf %319, %287 : vector<8x256xf32>
    %329 = arith.addf %327, %328 : vector<8x256xf32>
    %330 = vector.extract_strided_slice %329 {offsets = [0, 0], sizes = [8, 128], strides = [1, 1]} : vector<8x256xf32> to vector<8x128xf32>
    %331 = arith.index_cast %c7_i32_79 : i32 to index
    %c0_86 = arith.constant 0 : index
    %c0_87 = arith.constant 0 : index
    %332 = vector.load %arg4[%331, %c0_86, %c0_87] : memref<8x8x128xf32, #tpu.memory_space<vmem>>, vector<1x8x128xf32>
    %333 = vector.shape_cast %332 : vector<1x8x128xf32> to vector<8x128xf32>
    %334 = vector.shape_cast %330 : vector<8x128xf32> to vector<1x8x128xf32>
    tpu.vector_store %arg4[%331, %c0_86, %c0_87], %334 {strides = array<i32>} : memref<8x8x128xf32, #tpu.memory_space<vmem>>, vector<1x8x128xf32>,
    %335 = vector.extract_strided_slice %329 {offsets = [0, 128], sizes = [8, 128], strides = [1, 1]} : vector<8x256xf32> to vector<8x128xf32>
    %c7_i32_88 = arith.constant 7 : i32
    %336 = arith.subi %c7_i32_88, %c7_i32_79 : i32
    %337 = arith.index_cast %336 : i32 to index
    %c0_89 = arith.constant 0 : index
    %c0_90 = arith.constant 0 : index
    %338 = vector.load %arg5[%337, %c0_89, %c0_90] : memref<8x8x128xf32, #tpu.memory_space<vmem>>, vector<1x8x128xf32>
    %339 = vector.shape_cast %338 : vector<1x8x128xf32> to vector<8x128xf32>
    %340 = vector.shape_cast %335 : vector<8x128xf32> to vector<1x8x128xf32>
    tpu.vector_store %arg5[%337, %c0_89, %c0_90], %340 {strides = array<i32>} : memref<8x8x128xf32, #tpu.memory_space<vmem>>, vector<1x8x128xf32>,
    %c8_i32 = arith.constant 8 : i32
    return
  }
  func.func @transform_0(%arg0: i32) -> (i32, i32, i32) {
    %c0_i32 = arith.constant 0 : i32
    %c0_i32_0 = arith.constant 0 : i32
    %c0_i32_1 = arith.constant 0 : i32
    return %c0_i32, %arg0, %c0_i32_0 : i32, i32, i32
  }
  func.func @transform_1(%arg0: i32) -> (i32, i32) {
    %c0_i32 = arith.constant 0 : i32
    %c0_i32_0 = arith.constant 0 : i32
    %c0_i32_1 = arith.constant 0 : i32
    return %c0_i32, %c0_i32_0 : i32, i32
  }
  func.func @transform_2(%arg0: i32) -> (i32, i32) {
    %c0_i32 = arith.constant 0 : i32
    %c0_i32_0 = arith.constant 0 : i32
    %c0_i32_1 = arith.constant 0 : i32
    return %c0_i32, %c0_i32_0 : i32, i32
  }
  func.func @transform_3(%arg0: i32) -> (i32, i32, i32) {
    %c0_i32 = arith.constant 0 : i32
    %c0_i32_0 = arith.constant 0 : i32
    %c0_i32_1 = arith.constant 0 : i32
    return %c0_i32, %arg0, %c0_i32_0 : i32, i32, i32
  }
  func.func @transform_4(%arg0: i32) -> (i32, i32, i32) {
    %c0_i32 = arith.constant 0 : i32
    %c0_i32_0 = arith.constant 0 : i32
    %c0_i32_1 = arith.constant 0 : i32
    return %c0_i32, %arg0, %c0_i32_0 : i32, i32, i32
  }
}

module attributes {stable_mosaic.version = 11 : i64} {
  func.func @_bigru_kernel(%arg0: i32, %arg1: memref<3x2x768xf32, #tpu.memory_space<vmem>>, %arg2: memref<256x768xf32, #tpu.memory_space<vmem>>, %arg3: memref<1x768xf32, #tpu.memory_space<vmem>>, %arg4: memref<3x2x128xf32, #tpu.memory_space<vmem>>, %arg5: memref<3x2x128xf32, #tpu.memory_space<vmem>>) attributes {dimension_semantics = [#tpu.dimension_semantics<parallel>], iteration_bounds = array<i64: 1>, scalar_prefetch = 0 : i64, scratch_operands = 0 : i64, tpu.core_type = #tpu.core_type<tc>, window_params = [{transform_indices = @transform_0, window_bounds = array<i64: 3, 2, 768>}, {pipeline_mode = #tpu.pipeline_mode<synchronous>, transform_indices = @transform_1, window_bounds = array<i64: 256, 768>}, {pipeline_mode = #tpu.pipeline_mode<synchronous>, transform_indices = @transform_2, window_bounds = array<i64: 1, 768>}, {transform_indices = @transform_3, window_bounds = array<i64: 3, 2, 128>}, {transform_indices = @transform_4, window_bounds = array<i64: 3, 2, 128>}]} {
    %c0 = arith.constant 0 : index
    %c0_0 = arith.constant 0 : index
    %0 = vector.load %arg2[%c0, %c0_0] : memref<256x768xf32, #tpu.memory_space<vmem>>, vector<256x768xf32>
    %c0_1 = arith.constant 0 : index
    %c0_2 = arith.constant 0 : index
    %1 = vector.load %arg3[%c0_1, %c0_2] : memref<1x768xf32, #tpu.memory_space<vmem>>, vector<1x768xf32>
    %2 = vector.shape_cast %1 : vector<1x768xf32> to vector<1x768xf32>
    %3 = vector.broadcast %2 : vector<1x768xf32> to vector<2x768xf32>
    %cst = arith.constant 0.000000e+00 : f32
    %4 = vector.broadcast %cst : f32 to vector<2x256xf32>
    %c0_i32 = arith.constant 0 : i32
    %5 = arith.index_cast %c0_i32 : i32 to index
    %c0_3 = arith.constant 0 : index
    %c0_4 = arith.constant 0 : index
    %6 = vector.load %arg1[%5, %c0_3, %c0_4] : memref<3x2x768xf32, #tpu.memory_space<vmem>>, vector<1x2x768xf32>
    %7 = vector.shape_cast %6 : vector<1x2x768xf32> to vector<2x768xf32>
    %cst_5 = arith.constant dense<0.000000e+00> : vector<2x768xf32>
    %8 = tpu.matmul %4, %0, %cst_5 {dimension_numbers = #tpu.dot_dimension_numbers<[1], [0], [0], [1], [0, 0, 1, 1], [], []>} : vector<2x256xf32>, vector<256x768xf32>, vector<2x768xf32> -> vector<2x768xf32>
    %9 = arith.addf %8, %3 : vector<2x768xf32>
    %10 = vector.extract_strided_slice %7 {offsets = [0, 0], sizes = [2, 256], strides = [1, 1]} : vector<2x768xf32> to vector<2x256xf32>
    %11 = vector.extract_strided_slice %9 {offsets = [0, 0], sizes = [2, 256], strides = [1, 1]} : vector<2x768xf32> to vector<2x256xf32>
    %12 = arith.addf %10, %11 : vector<2x256xf32>
    %13 = arith.negf %12 : vector<2x256xf32>
    %14 = math.exp %13 : vector<2x256xf32>
    %cst_6 = arith.constant 1.000000e+00 : f32
    %15 = vector.broadcast %cst_6 : f32 to vector<2x256xf32>
    %16 = arith.addf %15, %14 : vector<2x256xf32>
    %17 = arith.divf %15, %16 : vector<2x256xf32>
    %18 = vector.extract_strided_slice %7 {offsets = [0, 256], sizes = [2, 256], strides = [1, 1]} : vector<2x768xf32> to vector<2x256xf32>
    %19 = vector.extract_strided_slice %9 {offsets = [0, 256], sizes = [2, 256], strides = [1, 1]} : vector<2x768xf32> to vector<2x256xf32>
    %20 = arith.addf %18, %19 : vector<2x256xf32>
    %21 = arith.negf %20 : vector<2x256xf32>
    %22 = math.exp %21 : vector<2x256xf32>
    %cst_7 = arith.constant 1.000000e+00 : f32
    %23 = vector.broadcast %cst_7 : f32 to vector<2x256xf32>
    %24 = arith.addf %23, %22 : vector<2x256xf32>
    %25 = arith.divf %23, %24 : vector<2x256xf32>
    %26 = vector.extract_strided_slice %7 {offsets = [0, 512], sizes = [2, 256], strides = [1, 1]} : vector<2x768xf32> to vector<2x256xf32>
    %27 = vector.extract_strided_slice %9 {offsets = [0, 512], sizes = [2, 256], strides = [1, 1]} : vector<2x768xf32> to vector<2x256xf32>
    %28 = arith.mulf %17, %27 : vector<2x256xf32>
    %29 = arith.addf %26, %28 : vector<2x256xf32>
    %30 = math.tanh %29 : vector<2x256xf32>
    %cst_8 = arith.constant 1.000000e+00 : f32
    %31 = vector.broadcast %cst_8 : f32 to vector<2x256xf32>
    %32 = arith.subf %31, %25 : vector<2x256xf32>
    %33 = arith.mulf %32, %30 : vector<2x256xf32>
    %34 = arith.mulf %25, %4 : vector<2x256xf32>
    %35 = arith.addf %33, %34 : vector<2x256xf32>
    %36 = vector.extract_strided_slice %35 {offsets = [0, 0], sizes = [2, 128], strides = [1, 1]} : vector<2x256xf32> to vector<2x128xf32>
    %37 = arith.index_cast %c0_i32 : i32 to index
    %c0_9 = arith.constant 0 : index
    %c0_10 = arith.constant 0 : index
    %38 = vector.load %arg4[%37, %c0_9, %c0_10] : memref<3x2x128xf32, #tpu.memory_space<vmem>>, vector<1x2x128xf32>
    %39 = vector.shape_cast %38 : vector<1x2x128xf32> to vector<2x128xf32>
    %40 = vector.shape_cast %36 : vector<2x128xf32> to vector<1x2x128xf32>
    tpu.vector_store %arg4[%37, %c0_9, %c0_10], %40 {strides = array<i32>} : memref<3x2x128xf32, #tpu.memory_space<vmem>>, vector<1x2x128xf32>,
    %41 = vector.extract_strided_slice %35 {offsets = [0, 128], sizes = [2, 128], strides = [1, 1]} : vector<2x256xf32> to vector<2x128xf32>
    %c2_i32 = arith.constant 2 : i32
    %42 = arith.subi %c2_i32, %c0_i32 : i32
    %43 = arith.index_cast %42 : i32 to index
    %c0_11 = arith.constant 0 : index
    %c0_12 = arith.constant 0 : index
    %44 = vector.load %arg5[%43, %c0_11, %c0_12] : memref<3x2x128xf32, #tpu.memory_space<vmem>>, vector<1x2x128xf32>
    %45 = vector.shape_cast %44 : vector<1x2x128xf32> to vector<2x128xf32>
    %46 = vector.shape_cast %41 : vector<2x128xf32> to vector<1x2x128xf32>
    tpu.vector_store %arg5[%43, %c0_11, %c0_12], %46 {strides = array<i32>} : memref<3x2x128xf32, #tpu.memory_space<vmem>>, vector<1x2x128xf32>,
    %c1_i32 = arith.constant 1 : i32
    %47 = arith.index_cast %c1_i32 : i32 to index
    %c0_13 = arith.constant 0 : index
    %c0_14 = arith.constant 0 : index
    %48 = vector.load %arg1[%47, %c0_13, %c0_14] : memref<3x2x768xf32, #tpu.memory_space<vmem>>, vector<1x2x768xf32>
    %49 = vector.shape_cast %48 : vector<1x2x768xf32> to vector<2x768xf32>
    %cst_15 = arith.constant dense<0.000000e+00> : vector<2x768xf32>
    %50 = tpu.matmul %35, %0, %cst_15 {dimension_numbers = #tpu.dot_dimension_numbers<[1], [0], [0], [1], [0, 0, 1, 1], [], []>} : vector<2x256xf32>, vector<256x768xf32>, vector<2x768xf32> -> vector<2x768xf32>
    %51 = arith.addf %50, %3 : vector<2x768xf32>
    %52 = vector.extract_strided_slice %49 {offsets = [0, 0], sizes = [2, 256], strides = [1, 1]} : vector<2x768xf32> to vector<2x256xf32>
    %53 = vector.extract_strided_slice %51 {offsets = [0, 0], sizes = [2, 256], strides = [1, 1]} : vector<2x768xf32> to vector<2x256xf32>
    %54 = arith.addf %52, %53 : vector<2x256xf32>
    %55 = arith.negf %54 : vector<2x256xf32>
    %56 = math.exp %55 : vector<2x256xf32>
    %cst_16 = arith.constant 1.000000e+00 : f32
    %57 = vector.broadcast %cst_16 : f32 to vector<2x256xf32>
    %58 = arith.addf %57, %56 : vector<2x256xf32>
    %59 = arith.divf %57, %58 : vector<2x256xf32>
    %60 = vector.extract_strided_slice %49 {offsets = [0, 256], sizes = [2, 256], strides = [1, 1]} : vector<2x768xf32> to vector<2x256xf32>
    %61 = vector.extract_strided_slice %51 {offsets = [0, 256], sizes = [2, 256], strides = [1, 1]} : vector<2x768xf32> to vector<2x256xf32>
    %62 = arith.addf %60, %61 : vector<2x256xf32>
    %63 = arith.negf %62 : vector<2x256xf32>
    %64 = math.exp %63 : vector<2x256xf32>
    %cst_17 = arith.constant 1.000000e+00 : f32
    %65 = vector.broadcast %cst_17 : f32 to vector<2x256xf32>
    %66 = arith.addf %65, %64 : vector<2x256xf32>
    %67 = arith.divf %65, %66 : vector<2x256xf32>
    %68 = vector.extract_strided_slice %49 {offsets = [0, 512], sizes = [2, 256], strides = [1, 1]} : vector<2x768xf32> to vector<2x256xf32>
    %69 = vector.extract_strided_slice %51 {offsets = [0, 512], sizes = [2, 256], strides = [1, 1]} : vector<2x768xf32> to vector<2x256xf32>
    %70 = arith.mulf %59, %69 : vector<2x256xf32>
    %71 = arith.addf %68, %70 : vector<2x256xf32>
    %72 = math.tanh %71 : vector<2x256xf32>
    %cst_18 = arith.constant 1.000000e+00 : f32
    %73 = vector.broadcast %cst_18 : f32 to vector<2x256xf32>
    %74 = arith.subf %73, %67 : vector<2x256xf32>
    %75 = arith.mulf %74, %72 : vector<2x256xf32>
    %76 = arith.mulf %67, %35 : vector<2x256xf32>
    %77 = arith.addf %75, %76 : vector<2x256xf32>
    %78 = vector.extract_strided_slice %77 {offsets = [0, 0], sizes = [2, 128], strides = [1, 1]} : vector<2x256xf32> to vector<2x128xf32>
    %79 = arith.index_cast %c1_i32 : i32 to index
    %c0_19 = arith.constant 0 : index
    %c0_20 = arith.constant 0 : index
    %80 = vector.load %arg4[%79, %c0_19, %c0_20] : memref<3x2x128xf32, #tpu.memory_space<vmem>>, vector<1x2x128xf32>
    %81 = vector.shape_cast %80 : vector<1x2x128xf32> to vector<2x128xf32>
    %82 = vector.shape_cast %78 : vector<2x128xf32> to vector<1x2x128xf32>
    tpu.vector_store %arg4[%79, %c0_19, %c0_20], %82 {strides = array<i32>} : memref<3x2x128xf32, #tpu.memory_space<vmem>>, vector<1x2x128xf32>,
    %83 = vector.extract_strided_slice %77 {offsets = [0, 128], sizes = [2, 128], strides = [1, 1]} : vector<2x256xf32> to vector<2x128xf32>
    %c2_i32_21 = arith.constant 2 : i32
    %84 = arith.subi %c2_i32_21, %c1_i32 : i32
    %85 = arith.index_cast %84 : i32 to index
    %c0_22 = arith.constant 0 : index
    %c0_23 = arith.constant 0 : index
    %86 = vector.load %arg5[%85, %c0_22, %c0_23] : memref<3x2x128xf32, #tpu.memory_space<vmem>>, vector<1x2x128xf32>
    %87 = vector.shape_cast %86 : vector<1x2x128xf32> to vector<2x128xf32>
    %88 = vector.shape_cast %83 : vector<2x128xf32> to vector<1x2x128xf32>
    tpu.vector_store %arg5[%85, %c0_22, %c0_23], %88 {strides = array<i32>} : memref<3x2x128xf32, #tpu.memory_space<vmem>>, vector<1x2x128xf32>,
    %c2_i32_24 = arith.constant 2 : i32
    %89 = arith.index_cast %c2_i32_24 : i32 to index
    %c0_25 = arith.constant 0 : index
    %c0_26 = arith.constant 0 : index
    %90 = vector.load %arg1[%89, %c0_25, %c0_26] : memref<3x2x768xf32, #tpu.memory_space<vmem>>, vector<1x2x768xf32>
    %91 = vector.shape_cast %90 : vector<1x2x768xf32> to vector<2x768xf32>
    %cst_27 = arith.constant dense<0.000000e+00> : vector<2x768xf32>
    %92 = tpu.matmul %77, %0, %cst_27 {dimension_numbers = #tpu.dot_dimension_numbers<[1], [0], [0], [1], [0, 0, 1, 1], [], []>} : vector<2x256xf32>, vector<256x768xf32>, vector<2x768xf32> -> vector<2x768xf32>
    %93 = arith.addf %92, %3 : vector<2x768xf32>
    %94 = vector.extract_strided_slice %91 {offsets = [0, 0], sizes = [2, 256], strides = [1, 1]} : vector<2x768xf32> to vector<2x256xf32>
    %95 = vector.extract_strided_slice %93 {offsets = [0, 0], sizes = [2, 256], strides = [1, 1]} : vector<2x768xf32> to vector<2x256xf32>
    %96 = arith.addf %94, %95 : vector<2x256xf32>
    %97 = arith.negf %96 : vector<2x256xf32>
    %98 = math.exp %97 : vector<2x256xf32>
    %cst_28 = arith.constant 1.000000e+00 : f32
    %99 = vector.broadcast %cst_28 : f32 to vector<2x256xf32>
    %100 = arith.addf %99, %98 : vector<2x256xf32>
    %101 = arith.divf %99, %100 : vector<2x256xf32>
    %102 = vector.extract_strided_slice %91 {offsets = [0, 256], sizes = [2, 256], strides = [1, 1]} : vector<2x768xf32> to vector<2x256xf32>
    %103 = vector.extract_strided_slice %93 {offsets = [0, 256], sizes = [2, 256], strides = [1, 1]} : vector<2x768xf32> to vector<2x256xf32>
    %104 = arith.addf %102, %103 : vector<2x256xf32>
    %105 = arith.negf %104 : vector<2x256xf32>
    %106 = math.exp %105 : vector<2x256xf32>
    %cst_29 = arith.constant 1.000000e+00 : f32
    %107 = vector.broadcast %cst_29 : f32 to vector<2x256xf32>
    %108 = arith.addf %107, %106 : vector<2x256xf32>
    %109 = arith.divf %107, %108 : vector<2x256xf32>
    %110 = vector.extract_strided_slice %91 {offsets = [0, 512], sizes = [2, 256], strides = [1, 1]} : vector<2x768xf32> to vector<2x256xf32>
    %111 = vector.extract_strided_slice %93 {offsets = [0, 512], sizes = [2, 256], strides = [1, 1]} : vector<2x768xf32> to vector<2x256xf32>
    %112 = arith.mulf %101, %111 : vector<2x256xf32>
    %113 = arith.addf %110, %112 : vector<2x256xf32>
    %114 = math.tanh %113 : vector<2x256xf32>
    %cst_30 = arith.constant 1.000000e+00 : f32
    %115 = vector.broadcast %cst_30 : f32 to vector<2x256xf32>
    %116 = arith.subf %115, %109 : vector<2x256xf32>
    %117 = arith.mulf %116, %114 : vector<2x256xf32>
    %118 = arith.mulf %109, %77 : vector<2x256xf32>
    %119 = arith.addf %117, %118 : vector<2x256xf32>
    %120 = vector.extract_strided_slice %119 {offsets = [0, 0], sizes = [2, 128], strides = [1, 1]} : vector<2x256xf32> to vector<2x128xf32>
    %121 = arith.index_cast %c2_i32_24 : i32 to index
    %c0_31 = arith.constant 0 : index
    %c0_32 = arith.constant 0 : index
    %122 = vector.load %arg4[%121, %c0_31, %c0_32] : memref<3x2x128xf32, #tpu.memory_space<vmem>>, vector<1x2x128xf32>
    %123 = vector.shape_cast %122 : vector<1x2x128xf32> to vector<2x128xf32>
    %124 = vector.shape_cast %120 : vector<2x128xf32> to vector<1x2x128xf32>
    tpu.vector_store %arg4[%121, %c0_31, %c0_32], %124 {strides = array<i32>} : memref<3x2x128xf32, #tpu.memory_space<vmem>>, vector<1x2x128xf32>,
    %125 = vector.extract_strided_slice %119 {offsets = [0, 128], sizes = [2, 128], strides = [1, 1]} : vector<2x256xf32> to vector<2x128xf32>
    %c2_i32_33 = arith.constant 2 : i32
    %126 = arith.subi %c2_i32_33, %c2_i32_24 : i32
    %127 = arith.index_cast %126 : i32 to index
    %c0_34 = arith.constant 0 : index
    %c0_35 = arith.constant 0 : index
    %128 = vector.load %arg5[%127, %c0_34, %c0_35] : memref<3x2x128xf32, #tpu.memory_space<vmem>>, vector<1x2x128xf32>
    %129 = vector.shape_cast %128 : vector<1x2x128xf32> to vector<2x128xf32>
    %130 = vector.shape_cast %125 : vector<2x128xf32> to vector<1x2x128xf32>
    tpu.vector_store %arg5[%127, %c0_34, %c0_35], %130 {strides = array<i32>} : memref<3x2x128xf32, #tpu.memory_space<vmem>>, vector<1x2x128xf32>,
    %c3_i32 = arith.constant 3 : i32
    return
  }
  func.func @transform_0(%arg0: i32) -> (i32, i32, i32) {
    %c0_i32 = arith.constant 0 : i32
    %c0_i32_0 = arith.constant 0 : i32
    %c0_i32_1 = arith.constant 0 : i32
    return %c0_i32, %arg0, %c0_i32_0 : i32, i32, i32
  }
  func.func @transform_1(%arg0: i32) -> (i32, i32) {
    %c0_i32 = arith.constant 0 : i32
    %c0_i32_0 = arith.constant 0 : i32
    %c0_i32_1 = arith.constant 0 : i32
    return %c0_i32, %c0_i32_0 : i32, i32
  }
  func.func @transform_2(%arg0: i32) -> (i32, i32) {
    %c0_i32 = arith.constant 0 : i32
    %c0_i32_0 = arith.constant 0 : i32
    %c0_i32_1 = arith.constant 0 : i32
    return %c0_i32, %c0_i32_0 : i32, i32
  }
  func.func @transform_3(%arg0: i32) -> (i32, i32, i32) {
    %c0_i32 = arith.constant 0 : i32
    %c0_i32_0 = arith.constant 0 : i32
    %c0_i32_1 = arith.constant 0 : i32
    return %c0_i32, %arg0, %c0_i32_0 : i32, i32, i32
  }
  func.func @transform_4(%arg0: i32) -> (i32, i32, i32) {
    %c0_i32 = arith.constant 0 : i32
    %c0_i32_0 = arith.constant 0 : i32
    %c0_i32_1 = arith.constant 0 : i32
    return %c0_i32, %arg0, %c0_i32_0 : i32, i32, i32
  }
}

</mosaic_0001>

<llo_original>
// kernel: encoder_forward.2
$region0: #{encoder_forward.2}
  #allocation0 [shape = 'u32[]', space=smem, size = 0x4, offset = 0x4, fixed_abs, tag = 'smem constant byte address 0x4 - core index']
  #allocation1 [shape = 'u32[72,128]{1,0:T(1,128)}', space=vmem, size = 0x9000, scoped, tag = 'internal scratch']
  %s0 = inlined_call_operand.vmem [shape: f32[8,8,768], index: 0, kind: input, shape index: {}]
  %s1 = inlined_call_operand.vmem [shape: f32[256,768], index: 1, kind: input, shape index: {}]
  %s2 = inlined_call_operand.vmem [shape: f32[1,768], index: 2, kind: input, shape index: {}]
  %s3 = inlined_call_operand.vmem [shape: f32[8,8,128], index: 3, kind: output, shape index: {0}]
  %s4 = inlined_call_operand.vmem [shape: f32[8,8,128], index: 4, kind: output, shape index: {1}]
  %5 = xla_tuple %s3, %s4
  %s6 = sld [smem:[#allocation0]]
  $region30: #{encoder_forward.2} parent=0
    _
  %s8 = ssub.s32 1, %s6
  %s9 = scalar_select 0, %s8, %s6
  // Predicated region
  $region2: #{encoder_forward.2} parent=0 // pred_check
    _
  $region3: #{encoder_forward.2} parent=0 // pred_check_branch
    %11 = sbr.rel (0) target = $region5
  $region4: #{encoder_forward.2} parent=0 // pred_region
    _
  $region5: #{encoder_forward.2} parent=0 // pred_fallthru
    _
  // Predicated region
  $region6: #{encoder_forward.2} parent=0 // pred_check
    _
  $region7: #{encoder_forward.2} parent=0 // pred_check_branch
    %13 = sbr.rel (0) target = $region9
  $region8: #{encoder_forward.2} parent=0 // pred_region
    _
  $region9: #{encoder_forward.2} parent=0 // pred_fallthru
    _
  // Predicated region
  $region10: #{encoder_forward.2} parent=0 // pred_check
    _
  $region11: #{encoder_forward.2} parent=0 // pred_check_branch
    %15 = sbr.rel (0) target = $region13
  $region12: #{encoder_forward.2} parent=0 // pred_region
    _
  $region13: #{encoder_forward.2} parent=0 // pred_fallthru
    _
  %v16 = vld [vmem:[%s1] sm:$0xff]
  %v17 = vld [vmem:[%s1 + $0x8] sm:$0xff]
  %v18 = vld [vmem:[%s1 + $0x10] sm:$0xff]
  %v19 = vld [vmem:[%s1 + $0x18] sm:$0xff]
  %v20 = vld [vmem:[%s1 + $0x20] sm:$0xff]
  %v21 = vld [vmem:[%s1 + $0x28] sm:$0xff]
  %v22 = vld [vmem:[%s1 + $0x30] sm:$0xff]
  %v23 = vld [vmem:[%s1 + $0x38] sm:$0xff]
  %v24 = vld [vmem:[%s1 + $0x40] sm:$0xff]
  %v25 = vld [vmem:[%s1 + $0x48] sm:$0xff]
  %v26 = vld [vmem:[%s1 + $0x50] sm:$0xff]
  %v27 = vld [vmem:[%s1 + $0x58] sm:$0xff]
  %v28 = vld [vmem:[%s1 + $0x60] sm:$0xff]
  %v29 = vld [vmem:[%s1 + $0x68] sm:$0xff]
  %v30 = vld [vmem:[%s1 + $0x70] sm:$0xff]
  %v31 = vld [vmem:[%s1 + $0x78] sm:$0xff]
  %v32 = vld [vmem:[%s1 + $0x80] sm:$0xff]
  %v33 = vld [vmem:[%s1 + $0x88] sm:$0xff]
  %v34 = vld [vmem:[%s1 + $0x90] sm:$0xff]
  %v35 = vld [vmem:[%s1 + $0x98] sm:$0xff]
  %v36 = vld [vmem:[%s1 + $0xa0] sm:$0xff]
  %v37 = vld [vmem:[%s1 + $0xa8] sm:$0xff]
  %v38 = vld [vmem:[%s1 + $0xb0] sm:$0xff]
  %v39 = vld [vmem:[%s1 + $0xb8] sm:$0xff]
  %v40 = vld [vmem:[%s1 + $0xc0] sm:$0xff]
  %v41 = vld [vmem:[%s1 + $0xc8] sm:$0xff]
  %v42 = vld [vmem:[%s1 + $0xd0] sm:$0xff]
  %v43 = vld [vmem:[%s1 + $0xd8] sm:$0xff]
  %v44 = vld [vmem:[%s1 + $0xe0] sm:$0xff]
  %v45 = vld [vmem:[%s1 + $0xe8] sm:$0xff]
  %v46 = vld [vmem:[%s1 + $0xf0] sm:$0xff]
  %v47 = vld [vmem:[%s1 + $0xf8] sm:$0xff]
  %v48 = vld [vmem:[%s1 + $0x100] sm:$0xff]
  %v49 = vld [vmem:[%s1 + $0x108] sm:$0xff]
  %v50 = vld [vmem:[%s1 + $0x110] sm:$0xff]
  %v51 = vld [vmem:[%s1 + $0x118] sm:$0xff]
  %v52 = vld [vmem:[%s1 + $0x120] sm:$0xff]
  %v53 = vld [vmem:[%s1 + $0x128] sm:$0xff]
  %v54 = vld [vmem:[%s1 + $0x130] sm:$0xff]
  %v55 = vld [vmem:[%s1 + $0x138] sm:$0xff]
  %v56 = vld [vmem:[%s1 + $0x140] sm:$0xff]
  %v57 = vld [vmem:[%s1 + $0x148] sm:$0xff]
  %v58 = vld [vmem:[%s1 + $0x150] sm:$0xff]
  %v59 = vld [vmem:[%s1 + $0x158] sm:$0xff]
  %v60 = vld [vmem:[%s1 + $0x160] sm:$0xff]
  %v61 = vld [vmem:[%s1 + $0x168] sm:$0xff]
  %v62 = vld [vmem:[%s1 + $0x170] sm:$0xff]
  %v63 = vld [vmem:[%s1 + $0x178] sm:$0xff]
  %v64 = vld [vmem:[%s1 + $0x180] sm:$0xff]
  %v65 = vld [vmem:[%s1 + $0x188] sm:$0xff]
  %v66 = vld [vmem:[%s1 + $0x190] sm:$0xff]
  %v67 = vld [vmem:[%s1 + $0x198] sm:$0xff]
  %v68 = vld [vmem:[%s1 + $0x1a0] sm:$0xff]
  %v69 = vld [vmem:[%s1 + $0x1a8] sm:$0xff]
  %v70 = vld [vmem:[%s1 + $0x1b0] sm:$0xff]
  %v71 = vld [vmem:[%s1 + $0x1b8] sm:$0xff]
  %v72 = vld [vmem:[%s1 + $0x1c0] sm:$0xff]
  %v73 = vld [vmem:[%s1 + $0x1c8] sm:$0xff]
  %v74 = vld [vmem:[%s1 + $0x1d0] sm:$0xff]
  %v75 = vld [vmem:[%s1 + $0x1d8] sm:$0xff]
  %v76 = vld [vmem:[%s1 + $0x1e0] sm:$0xff]
  %v77 = vld [vmem:[%s1 + $0x1e8] sm:$0xff]
  %v78 = vld [vmem:[%s1 + $0x1f0] sm:$0xff]
  %v79 = vld [vmem:[%s1 + $0x1f8] sm:$0xff]
  %v80 = vld [vmem:[%s1 + $0x200] sm:$0xff]
  %v81 = vld [vmem:[%s1 + $0x208] sm:$0xff]
  %v82 = vld [vmem:[%s1 + $0x210] sm:$0xff]
  %v83 = vld [vmem:[%s1 + $0x218] sm:$0xff]
  %v84 = vld [vmem:[%s1 + $0x220] sm:$0xff]
  %v85 = vld [vmem:[%s1 + $0x228] sm:$0xff]
  %v86 = vld [vmem:[%s1 + $0x230] sm:$0xff]
  %v87 = vld [vmem:[%s1 + $0x238] sm:$0xff]
  %v88 = vld [vmem:[%s1 + $0x240] sm:$0xff]
  %v89 = vld [vmem:[%s1 + $0x248] sm:$0xff]
  %v90 = vld [vmem:[%s1 + $0x250] sm:$0xff]
  %v91 = vld [vmem:[%s1 + $0x258] sm:$0xff]
  %v92 = vld [vmem:[%s1 + $0x260] sm:$0xff]
  %v93 = vld [vmem:[%s1 + $0x268] sm:$0xff]
  %v94 = vld [vmem:[%s1 + $0x270] sm:$0xff]
  %v95 = vld [vmem:[%s1 + $0x278] sm:$0xff]
  %v96 = vld [vmem:[%s1 + $0x280] sm:$0xff]
  %v97 = vld [vmem:[%s1 + $0x288] sm:$0xff]
  %v98 = vld [vmem:[%s1 + $0x290] sm:$0xff]
  %v99 = vld [vmem:[%s1 + $0x298] sm:$0xff]
  %v100 = vld [vmem:[%s1 + $0x2a0] sm:$0xff]
  %v101 = vld [vmem:[%s1 + $0x2a8] sm:$0xff]
  %v102 = vld [vmem:[%s1 + $0x2b0] sm:$0xff]
  %v103 = vld [vmem:[%s1 + $0x2b8] sm:$0xff]
  %v104 = vld [vmem:[%s1 + $0x2c0] sm:$0xff]
  %v105 = vld [vmem:[%s1 + $0x2c8] sm:$0xff]
  %v106 = vld [vmem:[%s1 + $0x2d0] sm:$0xff]
  %v107 = vld [vmem:[%s1 + $0x2d8] sm:$0xff]
  %v108 = vld [vmem:[%s1 + $0x2e0] sm:$0xff]
  %v109 = vld [vmem:[%s1 + $0x2e8] sm:$0xff]
  %v110 = vld [vmem:[%s1 + $0x2f0] sm:$0xff]
  %v111 = vld [vmem:[%s1 + $0x2f8] sm:$0xff]
  %v112 = vld [vmem:[%s1 + $0x300] sm:$0xff]
  %v113 = vld [vmem:[%s1 + $0x308] sm:$0xff]
  %v114 = vld [vmem:[%s1 + $0x310] sm:$0xff]
  %v115 = vld [vmem:[%s1 + $0x318] sm:$0xff]
  %v116 = vld [vmem:[%s1 + $0x320] sm:$0xff]
  %v117 = vld [vmem:[%s1 + $0x328] sm:$0xff]
  %v118 = vld [vmem:[%s1 + $0x330] sm:$0xff]
  %v119 = vld [vmem:[%s1 + $0x338] sm:$0xff]
  %v120 = vld [vmem:[%s1 + $0x340] sm:$0xff]
  %v121 = vld [vmem:[%s1 + $0x348] sm:$0xff]
  %v122 = vld [vmem:[%s1 + $0x350] sm:$0xff]
  %v123 = vld [vmem:[%s1 + $0x358] sm:$0xff]
  %v124 = vld [vmem:[%s1 + $0x360] sm:$0xff]
  %v125 = vld [vmem:[%s1 + $0x368] sm:$0xff]
  %v126 = vld [vmem:[%s1 + $0x370] sm:$0xff]
  %v127 = vld [vmem:[%s1 + $0x378] sm:$0xff]
  %v128 = vld [vmem:[%s1 + $0x380] sm:$0xff]
  %v129 = vld [vmem:[%s1 + $0x388] sm:$0xff]
  %v130 = vld [vmem:[%s1 + $0x390] sm:$0xff]
  %v131 = vld [vmem:[%s1 + $0x398] sm:$0xff]
  %v132 = vld [vmem:[%s1 + $0x3a0] sm:$0xff]
  %v133 = vld [vmem:[%s1 + $0x3a8] sm:$0xff]
  %v134 = vld [vmem:[%s1 + $0x3b0] sm:$0xff]
  %v135 = vld [vmem:[%s1 + $0x3b8] sm:$0xff]
  %v136 = vld [vmem:[%s1 + $0x3c0] sm:$0xff]
  %v137 = vld [vmem:[%s1 + $0x3c8] sm:$0xff]
  %v138 = vld [vmem:[%s1 + $0x3d0] sm:$0xff]
  %v139 = vld [vmem:[%s1 + $0x3d8] sm:$0xff]
  %v140 = vld [vmem:[%s1 + $0x3e0] sm:$0xff]
  %v141 = vld [vmem:[%s1 + $0x3e8] sm:$0xff]
  %v142 = vld [vmem:[%s1 + $0x3f0] sm:$0xff]
  %v143 = vld [vmem:[%s1 + $0x3f8] sm:$0xff]
  %v144 = vld [vmem:[%s1 + $0x400] sm:$0xff]
  %v145 = vld [vmem:[%s1 + $0x408] sm:$0xff]
  %v146 = vld [vmem:[%s1 + $0x410] sm:$0xff]
  %v147 = vld [vmem:[%s1 + $0x418] sm:$0xff]
  %v148 = vld [vmem:[%s1 + $0x420] sm:$0xff]
  %v149 = vld [vmem:[%s1 + $0x428] sm:$0xff]
  %v150 = vld [vmem:[%s1 + $0x430] sm:$0xff]
  %v151 = vld [vmem:[%s1 + $0x438] sm:$0xff]
  %v152 = vld [vmem:[%s1 + $0x440] sm:$0xff]
  %v153 = vld [vmem:[%s1 + $0x448] sm:$0xff]
  %v154 = vld [vmem:[%s1 + $0x450] sm:$0xff]
  %v155 = vld [vmem:[%s1 + $0x458] sm:$0xff]
  %v156 = vld [vmem:[%s1 + $0x460] sm:$0xff]
  %v157 = vld [vmem:[%s1 + $0x468] sm:$0xff]
  %v158 = vld [vmem:[%s1 + $0x470] sm:$0xff]
  %v159 = vld [vmem:[%s1 + $0x478] sm:$0xff]
  %v160 = vld [vmem:[%s1 + $0x480] sm:$0xff]
  %v161 = vld [vmem:[%s1 + $0x488] sm:$0xff]
  %v162 = vld [vmem:[%s1 + $0x490] sm:$0xff]
  %v163 = vld [vmem:[%s1 + $0x498] sm:$0xff]
  %v164 = vld [vmem:[%s1 + $0x4a0] sm:$0xff]
  %v165 = vld [vmem:[%s1 + $0x4a8] sm:$0xff]
  %v166 = vld [vmem:[%s1 + $0x4b0] sm:$0xff]
  %v167 = vld [vmem:[%s1 + $0x4b8] sm:$0xff]
  %v168 = vld [vmem:[%s1 + $0x4c0] sm:$0xff]
  %v169 = vld [vmem:[%s1 + $0x4c8] sm:$0xff]
  %v170 = vld [vmem:[%s1 + $0x4d0] sm:$0xff]
  %v171 = vld [vmem:[%s1 + $0x4d8] sm:$0xff]
  %v172 = vld [vmem:[%s1 + $0x4e0] sm:$0xff]
  %v173 = vld [vmem:[%s1 + $0x4e8] sm:$0xff]
  %v174 = vld [vmem:[%s1 + $0x4f0] sm:$0xff]
  %v175 = vld [vmem:[%s1 + $0x4f8] sm:$0xff]
  %v176 = vld [vmem:[%s1 + $0x500] sm:$0xff]
  %v177 = vld [vmem:[%s1 + $0x508] sm:$0xff]
  %v178 = vld [vmem:[%s1 + $0x510] sm:$0xff]
  %v179 = vld [vmem:[%s1 + $0x518] sm:$0xff]
  %v180 = vld [vmem:[%s1 + $0x520] sm:$0xff]
  %v181 = vld [vmem:[%s1 + $0x528] sm:$0xff]
  %v182 = vld [vmem:[%s1 + $0x530] sm:$0xff]
  %v183 = vld [vmem:[%s1 + $0x538] sm:$0xff]
  %v184 = vld [vmem:[%s1 + $0x540] sm:$0xff]
  %v185 = vld [vmem:[%s1 + $0x548] sm:$0xff]
  %v186 = vld [vmem:[%s1 + $0x550] sm:$0xff]
  %v187 = vld [vmem:[%s1 + $0x558] sm:$0xff]
  %v188 = vld [vmem:[%s1 + $0x560] sm:$0xff]
  %v189 = vld [vmem:[%s1 + $0x568] sm:$0xff]
  %v190 = vld [vmem:[%s1 + $0x570] sm:$0xff]
  %v191 = vld [vmem:[%s1 + $0x578] sm:$0xff]
  %v192 = vld [vmem:[%s1 + $0x580] sm:$0xff]
  %v193 = vld [vmem:[%s1 + $0x588] sm:$0xff]
  %v194 = vld [vmem:[%s1 + $0x590] sm:$0xff]
  %v195 = vld [vmem:[%s1 + $0x598] sm:$0xff]
  %v196 = vld [vmem:[%s1 + $0x5a0] sm:$0xff]
  %v197 = vld [vmem:[%s1 + $0x5a8] sm:$0xff]
  %v198 = vld [vmem:[%s1 + $0x5b0] sm:$0xff]
  %v199 = vld [vmem:[%s1 + $0x5b8] sm:$0xff]
  %v200 = vld [vmem:[%s1 + $0x5c0] sm:$0xff]
  %v201 = vld [vmem:[%s1 + $0x5c8] sm:$0xff]
  %v202 = vld [vmem:[%s1 + $0x5d0] sm:$0xff]
  %v203 = vld [vmem:[%s1 + $0x5d8] sm:$0xff]
  %v204 = vld [vmem:[%s1 + $0x5e0] sm:$0xff]
  %v205 = vld [vmem:[%s1 + $0x5e8] sm:$0xff]
  %v206 = vld [vmem:[%s1 + $0x5f0] sm:$0xff]
  %v207 = vld [vmem:[%s1 + $0x5f8] sm:$0xff]
  %v208 = vld [vmem:[%s2] sm:$0x3f]
  %v210 = vperm.slane %v208, 0
  %v211 = vperm.slane %v208, 1
  %v212 = vperm.slane %v208, 2
  %v213 = vperm.slane %v208, 3
  %v214 = vperm.slane %v208, 4
  %v215 = vperm.slane %v208, 5
  %v222 = vld [vmem:[%s0] sm:$0xff]
  %v223 = vld [vmem:[%s0 + $0x8] sm:$0xff]
  %v224 = vld [vmem:[%s0 + $0x10] sm:$0xff]
  %v225 = vld [vmem:[%s0 + $0x18] sm:$0xff]
  %v226 = vld [vmem:[%s0 + $0x20] sm:$0xff]
  %v227 = vld [vmem:[%s0 + $0x28] sm:$0xff]
  %228 = vmatpush.msra.mxu0 %v106
  %229 = vmatpush.msra.mxu0 %v100
  %230 = vmatpush.msra.mxu0 %v94
  %231 = vmatpush.msra.mxu0 %v88
  %232 = vmatpush.msra.mxu0 %v82
  %233 = vmatpush.msra.mxu0 %v76
  %234 = vmatpush.msra.mxu0 %v70
  %235 = vmatpush.msra.mxu0 %v64
  %236 = vmatpush.msra.mxu0 %v58
  %237 = vmatpush.msra.mxu0 %v52
  %238 = vmatpush.msra.mxu0 %v46
  %239 = vmatpush.msra.mxu0 %v40
  %240 = vmatpush.msra.mxu0 %v34
  %241 = vmatpush.msra.mxu0 %v28
  %242 = vmatpush.msra.mxu0 %v22
  %243 = vmatpush.msra.mxu0 %v16
  %244 = vmatmul.f32.gmra.mxu0 0.0
  %v245 = vpop.f32.mrf.mxu0
  %v246 = vadd.f32 %v210, %v245
  %247 = vdwg.mxu0
  %248 = vmatpush.msra.mxu0 %v202
  %249 = vmatpush.msra.mxu0 %v196
  %250 = vmatpush.msra.mxu0 %v190
  %251 = vmatpush.msra.mxu0 %v184
  %252 = vmatpush.msra.mxu0 %v178
  %253 = vmatpush.msra.mxu0 %v172
  %254 = vmatpush.msra.mxu0 %v166
  %255 = vmatpush.msra.mxu0 %v160
  %256 = vmatpush.msra.mxu0 %v154
  %257 = vmatpush.msra.mxu0 %v148
  %258 = vmatpush.msra.mxu0 %v142
  %259 = vmatpush.msra.mxu0 %v136
  %260 = vmatpush.msra.mxu0 %v130
  %261 = vmatpush.msra.mxu0 %v124
  %262 = vmatpush.msra.mxu0 %v118
  %263 = vmatpush.msra.mxu0 %v112
  %264 = vmatmul.f32.gmra.mxu0 0.0
  %v265 = vpop.f32.mrf.mxu0
  %v266 = vadd.f32 %v246, %v265
  %267 = vdwg.mxu0
  %268 = vmatpush.msra.mxu0 %v107
  %269 = vmatpush.msra.mxu0 %v101
  %270 = vmatpush.msra.mxu0 %v95
  %271 = vmatpush.msra.mxu0 %v89
  %272 = vmatpush.msra.mxu0 %v83
  %273 = vmatpush.msra.mxu0 %v77
  %274 = vmatpush.msra.mxu0 %v71
  %275 = vmatpush.msra.mxu0 %v65
  %276 = vmatpush.msra.mxu0 %v59
  %277 = vmatpush.msra.mxu0 %v53
  %278 = vmatpush.msra.mxu0 %v47
  %279 = vmatpush.msra.mxu0 %v41
  %280 = vmatpush.msra.mxu0 %v35
  %281 = vmatpush.msra.mxu0 %v29
  %282 = vmatpush.msra.mxu0 %v23
  %283 = vmatpush.msra.mxu0 %v17
  %284 = vmatmul.f32.gmra.mxu0 0.0
  %v285 = vpop.f32.mrf.mxu0
  %v286 = vadd.f32 %v211, %v285
  %287 = vdwg.mxu0
  %288 = vmatpush.msra.mxu0 %v203
  %289 = vmatpush.msra.mxu0 %v197
  %290 = vmatpush.msra.mxu0 %v191
  %291 = vmatpush.msra.mxu0 %v185
  %292 = vmatpush.msra.mxu0 %v179
  %293 = vmatpush.msra.mxu0 %v173
  %294 = vmatpush.msra.mxu0 %v167
  %295 = vmatpush.msra.mxu0 %v161
  %296 = vmatpush.msra.mxu0 %v155
  %297 = vmatpush.msra.mxu0 %v149
  %298 = vmatpush.msra.mxu0 %v143
  %299 = vmatpush.msra.mxu0 %v137
  %300 = vmatpush.msra.mxu0 %v131
  %301 = vmatpush.msra.mxu0 %v125
  %302 = vmatpush.msra.mxu0 %v119
  %303 = vmatpush.msra.mxu0 %v113
  %304 = vmatmul.f32.gmra.mxu0 0.0
  %v305 = vpop.f32.mrf.mxu0
  %v306 = vadd.f32 %v286, %v305
  %307 = vdwg.mxu0
  %308 = vmatpush.msra.mxu0 %v108
  %309 = vmatpush.msra.mxu0 %v102
  %310 = vmatpush.msra.mxu0 %v96
  %311 = vmatpush.msra.mxu0 %v90
  %312 = vmatpush.msra.mxu0 %v84
  %313 = vmatpush.msra.mxu0 %v78
  %314 = vmatpush.msra.mxu0 %v72
  %315 = vmatpush.msra.mxu0 %v66
  %316 = vmatpush.msra.mxu0 %v60
  %317 = vmatpush.msra.mxu0 %v54
  %318 = vmatpush.msra.mxu0 %v48
  %319 = vmatpush.msra.mxu0 %v42
  %320 = vmatpush.msra.mxu0 %v36
  %321 = vmatpush.msra.mxu0 %v30
  %322 = vmatpush.msra.mxu0 %v24
  %323 = vmatpush.msra.mxu0 %v18
  %324 = vmatmul.f32.gmra.mxu0 0.0
  %v325 = vpop.f32.mrf.mxu0
  %v326 = vadd.f32 %v212, %v325
  %327 = vdwg.mxu0
  %328 = vmatpush.msra.mxu0 %v204
  %329 = vmatpush.msra.mxu0 %v198
  %330 = vmatpush.msra.mxu0 %v192
  %331 = vmatpush.msra.mxu0 %v186
  %332 = vmatpush.msra.mxu0 %v180
  %333 = vmatpush.msra.mxu0 %v174
  %334 = vmatpush.msra.mxu0 %v168
  %335 = vmatpush.msra.mxu0 %v162
  %336 = vmatpush.msra.mxu0 %v156
  %337 = vmatpush.msra.mxu0 %v150
  %338 = vmatpush.msra.mxu0 %v144
  %339 = vmatpush.msra.mxu0 %v138
  %340 = vmatpush.msra.mxu0 %v132
  %341 = vmatpush.msra.mxu0 %v126
  %342 = vmatpush.msra.mxu0 %v120
  %343 = vmatpush.msra.mxu0 %v114
  %344 = vmatmul.f32.gmra.mxu0 0.0
  %v345 = vpop.f32.mrf.mxu0
  %v346 = vadd.f32 %v326, %v345
  %347 = vdwg.mxu0
  %348 = vmatpush.msra.mxu0 %v109
  %349 = vmatpush.msra.mxu0 %v103
  %350 = vmatpush.msra.mxu0 %v97
  %351 = vmatpush.msra.mxu0 %v91
  %352 = vmatpush.msra.mxu0 %v85
  %353 = vmatpush.msra.mxu0 %v79
  %354 = vmatpush.msra.mxu0 %v73
  %355 = vmatpush.msra.mxu0 %v67
  %356 = vmatpush.msra.mxu0 %v61
  %357 = vmatpush.msra.mxu0 %v55
  %358 = vmatpush.msra.mxu0 %v49
  %359 = vmatpush.msra.mxu0 %v43
  %360 = vmatpush.msra.mxu0 %v37
  %361 = vmatpush.msra.mxu0 %v31
  %362 = vmatpush.msra.mxu0 %v25
  %363 = vmatpush.msra.mxu0 %v19
  %364 = vmatmul.f32.gmra.mxu0 0.0
  %v365 = vpop.f32.mrf.mxu0
  %v366 = vadd.f32 %v213, %v365
  %367 = vdwg.mxu0
  %368 = vmatpush.msra.mxu0 %v205
  %369 = vmatpush.msra.mxu0 %v199
  %370 = vmatpush.msra.mxu0 %v193
  %371 = vmatpush.msra.mxu0 %v187
  %372 = vmatpush.msra.mxu0 %v181
  %373 = vmatpush.msra.mxu0 %v175
  %374 = vmatpush.msra.mxu0 %v169
  %375 = vmatpush.msra.mxu0 %v163
  %376 = vmatpush.msra.mxu0 %v157
  %377 = vmatpush.msra.mxu0 %v151
  %378 = vmatpush.msra.mxu0 %v145
  %379 = vmatpush.msra.mxu0 %v139
  %380 = vmatpush.msra.mxu0 %v133
  %381 = vmatpush.msra.mxu0 %v127
  %382 = vmatpush.msra.mxu0 %v121
  %383 = vmatpush.msra.mxu0 %v115
  %384 = vmatmul.f32.gmra.mxu0 0.0
  %v385 = vpop.f32.mrf.mxu0
  %v386 = vadd.f32 %v366, %v385
  %387 = vdwg.mxu0
  %388 = vmatpush.msra.mxu0 %v110
  %389 = vmatpush.msra.mxu0 %v104
  %390 = vmatpush.msra.mxu0 %v98
  %391 = vmatpush.msra.mxu0 %v92
  %392 = vmatpush.msra.mxu0 %v86
  %393 = vmatpush.msra.mxu0 %v80
  %394 = vmatpush.msra.mxu0 %v74
  %395 = vmatpush.msra.mxu0 %v68
  %396 = vmatpush.msra.mxu0 %v62
  %397 = vmatpush.msra.mxu0 %v56
  %398 = vmatpush.msra.mxu0 %v50
  %399 = vmatpush.msra.mxu0 %v44
  %400 = vmatpush.msra.mxu0 %v38
  %401 = vmatpush.msra.mxu0 %v32
  %402 = vmatpush.msra.mxu0 %v26
  %403 = vmatpush.msra.mxu0 %v20
  %404 = vmatmul.f32.gmra.mxu0 0.0
  %v405 = vpop.f32.mrf.mxu0
  %v406 = vadd.f32 %v214, %v405
  %407 = vdwg.mxu0
  %408 = vmatpush.msra.mxu0 %v206
  %409 = vmatpush.msra.mxu0 %v200
  %410 = vmatpush.msra.mxu0 %v194
  %411 = vmatpush.msra.mxu0 %v188
  %412 = vmatpush.msra.mxu0 %v182
  %413 = vmatpush.msra.mxu0 %v176
  %414 = vmatpush.msra.mxu0 %v170
  %415 = vmatpush.msra.mxu0 %v164
  %416 = vmatpush.msra.mxu0 %v158
  %417 = vmatpush.msra.mxu0 %v152
  %418 = vmatpush.msra.mxu0 %v146
  %419 = vmatpush.msra.mxu0 %v140
  %420 = vmatpush.msra.mxu0 %v134
  %421 = vmatpush.msra.mxu0 %v128
  %422 = vmatpush.msra.mxu0 %v122
  %423 = vmatpush.msra.mxu0 %v116
  %424 = vmatmul.f32.gmra.mxu0 0.0
  %v425 = vpop.f32.mrf.mxu0
  %v426 = vadd.f32 %v406, %v425
  %427 = vdwg.mxu0
  %428 = vmatpush.msra.mxu0 %v111
  %429 = vmatpush.msra.mxu0 %v105
  %430 = vmatpush.msra.mxu0 %v99
  %431 = vmatpush.msra.mxu0 %v93
  %432 = vmatpush.msra.mxu0 %v87
  %433 = vmatpush.msra.mxu0 %v81
  %434 = vmatpush.msra.mxu0 %v75
  %435 = vmatpush.msra.mxu0 %v69
  %436 = vmatpush.msra.mxu0 %v63
  %437 = vmatpush.msra.mxu0 %v57
  %438 = vmatpush.msra.mxu0 %v51
  %439 = vmatpush.msra.mxu0 %v45
  %440 = vmatpush.msra.mxu0 %v39
  %441 = vmatpush.msra.mxu0 %v33
  %442 = vmatpush.msra.mxu0 %v27
  %443 = vmatpush.msra.mxu0 %v21
  %444 = vmatmul.f32.gmra.mxu0 0.0
  %v445 = vpop.f32.mrf.mxu0
  %v446 = vadd.f32 %v215, %v445
  %447 = vdwg.mxu0
  %448 = vmatpush.msra.mxu0 %v207
  %449 = vmatpush.msra.mxu0 %v201
  %450 = vmatpush.msra.mxu0 %v195
  %451 = vmatpush.msra.mxu0 %v189
  %452 = vmatpush.msra.mxu0 %v183
  %453 = vmatpush.msra.mxu0 %v177
  %454 = vmatpush.msra.mxu0 %v171
  %455 = vmatpush.msra.mxu0 %v165
  %456 = vmatpush.msra.mxu0 %v159
  %457 = vmatpush.msra.mxu0 %v153
  %458 = vmatpush.msra.mxu0 %v147
  %459 = vmatpush.msra.mxu0 %v141
  %460 = vmatpush.msra.mxu0 %v135
  %461 = vmatpush.msra.mxu0 %v129
  %462 = vmatpush.msra.mxu0 %v123
  %463 = vmatpush.msra.mxu0 %v117
  %464 = vmatmul.f32.gmra.mxu0 0.0
  %v465 = vpop.f32.mrf.mxu0
  %v466 = vadd.f32 %v446, %v465
  %467 = vdwg.mxu0
  %v468 = vadd.f32 %v222, %v266
  %v469 = vadd.f32 %v223, %v306
  %v470 = vxor.u32 %v468, 2147483648
  %v471 = vxor.u32 %v469, 2147483648
  %v472 = vmul.f32 %v470, 1.442695
  %v473 = vpow.pop %v472
  %v474 = vmul.f32 %v471, 1.442695
  %v475 = vpow.pop %v474
  %v476 = vadd.f32 %v473, 1.0
  %v477 = vadd.f32 %v475, 1.0
  %v478 = vrcp.pop %v476
  %v479 = vmul.f32 %v476, %v478
  %v480 = vsub.f32 1.0, %v479
  %v481 = vmul.f32 %v478, %v480
  %v482 = vadd.f32 %v478, %v481
  %vm483 = vweird.f32 %v476
  %vm484 = vweird.f32 %v478
  %vm485 = vmor %vm483, %vm484
  %v486 = vsel %vm485, %v478, %v482
  %v487 = vand.u32 2147483647, %v476
  %vm488 = vcmp.eq.f32.partialorder %v487, 8.507059e+37
  %v489 = vand.u32 %v476, 2147483648
  %v490 = vor.u32 1.1754944e-38, %v489
  %v491 = vsel %vm488, %v490, %v486
  %v492 = vmul.f32 1.0, %v491
  %v493 = vrcp.pop %v477
  %v494 = vmul.f32 %v477, %v493
  %v495 = vsub.f32 1.0, %v494
  %v496 = vmul.f32 %v493, %v495
  %v497 = vadd.f32 %v493, %v496
  %vm498 = vweird.f32 %v477
  %vm499 = vweird.f32 %v493
  %vm500 = vmor %vm498, %vm499
  %v501 = vsel %vm500, %v493, %v497
  %v502 = vand.u32 2147483647, %v477
  %vm503 = vcmp.eq.f32.partialorder %v502, 8.507059e+37
  %v504 = vand.u32 %v477, 2147483648
  %v505 = vor.u32 1.1754944e-38, %v504
  %v506 = vsel %vm503, %v505, %v501
  %v507 = vmul.f32 1.0, %v506
  %v508 = vadd.f32 %v224, %v346
  %v509 = vadd.f32 %v225, %v386
  %v510 = vxor.u32 %v508, 2147483648
  %v511 = vxor.u32 %v509, 2147483648
  %v512 = vmul.f32 %v510, 1.442695
  %v513 = vpow.pop %v512
  %v514 = vmul.f32 %v511, 1.442695
  %v515 = vpow.pop %v514
  %v516 = vadd.f32 %v513, 1.0
  %v517 = vadd.f32 %v515, 1.0
  %v518 = vrcp.pop %v516
  %v519 = vmul.f32 %v516, %v518
  %v520 = vsub.f32 1.0, %v519
  %v521 = vmul.f32 %v518, %v520
  %v522 = vadd.f32 %v518, %v521
  %vm523 = vweird.f32 %v516
  %vm524 = vweird.f32 %v518
  %vm525 = vmor %vm523, %vm524
  %v526 = vsel %vm525, %v518, %v522
  %v527 = vand.u32 2147483647, %v516
  %vm528 = vcmp.eq.f32.partialorder %v527, 8.507059e+37
  %v529 = vand.u32 %v516, 2147483648
  %v530 = vor.u32 1.1754944e-38, %v529
  %v531 = vsel %vm528, %v530, %v526
  %v532 = vmul.f32 1.0, %v531
  %v533 = vrcp.pop %v517
  %v534 = vmul.f32 %v517, %v533
  %v535 = vsub.f32 1.0, %v534
  %v536 = vmul.f32 %v533, %v535
  %v537 = vadd.f32 %v533, %v536
  %vm538 = vweird.f32 %v517
  %vm539 = vweird.f32 %v533
  %vm540 = vmor %vm538, %vm539
  %v541 = vsel %vm540, %v533, %v537
  %v542 = vand.u32 2147483647, %v517
  %vm543 = vcmp.eq.f32.partialorder %v542, 8.507059e+37
  %v544 = vand.u32 %v517, 2147483648
  %v545 = vor.u32 1.1754944e-38, %v544
  %v546 = vsel %vm543, %v545, %v541
  %v547 = vmul.f32 1.0, %v546
  %v548 = vmul.f32 %v492, %v426
  %v549 = vmul.f32 %v507, %v466
  %v550 = vadd.f32 %v226, %v548
  %v551 = vadd.f32 %v227, %v549
  %v552 = vtanh.pop %v550
  %v553 = vtanh.pop %v551
  %v554 = vsub.f32 1.0, %v532
  %v555 = vsub.f32 1.0, %v547
  %v556 = vmul.f32 %v554, %v552
  %v557 = vmul.f32 %v555, %v553
  %v558 = vmul.f32 %v532, 0.0
  %v559 = vmul.f32 %v547, 0.0
  %v560 = vadd.f32 %v556, %v558
  %v561 = vadd.f32 %v557, %v559
  %562 = vst [vmem:[%s3] sm:$0xff] %v560
  %s563 = scalar_lea.vmem %s4, 56
  %564 = vst [vmem:[%s563] sm:$0xff] %v561
  %s565 = scalar_lea.vmem %s0, 48
  %v566 = vld [vmem:[%s565] sm:$0xff]
  %v567 = vld [vmem:[%s565 + $0x8] sm:$0xff]
  %v568 = vld [vmem:[%s565 + $0x10] sm:$0xff]
  %v569 = vld [vmem:[%s565 + $0x18] sm:$0xff]
  %v570 = vld [vmem:[%s565 + $0x20] sm:$0xff]
  %v571 = vld [vmem:[%s565 + $0x28] sm:$0xff]
  %572 = vmatpush.msra.mxu0 %v106
  %573 = vmatpush.msra.mxu0 %v100
  %574 = vmatpush.msra.mxu0 %v94
  %575 = vmatpush.msra.mxu0 %v88
  %576 = vmatpush.msra.mxu0 %v82
  %577 = vmatpush.msra.mxu0 %v76
  %578 = vmatpush.msra.mxu0 %v70
  %579 = vmatpush.msra.mxu0 %v64
  %580 = vmatpush.msra.mxu0 %v58
  %581 = vmatpush.msra.mxu0 %v52
  %582 = vmatpush.msra.mxu0 %v46
  %583 = vmatpush.msra.mxu0 %v40
  %584 = vmatpush.msra.mxu0 %v34
  %585 = vmatpush.msra.mxu0 %v28
  %586 = vmatpush.msra.mxu0 %v22
  %587 = vmatpush.msra.mxu0 %v16
  %588 = vmatmul.f32.gmra.mxu0 %v560
  %v589 = vpop.f32.mrf.mxu0
  %v590 = vadd.f32 %v210, %v589
  %591 = vdwg.mxu0
  %592 = vmatpush.msra.mxu0 %v202
  %593 = vmatpush.msra.mxu0 %v196
  %594 = vmatpush.msra.mxu0 %v190
  %595 = vmatpush.msra.mxu0 %v184
  %596 = vmatpush.msra.mxu0 %v178
  %597 = vmatpush.msra.mxu0 %v172
  %598 = vmatpush.msra.mxu0 %v166
  %599 = vmatpush.msra.mxu0 %v160
  %600 = vmatpush.msra.mxu0 %v154
  %601 = vmatpush.msra.mxu0 %v148
  %602 = vmatpush.msra.mxu0 %v142
  %603 = vmatpush.msra.mxu0 %v136
  %604 = vmatpush.msra.mxu0 %v130
  %605 = vmatpush.msra.mxu0 %v124
  %606 = vmatpush.msra.mxu0 %v118
  %607 = vmatpush.msra.mxu0 %v112
  %608 = vmatmul.f32.gmra.mxu0 %v561
  %v609 = vpop.f32.mrf.mxu0
  %v610 = vadd.f32 %v590, %v609
  %611 = vdwg.mxu0
  %612 = vmatpush.msra.mxu0 %v107
  %613 = vmatpush.msra.mxu0 %v101
  %614 = vmatpush.msra.mxu0 %v95
  %615 = vmatpush.msra.mxu0 %v89
  %616 = vmatpush.msra.mxu0 %v83
  %617 = vmatpush.msra.mxu0 %v77
  %618 = vmatpush.msra.mxu0 %v71
  %619 = vmatpush.msra.mxu0 %v65
  %620 = vmatpush.msra.mxu0 %v59
  %621 = vmatpush.msra.mxu0 %v53
  %622 = vmatpush.msra.mxu0 %v47
  %623 = vmatpush.msra.mxu0 %v41
  %624 = vmatpush.msra.mxu0 %v35
  %625 = vmatpush.msra.mxu0 %v29
  %626 = vmatpush.msra.mxu0 %v23
  %627 = vmatpush.msra.mxu0 %v17
  %628 = vmatmul.f32.gmra.mxu0 %v560
  %v629 = vpop.f32.mrf.mxu0
  %v630 = vadd.f32 %v211, %v629
  %631 = vdwg.mxu0
  %632 = vmatpush.msra.mxu0 %v203
  %633 = vmatpush.msra.mxu0 %v197
  %634 = vmatpush.msra.mxu0 %v191
  %635 = vmatpush.msra.mxu0 %v185
  %636 = vmatpush.msra.mxu0 %v179
  %637 = vmatpush.msra.mxu0 %v173
  %638 = vmatpush.msra.mxu0 %v167
  %639 = vmatpush.msra.mxu0 %v161
  %640 = vmatpush.msra.mxu0 %v155
  %641 = vmatpush.msra.mxu0 %v149
  %642 = vmatpush.msra.mxu0 %v143
  %643 = vmatpush.msra.mxu0 %v137
  %644 = vmatpush.msra.mxu0 %v131
  %645 = vmatpush.msra.mxu0 %v125
  %646 = vmatpush.msra.mxu0 %v119
  %647 = vmatpush.msra.mxu0 %v113
  %648 = vmatmul.f32.gmra.mxu0 %v561
  %v649 = vpop.f32.mrf.mxu0
  %v650 = vadd.f32 %v630, %v649
  %651 = vdwg.mxu0
  %652 = vmatpush.msra.mxu0 %v108
  %653 = vmatpush.msra.mxu0 %v102
  %654 = vmatpush.msra.mxu0 %v96
  %655 = vmatpush.msra.mxu0 %v90
  %656 = vmatpush.msra.mxu0 %v84
  %657 = vmatpush.msra.mxu0 %v78
  %658 = vmatpush.msra.mxu0 %v72
  %659 = vmatpush.msra.mxu0 %v66
  %660 = vmatpush.msra.mxu0 %v60
  %661 = vmatpush.msra.mxu0 %v54
  %662 = vmatpush.msra.mxu0 %v48
  %663 = vmatpush.msra.mxu0 %v42
  %664 = vmatpush.msra.mxu0 %v36
  %665 = vmatpush.msra.mxu0 %v30
  %666 = vmatpush.msra.mxu0 %v24
  %667 = vmatpush.msra.mxu0 %v18
  %668 = vmatmul.f32.gmra.mxu0 %v560
  %v669 = vpop.f32.mrf.mxu0
  %v670 = vadd.f32 %v212, %v669
  %671 = vdwg.mxu0
  %672 = vmatpush.msra.mxu0 %v204
  %673 = vmatpush.msra.mxu0 %v198
  %674 = vmatpush.msra.mxu0 %v192
  %675 = vmatpush.msra.mxu0 %v186
  %676 = vmatpush.msra.mxu0 %v180
  %677 = vmatpush.msra.mxu0 %v174
  %678 = vmatpush.msra.mxu0 %v168
  %679 = vmatpush.msra.mxu0 %v162
  %680 = vmatpush.msra.mxu0 %v156
  %681 = vmatpush.msra.mxu0 %v150
  %682 = vmatpush.msra.mxu0 %v144
  %683 = vmatpush.msra.mxu0 %v138
  %684 = vmatpush.msra.mxu0 %v132
  %685 = vmatpush.msra.mxu0 %v126
  %686 = vmatpush.msra.mxu0 %v120
  %687 = vmatpush.msra.mxu0 %v114
  %688 = vmatmul.f32.gmra.mxu0 %v561
  %v689 = vpop.f32.mrf.mxu0
  %v690 = vadd.f32 %v670, %v689
  %691 = vdwg.mxu0
  %692 = vmatpush.msra.mxu0 %v109
  %693 = vmatpush.msra.mxu0 %v103
  %694 = vmatpush.msra.mxu0 %v97
  %695 = vmatpush.msra.mxu0 %v91
  %696 = vmatpush.msra.mxu0 %v85
  %697 = vmatpush.msra.mxu0 %v79
  %698 = vmatpush.msra.mxu0 %v73
  %699 = vmatpush.msra.mxu0 %v67
  %700 = vmatpush.msra.mxu0 %v61
  %701 = vmatpush.msra.mxu0 %v55
  %702 = vmatpush.msra.mxu0 %v49
  %703 = vmatpush.msra.mxu0 %v43
  %704 = vmatpush.msra.mxu0 %v37
  %705 = vmatpush.msra.mxu0 %v31
  %706 = vmatpush.msra.mxu0 %v25
  %707 = vmatpush.msra.mxu0 %v19
  %708 = vmatmul.f32.gmra.mxu0 %v560
  %v709 = vpop.f32.mrf.mxu0
  %v710 = vadd.f32 %v213, %v709
  %711 = vdwg.mxu0
  %712 = vmatpush.msra.mxu0 %v205
  %713 = vmatpush.msra.mxu0 %v199
  %714 = vmatpush.msra.mxu0 %v193
  %715 = vmatpush.msra.mxu0 %v187
  %716 = vmatpush.msra.mxu0 %v181
  %717 = vmatpush.msra.mxu0 %v175
  %718 = vmatpush.msra.mxu0 %v169
  %719 = vmatpush.msra.mxu0 %v163
  %720 = vmatpush.msra.mxu0 %v157
  %721 = vmatpush.msra.mxu0 %v151
  %722 = vmatpush.msra.mxu0 %v145
  %723 = vmatpush.msra.mxu0 %v139
  %724 = vmatpush.msra.mxu0 %v133
  %725 = vmatpush.msra.mxu0 %v127
  %726 = vmatpush.msra.mxu0 %v121
  %727 = vmatpush.msra.mxu0 %v115
  %728 = vmatmul.f32.gmra.mxu0 %v561
  %v729 = vpop.f32.mrf.mxu0
  %v730 = vadd.f32 %v710, %v729
  %731 = vdwg.mxu0
  %732 = vmatpush.msra.mxu0 %v110
  %733 = vmatpush.msra.mxu0 %v104
  %734 = vmatpush.msra.mxu0 %v98
  %735 = vmatpush.msra.mxu0 %v92
  %736 = vmatpush.msra.mxu0 %v86
  %737 = vmatpush.msra.mxu0 %v80
  %738 = vmatpush.msra.mxu0 %v74
  %739 = vmatpush.msra.mxu0 %v68
  %740 = vmatpush.msra.mxu0 %v62
  %741 = vmatpush.msra.mxu0 %v56
  %742 = vmatpush.msra.mxu0 %v50
  %743 = vmatpush.msra.mxu0 %v44
  %744 = vmatpush.msra.mxu0 %v38
  %745 = vmatpush.msra.mxu0 %v32
  %746 = vmatpush.msra.mxu0 %v26
  %747 = vmatpush.msra.mxu0 %v20
  %748 = vmatmul.f32.gmra.mxu0 %v560
  %v749 = vpop.f32.mrf.mxu0
  %v750 = vadd.f32 %v214, %v749
  %751 = vdwg.mxu0
  %752 = vmatpush.msra.mxu0 %v206
  %753 = vmatpush.msra.mxu0 %v200
  %754 = vmatpush.msra.mxu0 %v194
  %755 = vmatpush.msra.mxu0 %v188
  %756 = vmatpush.msra.mxu0 %v182
  %757 = vmatpush.msra.mxu0 %v176
  %758 = vmatpush.msra.mxu0 %v170
  %759 = vmatpush.msra.mxu0 %v164
  %760 = vmatpush.msra.mxu0 %v158
  %761 = vmatpush.msra.mxu0 %v152
  %762 = vmatpush.msra.mxu0 %v146
  %763 = vmatpush.msra.mxu0 %v140
  %764 = vmatpush.msra.mxu0 %v134
  %765 = vmatpush.msra.mxu0 %v128
  %766 = vmatpush.msra.mxu0 %v122
  %767 = vmatpush.msra.mxu0 %v116
  %768 = vmatmul.f32.gmra.mxu0 %v561
  %v769 = vpop.f32.mrf.mxu0
  %v770 = vadd.f32 %v750, %v769
  %771 = vdwg.mxu0
  %772 = vmatpush.msra.mxu0 %v111
  %773 = vmatpush.msra.mxu0 %v105
  %774 = vmatpush.msra.mxu0 %v99
  %775 = vmatpush.msra.mxu0 %v93
  %776 = vmatpush.msra.mxu0 %v87
  %777 = vmatpush.msra.mxu0 %v81
  %778 = vmatpush.msra.mxu0 %v75
  %779 = vmatpush.msra.mxu0 %v69
  %780 = vmatpush.msra.mxu0 %v63
  %781 = vmatpush.msra.mxu0 %v57
  %782 = vmatpush.msra.mxu0 %v51
  %783 = vmatpush.msra.mxu0 %v45
  %784 = vmatpush.msra.mxu0 %v39
  %785 = vmatpush.msra.mxu0 %v33
  %786 = vmatpush.msra.mxu0 %v27
  %787 = vmatpush.msra.mxu0 %v21
  %788 = vmatmul.f32.gmra.mxu0 %v560
  %v789 = vpop.f32.mrf.mxu0
  %v790 = vadd.f32 %v215, %v789
  %791 = vdwg.mxu0
  %792 = vmatpush.msra.mxu0 %v207
  %793 = vmatpush.msra.mxu0 %v201
  %794 = vmatpush.msra.mxu0 %v195
  %795 = vmatpush.msra.mxu0 %v189
  %796 = vmatpush.msra.mxu0 %v183
  %797 = vmatpush.msra.mxu0 %v177
  %798 = vmatpush.msra.mxu0 %v171
  %799 = vmatpush.msra.mxu0 %v165
  %800 = vmatpush.msra.mxu0 %v159
  %801 = vmatpush.msra.mxu0 %v153
  %802 = vmatpush.msra.mxu0 %v147
  %803 = vmatpush.msra.mxu0 %v141
  %804 = vmatpush.msra.mxu0 %v135
  %805 = vmatpush.msra.mxu0 %v129
  %806 = vmatpush.msra.mxu0 %v123
  %807 = vmatpush.msra.mxu0 %v117
  %808 = vmatmul.f32.gmra.mxu0 %v561
  %v809 = vpop.f32.mrf.mxu0
  %v810 = vadd.f32 %v790, %v809
  %811 = vdwg.mxu0
  %v812 = vadd.f32 %v566, %v610
  %v813 = vadd.f32 %v567, %v650
  %v814 = vxor.u32 %v812, 2147483648
  %v815 = vxor.u32 %v813, 2147483648
  %v816 = vmul.f32 %v814, 1.442695
  %v817 = vpow.pop %v816
  %v818 = vmul.f32 %v815, 1.442695
  %v819 = vpow.pop %v818
  %v820 = vadd.f32 %v817, 1.0
  %v821 = vadd.f32 %v819, 1.0
  %v822 = vrcp.pop %v820
  %v823 = vmul.f32 %v820, %v822
  %v824 = vsub.f32 1.0, %v823
  %v825 = vmul.f32 %v822, %v824
  %v826 = vadd.f32 %v822, %v825
  %vm827 = vweird.f32 %v820
  %vm828 = vweird.f32 %v822
  %vm829 = vmor %vm827, %vm828
  %v830 = vsel %vm829, %v822, %v826
  %v831 = vand.u32 2147483647, %v820
  %vm832 = vcmp.eq.f32.partialorder %v831, 8.507059e+37
  %v833 = vand.u32 %v820, 2147483648
  %v834 = vor.u32 1.1754944e-38, %v833
  %v835 = vsel %vm832, %v834, %v830
  %v836 = vmul.f32 1.0, %v835
  %v837 = vrcp.pop %v821
  %v838 = vmul.f32 %v821, %v837
  %v839 = vsub.f32 1.0, %v838
  %v840 = vmul.f32 %v837, %v839
  %v841 = vadd.f32 %v837, %v840
  %vm842 = vweird.f32 %v821
  %vm843 = vweird.f32 %v837
  %vm844 = vmor %vm842, %vm843
  %v845 = vsel %vm844, %v837, %v841
  %v846 = vand.u32 2147483647, %v821
  %vm847 = vcmp.eq.f32.partialorder %v846, 8.507059e+37
  %v848 = vand.u32 %v821, 2147483648
  %v849 = vor.u32 1.1754944e-38, %v848
  %v850 = vsel %vm847, %v849, %v845
  %v851 = vmul.f32 1.0, %v850
  %v852 = vadd.f32 %v568, %v690
  %v853 = vadd.f32 %v569, %v730
  %v854 = vxor.u32 %v852, 2147483648
  %v855 = vxor.u32 %v853, 2147483648
  %v856 = vmul.f32 %v854, 1.442695
  %v857 = vpow.pop %v856
  %v858 = vmul.f32 %v855, 1.442695
  %v859 = vpow.pop %v858
  %v860 = vadd.f32 %v857, 1.0
  %v861 = vadd.f32 %v859, 1.0
  %v862 = vrcp.pop %v860
  %v863 = vmul.f32 %v860, %v862
  %v864 = vsub.f32 1.0, %v863
  %v865 = vmul.f32 %v862, %v864
  %v866 = vadd.f32 %v862, %v865
  %vm867 = vweird.f32 %v860
  %vm868 = vweird.f32 %v862
  %vm869 = vmor %vm867, %vm868
  %v870 = vsel %vm869, %v862, %v866
  %v871 = vand.u32 2147483647, %v860
  %vm872 = vcmp.eq.f32.partialorder %v871, 8.507059e+37
  %v873 = vand.u32 %v860, 2147483648
  %v874 = vor.u32 1.1754944e-38, %v873
  %v875 = vsel %vm872, %v874, %v870
  %v876 = vmul.f32 1.0, %v875
  %v877 = vrcp.pop %v861
  %v878 = vmul.f32 %v861, %v877
  %v879 = vsub.f32 1.0, %v878
  %v880 = vmul.f32 %v877, %v879
  %v881 = vadd.f32 %v877, %v880
  %vm882 = vweird.f32 %v861
  %vm883 = vweird.f32 %v877
  %vm884 = vmor %vm882, %vm883
  %v885 = vsel %vm884, %v877, %v881
  %v886 = vand.u32 2147483647, %v861
  %vm887 = vcmp.eq.f32.partialorder %v886, 8.507059e+37
  %v888 = vand.u32 %v861, 2147483648
  %v889 = vor.u32 1.1754944e-38, %v888
  %v890 = vsel %vm887, %v889, %v885
  %v891 = vmul.f32 1.0, %v890
  %v892 = vmul.f32 %v836, %v770
  %v893 = vmul.f32 %v851, %v810
  %v894 = vadd.f32 %v570, %v892
  %v895 = vadd.f32 %v571, %v893
  %v896 = vtanh.pop %v894
  %v897 = vtanh.pop %v895
  %v898 = vsub.f32 1.0, %v876
  %v899 = vsub.f32 1.0, %v891
  %v900 = vmul.f32 %v898, %v896
  %v901 = vmul.f32 %v899, %v897
  %v902 = vmul.f32 %v876, %v560
  %v903 = vmul.f32 %v891, %v561
  %v904 = vadd.f32 %v900, %v902
  %v905 = vadd.f32 %v901, %v903
  %s906 = scalar_lea.vmem %s3, 8
  %907 = vst [vmem:[%s906] sm:$0xff] %v904
  %s908 = scalar_lea.vmem %s4, 48
  %909 = vst [vmem:[%s908] sm:$0xff] %v905
  %s910 = scalar_lea.vmem %s0, 96
  %v911 = vld [vmem:[%s910] sm:$0xff]
  %v912 = vld [vmem:[%s910 + $0x8] sm:$0xff]
  %v913 = vld [vmem:[%s910 + $0x10] sm:$0xff]
  %v914 = vld [vmem:[%s910 + $0x18] sm:$0xff]
  %v915 = vld [vmem:[%s910 + $0x20] sm:$0xff]
  %v916 = vld [vmem:[%s910 + $0x28] sm:$0xff]
  %917 = vmatpush.msra.mxu0 %v106
  %918 = vmatpush.msra.mxu0 %v100
  %919 = vmatpush.msra.mxu0 %v94
  %920 = vmatpush.msra.mxu0 %v88
  %921 = vmatpush.msra.mxu0 %v82
  %922 = vmatpush.msra.mxu0 %v76
  %923 = vmatpush.msra.mxu0 %v70
  %924 = vmatpush.msra.mxu0 %v64
  %925 = vmatpush.msra.mxu0 %v58
  %926 = vmatpush.msra.mxu0 %v52
  %927 = vmatpush.msra.mxu0 %v46
  %928 = vmatpush.msra.mxu0 %v40
  %929 = vmatpush.msra.mxu0 %v34
  %930 = vmatpush.msra.mxu0 %v28
  %931 = vmatpush.msra.mxu0 %v22
  %932 = vmatpush.msra.mxu0 %v16
  %933 = vmatmul.f32.gmra.mxu0 %v904
  %v934 = vpop.f32.mrf.mxu0
  %v935 = vadd.f32 %v210, %v934
  %936 = vdwg.mxu0
  %937 = vmatpush.msra.mxu0 %v202
  %938 = vmatpush.msra.mxu0 %v196
  %939 = vmatpush.msra.mxu0 %v190
  %940 = vmatpush.msra.mxu0 %v184
  %941 = vmatpush.msra.mxu0 %v178
  %942 = vmatpush.msra.mxu0 %v172
  %943 = vmatpush.msra.mxu0 %v166
  %944 = vmatpush.msra.mxu0 %v160
  %945 = vmatpush.msra.mxu0 %v154
  %946 = vmatpush.msra.mxu0 %v148
  %947 = vmatpush.msra.mxu0 %v142
  %948 = vmatpush.msra.mxu0 %v136
  %949 = vmatpush.msra.mxu0 %v130
  %950 = vmatpush.msra.mxu0 %v124
  %951 = vmatpush.msra.mxu0 %v118
  %952 = vmatpush.msra.mxu0 %v112
  %953 = vmatmul.f32.gmra.mxu0 %v905
  %v954 = vpop.f32.mrf.mxu0
  %v955 = vadd.f32 %v935, %v954
  %956 = vdwg.mxu0
  %957 = vmatpush.msra.mxu0 %v107
  %958 = vmatpush.msra.mxu0 %v101
  %959 = vmatpush.msra.mxu0 %v95
  %960 = vmatpush.msra.mxu0 %v89
  %961 = vmatpush.msra.mxu0 %v83
  %962 = vmatpush.msra.mxu0 %v77
  %963 = vmatpush.msra.mxu0 %v71
  %964 = vmatpush.msra.mxu0 %v65
  %965 = vmatpush.msra.mxu0 %v59
  %966 = vmatpush.msra.mxu0 %v53
  %967 = vmatpush.msra.mxu0 %v47
  %968 = vmatpush.msra.mxu0 %v41
  %969 = vmatpush.msra.mxu0 %v35
  %970 = vmatpush.msra.mxu0 %v29
  %971 = vmatpush.msra.mxu0 %v23
  %972 = vmatpush.msra.mxu0 %v17
  %973 = vmatmul.f32.gmra.mxu0 %v904
  %v974 = vpop.f32.mrf.mxu0
  %v975 = vadd.f32 %v211, %v974
  %976 = vdwg.mxu0
  %977 = vmatpush.msra.mxu0 %v203
  %978 = vmatpush.msra.mxu0 %v197
  %979 = vmatpush.msra.mxu0 %v191
  %980 = vmatpush.msra.mxu0 %v185
  %981 = vmatpush.msra.mxu0 %v179
  %982 = vmatpush.msra.mxu0 %v173
  %983 = vmatpush.msra.mxu0 %v167
  %984 = vmatpush.msra.mxu0 %v161
  %985 = vmatpush.msra.mxu0 %v155
  %986 = vmatpush.msra.mxu0 %v149
  %987 = vmatpush.msra.mxu0 %v143
  %988 = vmatpush.msra.mxu0 %v137
  %989 = vmatpush.msra.mxu0 %v131
  %990 = vmatpush.msra.mxu0 %v125
  %991 = vmatpush.msra.mxu0 %v119
  %992 = vmatpush.msra.mxu0 %v113
  %993 = vmatmul.f32.gmra.mxu0 %v905
  %v994 = vpop.f32.mrf.mxu0
  %v995 = vadd.f32 %v975, %v994
  %996 = vdwg.mxu0
  %997 = vmatpush.msra.mxu0 %v108
  %998 = vmatpush.msra.mxu0 %v102
  %999 = vmatpush.msra.mxu0 %v96
  %1000 = vmatpush.msra.mxu0 %v90
  %1001 = vmatpush.msra.mxu0 %v84
  %1002 = vmatpush.msra.mxu0 %v78
  %1003 = vmatpush.msra.mxu0 %v72
  %1004 = vmatpush.msra.mxu0 %v66
  %1005 = vmatpush.msra.mxu0 %v60
  %1006 = vmatpush.msra.mxu0 %v54
  %1007 = vmatpush.msra.mxu0 %v48
  %1008 = vmatpush.msra.mxu0 %v42
  %1009 = vmatpush.msra.mxu0 %v36
  %1010 = vmatpush.msra.mxu0 %v30
  %1011 = vmatpush.msra.mxu0 %v24
  %1012 = vmatpush.msra.mxu0 %v18
  %1013 = vmatmul.f32.gmra.mxu0 %v904
  %v1014 = vpop.f32.mrf.mxu0
  %v1015 = vadd.f32 %v212, %v1014
  %1016 = vdwg.mxu0
  %1017 = vmatpush.msra.mxu0 %v204
  %1018 = vmatpush.msra.mxu0 %v198
  %1019 = vmatpush.msra.mxu0 %v192
  %1020 = vmatpush.msra.mxu0 %v186
  %1021 = vmatpush.msra.mxu0 %v180
  %1022 = vmatpush.msra.mxu0 %v174
  %1023 = vmatpush.msra.mxu0 %v168
  %1024 = vmatpush.msra.mxu0 %v162
  %1025 = vmatpush.msra.mxu0 %v156
  %1026 = vmatpush.msra.mxu0 %v150
  %1027 = vmatpush.msra.mxu0 %v144
  %1028 = vmatpush.msra.mxu0 %v138
  %1029 = vmatpush.msra.mxu0 %v132
  %1030 = vmatpush.msra.mxu0 %v126
  %1031 = vmatpush.msra.mxu0 %v120
  %1032 = vmatpush.msra.mxu0 %v114
  %1033 = vmatmul.f32.gmra.mxu0 %v905
  %v1034 = vpop.f32.mrf.mxu0
  %v1035 = vadd.f32 %v1015, %v1034
  %1036 = vdwg.mxu0
  %1037 = vmatpush.msra.mxu0 %v109
  %1038 = vmatpush.msra.mxu0 %v103
  %1039 = vmatpush.msra.mxu0 %v97
  %1040 = vmatpush.msra.mxu0 %v91
  %1041 = vmatpush.msra.mxu0 %v85
  %1042 = vmatpush.msra.mxu0 %v79
  %1043 = vmatpush.msra.mxu0 %v73
  %1044 = vmatpush.msra.mxu0 %v67
  %1045 = vmatpush.msra.mxu0 %v61
  %1046 = vmatpush.msra.mxu0 %v55
  %1047 = vmatpush.msra.mxu0 %v49
  %1048 = vmatpush.msra.mxu0 %v43
  %1049 = vmatpush.msra.mxu0 %v37
  %1050 = vmatpush.msra.mxu0 %v31
  %1051 = vmatpush.msra.mxu0 %v25
  %1052 = vmatpush.msra.mxu0 %v19
  %1053 = vmatmul.f32.gmra.mxu0 %v904
  %v1054 = vpop.f32.mrf.mxu0
  %v1055 = vadd.f32 %v213, %v1054
  %1056 = vdwg.mxu0
  %1057 = vmatpush.msra.mxu0 %v205
  %1058 = vmatpush.msra.mxu0 %v199
  %1059 = vmatpush.msra.mxu0 %v193
  %1060 = vmatpush.msra.mxu0 %v187
  %1061 = vmatpush.msra.mxu0 %v181
  %1062 = vmatpush.msra.mxu0 %v175
  %1063 = vmatpush.msra.mxu0 %v169
  %1064 = vmatpush.msra.mxu0 %v163
  %1065 = vmatpush.msra.mxu0 %v157
  %1066 = vmatpush.msra.mxu0 %v151
  %1067 = vmatpush.msra.mxu0 %v145
  %1068 = vmatpush.msra.mxu0 %v139
  %1069 = vmatpush.msra.mxu0 %v133
  %1070 = vmatpush.msra.mxu0 %v127
  %1071 = vmatpush.msra.mxu0 %v121
  %1072 = vmatpush.msra.mxu0 %v115
  %1073 = vmatmul.f32.gmra.mxu0 %v905
  %v1074 = vpop.f32.mrf.mxu0
  %v1075 = vadd.f32 %v1055, %v1074
  %1076 = vdwg.mxu0
  %1077 = vmatpush.msra.mxu0 %v110
  %1078 = vmatpush.msra.mxu0 %v104
  %1079 = vmatpush.msra.mxu0 %v98
  %1080 = vmatpush.msra.mxu0 %v92
  %1081 = vmatpush.msra.mxu0 %v86
  %1082 = vmatpush.msra.mxu0 %v80
  %1083 = vmatpush.msra.mxu0 %v74
  %1084 = vmatpush.msra.mxu0 %v68
  %1085 = vmatpush.msra.mxu0 %v62
  %1086 = vmatpush.msra.mxu0 %v56
  %1087 = vmatpush.msra.mxu0 %v50
  %1088 = vmatpush.msra.mxu0 %v44
  %1089 = vmatpush.msra.mxu0 %v38
  %1090 = vmatpush.msra.mxu0 %v32
  %1091 = vmatpush.msra.mxu0 %v26
  %1092 = vmatpush.msra.mxu0 %v20
  %1093 = vmatmul.f32.gmra.mxu0 %v904
  %v1094 = vpop.f32.mrf.mxu0
  %v1095 = vadd.f32 %v214, %v1094
  %1096 = vdwg.mxu0
  %1097 = vmatpush.msra.mxu0 %v206
  %1098 = vmatpush.msra.mxu0 %v200
  %1099 = vmatpush.msra.mxu0 %v194
  %1100 = vmatpush.msra.mxu0 %v188
  %1101 = vmatpush.msra.mxu0 %v182
  %1102 = vmatpush.msra.mxu0 %v176
  %1103 = vmatpush.msra.mxu0 %v170
  %1104 = vmatpush.msra.mxu0 %v164
  %1105 = vmatpush.msra.mxu0 %v158
  %1106 = vmatpush.msra.mxu0 %v152
  %1107 = vmatpush.msra.mxu0 %v146
  %1108 = vmatpush.msra.mxu0 %v140
  %1109 = vmatpush.msra.mxu0 %v134
  %1110 = vmatpush.msra.mxu0 %v128
  %1111 = vmatpush.msra.mxu0 %v122
  %1112 = vmatpush.msra.mxu0 %v116
  %1113 = vmatmul.f32.gmra.mxu0 %v905
  %v1114 = vpop.f32.mrf.mxu0
  %v1115 = vadd.f32 %v1095, %v1114
  %1116 = vdwg.mxu0
  %1117 = vmatpush.msra.mxu0 %v111
  %1118 = vmatpush.msra.mxu0 %v105
  %1119 = vmatpush.msra.mxu0 %v99
  %1120 = vmatpush.msra.mxu0 %v93
  %1121 = vmatpush.msra.mxu0 %v87
  %1122 = vmatpush.msra.mxu0 %v81
  %1123 = vmatpush.msra.mxu0 %v75
  %1124 = vmatpush.msra.mxu0 %v69
  %1125 = vmatpush.msra.mxu0 %v63
  %1126 = vmatpush.msra.mxu0 %v57
  %1127 = vmatpush.msra.mxu0 %v51
  %1128 = vmatpush.msra.mxu0 %v45
  %1129 = vmatpush.msra.mxu0 %v39
  %1130 = vmatpush.msra.mxu0 %v33
  %1131 = vmatpush.msra.mxu0 %v27
  %1132 = vmatpush.msra.mxu0 %v21
  %1133 = vmatmul.f32.gmra.mxu0 %v904
  %v1134 = vpop.f32.mrf.mxu0
  %v1135 = vadd.f32 %v215, %v1134
  %1136 = vdwg.mxu0
  %1137 = vmatpush.msra.mxu0 %v207
  %1138 = vmatpush.msra.mxu0 %v201
  %1139 = vmatpush.msra.mxu0 %v195
  %1140 = vmatpush.msra.mxu0 %v189
  %1141 = vmatpush.msra.mxu0 %v183
  %1142 = vmatpush.msra.mxu0 %v177
  %1143 = vmatpush.msra.mxu0 %v171
  %1144 = vmatpush.msra.mxu0 %v165
  %1145 = vmatpush.msra.mxu0 %v159
  %1146 = vmatpush.msra.mxu0 %v153
  %1147 = vmatpush.msra.mxu0 %v147
  %1148 = vmatpush.msra.mxu0 %v141
  %1149 = vmatpush.msra.mxu0 %v135
  %1150 = vmatpush.msra.mxu0 %v129
  %1151 = vmatpush.msra.mxu0 %v123
  %1152 = vmatpush.msra.mxu0 %v117
  %1153 = vmatmul.f32.gmra.mxu0 %v905
  %v1154 = vpop.f32.mrf.mxu0
  %v1155 = vadd.f32 %v1135, %v1154
  %1156 = vdwg.mxu0
  %v1157 = vadd.f32 %v911, %v955
  %v1158 = vadd.f32 %v912, %v995
  %v1159 = vxor.u32 %v1157, 2147483648
  %v1160 = vxor.u32 %v1158, 2147483648
  %v1161 = vmul.f32 %v1159, 1.442695
  %v1162 = vpow.pop %v1161
  %v1163 = vmul.f32 %v1160, 1.442695
  %v1164 = vpow.pop %v1163
  %v1165 = vadd.f32 %v1162, 1.0
  %v1166 = vadd.f32 %v1164, 1.0
  %v1167 = vrcp.pop %v1165
  %v1168 = vmul.f32 %v1165, %v1167
  %v1169 = vsub.f32 1.0, %v1168
  %v1170 = vmul.f32 %v1167, %v1169
  %v1171 = vadd.f32 %v1167, %v1170
  %vm1172 = vweird.f32 %v1165
  %vm1173 = vweird.f32 %v1167
  %vm1174 = vmor %vm1172, %vm1173
  %v1175 = vsel %vm1174, %v1167, %v1171
  %v1176 = vand.u32 2147483647, %v1165
  %vm1177 = vcmp.eq.f32.partialorder %v1176, 8.507059e+37
  %v1178 = vand.u32 %v1165, 2147483648
  %v1179 = vor.u32 1.1754944e-38, %v1178
  %v1180 = vsel %vm1177, %v1179, %v1175
  %v1181 = vmul.f32 1.0, %v1180
  %v1182 = vrcp.pop %v1166
  %v1183 = vmul.f32 %v1166, %v1182
  %v1184 = vsub.f32 1.0, %v1183
  %v1185 = vmul.f32 %v1182, %v1184
  %v1186 = vadd.f32 %v1182, %v1185
  %vm1187 = vweird.f32 %v1166
  %vm1188 = vweird.f32 %v1182
  %vm1189 = vmor %vm1187, %vm1188
  %v1190 = vsel %vm1189, %v1182, %v1186
  %v1191 = vand.u32 2147483647, %v1166
  %vm1192 = vcmp.eq.f32.partialorder %v1191, 8.507059e+37
  %v1193 = vand.u32 %v1166, 2147483648
  %v1194 = vor.u32 1.1754944e-38, %v1193
  %v1195 = vsel %vm1192, %v1194, %v1190
  %v1196 = vmul.f32 1.0, %v1195
  %v1197 = vadd.f32 %v913, %v1035
  %v1198 = vadd.f32 %v914, %v1075
  %v1199 = vxor.u32 %v1197, 2147483648
  %v1200 = vxor.u32 %v1198, 2147483648
  %v1201 = vmul.f32 %v1199, 1.442695
  %v1202 = vpow.pop %v1201
  %v1203 = vmul.f32 %v1200, 1.442695
  %v1204 = vpow.pop %v1203
  %v1205 = vadd.f32 %v1202, 1.0
  %v1206 = vadd.f32 %v1204, 1.0
  %v1207 = vrcp.pop %v1205
  %v1208 = vmul.f32 %v1205, %v1207
  %v1209 = vsub.f32 1.0, %v1208
  %v1210 = vmul.f32 %v1207, %v1209
  %v1211 = vadd.f32 %v1207, %v1210
  %vm1212 = vweird.f32 %v1205
  %vm1213 = vweird.f32 %v1207
  %vm1214 = vmor %vm1212, %vm1213
  %v1215 = vsel %vm1214, %v1207, %v1211
  %v1216 = vand.u32 2147483647, %v1205
  %vm1217 = vcmp.eq.f32.partialorder %v1216, 8.507059e+37
  %v1218 = vand.u32 %v1205, 2147483648
  %v1219 = vor.u32 1.1754944e-38, %v1218
  %v1220 = vsel %vm1217, %v1219, %v1215
  %v1221 = vmul.f32 1.0, %v1220
  %v1222 = vrcp.pop %v1206
  %v1223 = vmul.f32 %v1206, %v1222
  %v1224 = vsub.f32 1.0, %v1223
  %v1225 = vmul.f32 %v1222, %v1224
  %v1226 = vadd.f32 %v1222, %v1225
  %vm1227 = vweird.f32 %v1206
  %vm1228 = vweird.f32 %v1222
  %vm1229 = vmor %vm1227, %vm1228
  %v1230 = vsel %vm1229, %v1222, %v1226
  %v1231 = vand.u32 2147483647, %v1206
  %vm1232 = vcmp.eq.f32.partialorder %v1231, 8.507059e+37
  %v1233 = vand.u32 %v1206, 2147483648
  %v1234 = vor.u32 1.1754944e-38, %v1233
  %v1235 = vsel %vm1232, %v1234, %v1230
  %v1236 = vmul.f32 1.0, %v1235
  %v1237 = vmul.f32 %v1181, %v1115
  %v1238 = vmul.f32 %v1196, %v1155
  %v1239 = vadd.f32 %v915, %v1237
  %v1240 = vadd.f32 %v916, %v1238
  %v1241 = vtanh.pop %v1239
  %v1242 = vtanh.pop %v1240
  %v1243 = vsub.f32 1.0, %v1221
  %v1244 = vsub.f32 1.0, %v1236
  %v1245 = vmul.f32 %v1243, %v1241
  %v1246 = vmul.f32 %v1244, %v1242
  %v1247 = vmul.f32 %v1221, %v904
  %v1248 = vmul.f32 %v1236, %v905
  %v1249 = vadd.f32 %v1245, %v1247
  %v1250 = vadd.f32 %v1246, %v1248
  %s1251 = scalar_lea.vmem %s3, 16
  %1252 = vst [vmem:[%s1251] sm:$0xff] %v1249
  %s1253 = scalar_lea.vmem %s4, 40
  %1254 = vst [vmem:[%s1253] sm:$0xff] %v1250
  %s1255 = scalar_lea.vmem %s0, 144
  %v1256 = vld [vmem:[%s1255] sm:$0xff]
  %v1257 = vld [vmem:[%s1255 + $0x8] sm:$0xff]
  %v1258 = vld [vmem:[%s1255 + $0x10] sm:$0xff]
  %v1259 = vld [vmem:[%s1255 + $0x18] sm:$0xff]
  %v1260 = vld [vmem:[%s1255 + $0x20] sm:$0xff]
  %v1261 = vld [vmem:[%s1255 + $0x28] sm:$0xff]
  %1262 = vmatpush.msra.mxu0 %v106
  %1263 = vmatpush.msra.mxu0 %v100
  %1264 = vmatpush.msra.mxu0 %v94
  %1265 = vmatpush.msra.mxu0 %v88
  %1266 = vmatpush.msra.mxu0 %v82
  %1267 = vmatpush.msra.mxu0 %v76
  %1268 = vmatpush.msra.mxu0 %v70
  %1269 = vmatpush.msra.mxu0 %v64
  %1270 = vmatpush.msra.mxu0 %v58
  %1271 = vmatpush.msra.mxu0 %v52
  %1272 = vmatpush.msra.mxu0 %v46
  %1273 = vmatpush.msra.mxu0 %v40
  %1274 = vmatpush.msra.mxu0 %v34
  %1275 = vmatpush.msra.mxu0 %v28
  %1276 = vmatpush.msra.mxu0 %v22
  %1277 = vmatpush.msra.mxu0 %v16
  %1278 = vmatmul.f32.gmra.mxu0 %v1249
  %v1279 = vpop.f32.mrf.mxu0
  %v1280 = vadd.f32 %v210, %v1279
  %1281 = vdwg.mxu0
  %1282 = vmatpush.msra.mxu0 %v202
  %1283 = vmatpush.msra.mxu0 %v196
  %1284 = vmatpush.msra.mxu0 %v190
  %1285 = vmatpush.msra.mxu0 %v184
  %1286 = vmatpush.msra.mxu0 %v178
  %1287 = vmatpush.msra.mxu0 %v172
  %1288 = vmatpush.msra.mxu0 %v166
  %1289 = vmatpush.msra.mxu0 %v160
  %1290 = vmatpush.msra.mxu0 %v154
  %1291 = vmatpush.msra.mxu0 %v148
  %1292 = vmatpush.msra.mxu0 %v142
  %1293 = vmatpush.msra.mxu0 %v136
  %1294 = vmatpush.msra.mxu0 %v130
  %1295 = vmatpush.msra.mxu0 %v124
  %1296 = vmatpush.msra.mxu0 %v118
  %1297 = vmatpush.msra.mxu0 %v112
  %1298 = vmatmul.f32.gmra.mxu0 %v1250
  %v1299 = vpop.f32.mrf.mxu0
  %v1300 = vadd.f32 %v1280, %v1299
  %1301 = vdwg.mxu0
  %1302 = vmatpush.msra.mxu0 %v107
  %1303 = vmatpush.msra.mxu0 %v101
  %1304 = vmatpush.msra.mxu0 %v95
  %1305 = vmatpush.msra.mxu0 %v89
  %1306 = vmatpush.msra.mxu0 %v83
  %1307 = vmatpush.msra.mxu0 %v77
  %1308 = vmatpush.msra.mxu0 %v71
  %1309 = vmatpush.msra.mxu0 %v65
  %1310 = vmatpush.msra.mxu0 %v59
  %1311 = vmatpush.msra.mxu0 %v53
  %1312 = vmatpush.msra.mxu0 %v47
  %1313 = vmatpush.msra.mxu0 %v41
  %1314 = vmatpush.msra.mxu0 %v35
  %1315 = vmatpush.msra.mxu0 %v29
  %1316 = vmatpush.msra.mxu0 %v23
  %1317 = vmatpush.msra.mxu0 %v17
  %1318 = vmatmul.f32.gmra.mxu0 %v1249
  %v1319 = vpop.f32.mrf.mxu0
  %v1320 = vadd.f32 %v211, %v1319
  %1321 = vdwg.mxu0
  %1322 = vmatpush.msra.mxu0 %v203
  %1323 = vmatpush.msra.mxu0 %v197
  %1324 = vmatpush.msra.mxu0 %v191
  %1325 = vmatpush.msra.mxu0 %v185
  %1326 = vmatpush.msra.mxu0 %v179
  %1327 = vmatpush.msra.mxu0 %v173
  %1328 = vmatpush.msra.mxu0 %v167
  %1329 = vmatpush.msra.mxu0 %v161
  %1330 = vmatpush.msra.mxu0 %v155
  %1331 = vmatpush.msra.mxu0 %v149
  %1332 = vmatpush.msra.mxu0 %v143
  %1333 = vmatpush.msra.mxu0 %v137
  %1334 = vmatpush.msra.mxu0 %v131
  %1335 = vmatpush.msra.mxu0 %v125
  %1336 = vmatpush.msra.mxu0 %v119
  %1337 = vmatpush.msra.mxu0 %v113
  %1338 = vmatmul.f32.gmra.mxu0 %v1250
  %v1339 = vpop.f32.mrf.mxu0
  %v1340 = vadd.f32 %v1320, %v1339
  %1341 = vdwg.mxu0
  %1342 = vmatpush.msra.mxu0 %v108
  %1343 = vmatpush.msra.mxu0 %v102
  %1344 = vmatpush.msra.mxu0 %v96
  %1345 = vmatpush.msra.mxu0 %v90
  %1346 = vmatpush.msra.mxu0 %v84
  %1347 = vmatpush.msra.mxu0 %v78
  %1348 = vmatpush.msra.mxu0 %v72
  %1349 = vmatpush.msra.mxu0 %v66
  %1350 = vmatpush.msra.mxu0 %v60
  %1351 = vmatpush.msra.mxu0 %v54
  %1352 = vmatpush.msra.mxu0 %v48
  %1353 = vmatpush.msra.mxu0 %v42
  %1354 = vmatpush.msra.mxu0 %v36
  %1355 = vmatpush.msra.mxu0 %v30
  %1356 = vmatpush.msra.mxu0 %v24
  %1357 = vmatpush.msra.mxu0 %v18
  %1358 = vmatmul.f32.gmra.mxu0 %v1249
  %v1359 = vpop.f32.mrf.mxu0
  %v1360 = vadd.f32 %v212, %v1359
  %1361 = vdwg.mxu0
  %1362 = vmatpush.msra.mxu0 %v204
  %1363 = vmatpush.msra.mxu0 %v198
  %1364 = vmatpush.msra.mxu0 %v192
  %1365 = vmatpush.msra.mxu0 %v186
  %1366 = vmatpush.msra.mxu0 %v180
  %1367 = vmatpush.msra.mxu0 %v174
  %1368 = vmatpush.msra.mxu0 %v168
  %1369 = vmatpush.msra.mxu0 %v162
  %1370 = vmatpush.msra.mxu0 %v156
  %1371 = vmatpush.msra.mxu0 %v150
  %1372 = vmatpush.msra.mxu0 %v144
  %1373 = vmatpush.msra.mxu0 %v138
  %1374 = vmatpush.msra.mxu0 %v132
  %1375 = vmatpush.msra.mxu0 %v126
  %1376 = vmatpush.msra.mxu0 %v120
  %1377 = vmatpush.msra.mxu0 %v114
  %1378 = vmatmul.f32.gmra.mxu0 %v1250
  %v1379 = vpop.f32.mrf.mxu0
  %v1380 = vadd.f32 %v1360, %v1379
  %1381 = vdwg.mxu0
  %1382 = vmatpush.msra.mxu0 %v109
  %1383 = vmatpush.msra.mxu0 %v103
  %1384 = vmatpush.msra.mxu0 %v97
  %1385 = vmatpush.msra.mxu0 %v91
  %1386 = vmatpush.msra.mxu0 %v85
  %1387 = vmatpush.msra.mxu0 %v79
  %1388 = vmatpush.msra.mxu0 %v73
  %1389 = vmatpush.msra.mxu0 %v67
  %1390 = vmatpush.msra.mxu0 %v61
  %1391 = vmatpush.msra.mxu0 %v55
  %1392 = vmatpush.msra.mxu0 %v49
  %1393 = vmatpush.msra.mxu0 %v43
  %1394 = vmatpush.msra.mxu0 %v37
  %1395 = vmatpush.msra.mxu0 %v31
  %1396 = vmatpush.msra.mxu0 %v25
  %1397 = vmatpush.msra.mxu0 %v19
  %1398 = vmatmul.f32.gmra.mxu0 %v1249
  %v1399 = vpop.f32.mrf.mxu0
  %v1400 = vadd.f32 %v213, %v1399
  %1401 = vdwg.mxu0
  %1402 = vmatpush.msra.mxu0 %v205
  %1403 = vmatpush.msra.mxu0 %v199
  %1404 = vmatpush.msra.mxu0 %v193
  %1405 = vmatpush.msra.mxu0 %v187
  %1406 = vmatpush.msra.mxu0 %v181
  %1407 = vmatpush.msra.mxu0 %v175
  %1408 = vmatpush.msra.mxu0 %v169
  %1409 = vmatpush.msra.mxu0 %v163
  %1410 = vmatpush.msra.mxu0 %v157
  %1411 = vmatpush.msra.mxu0 %v151
  %1412 = vmatpush.msra.mxu0 %v145
  %1413 = vmatpush.msra.mxu0 %v139
  %1414 = vmatpush.msra.mxu0 %v133
  %1415 = vmatpush.msra.mxu0 %v127
  %1416 = vmatpush.msra.mxu0 %v121
  %1417 = vmatpush.msra.mxu0 %v115
  %1418 = vmatmul.f32.gmra.mxu0 %v1250
  %v1419 = vpop.f32.mrf.mxu0
  %v1420 = vadd.f32 %v1400, %v1419
  %1421 = vdwg.mxu0
  %1422 = vmatpush.msra.mxu0 %v110
  %1423 = vmatpush.msra.mxu0 %v104
  %1424 = vmatpush.msra.mxu0 %v98
  %1425 = vmatpush.msra.mxu0 %v92
  %1426 = vmatpush.msra.mxu0 %v86
  %1427 = vmatpush.msra.mxu0 %v80
  %1428 = vmatpush.msra.mxu0 %v74
  %1429 = vmatpush.msra.mxu0 %v68
  %1430 = vmatpush.msra.mxu0 %v62
  %1431 = vmatpush.msra.mxu0 %v56
  %1432 = vmatpush.msra.mxu0 %v50
  %1433 = vmatpush.msra.mxu0 %v44
  %1434 = vmatpush.msra.mxu0 %v38
  %1435 = vmatpush.msra.mxu0 %v32
  %1436 = vmatpush.msra.mxu0 %v26
  %1437 = vmatpush.msra.mxu0 %v20
  %1438 = vmatmul.f32.gmra.mxu0 %v1249
  %v1439 = vpop.f32.mrf.mxu0
  %v1440 = vadd.f32 %v214, %v1439
  %1441 = vdwg.mxu0
  %1442 = vmatpush.msra.mxu0 %v206
  %1443 = vmatpush.msra.mxu0 %v200
  %1444 = vmatpush.msra.mxu0 %v194
  %1445 = vmatpush.msra.mxu0 %v188
  %1446 = vmatpush.msra.mxu0 %v182
  %1447 = vmatpush.msra.mxu0 %v176
  %1448 = vmatpush.msra.mxu0 %v170
  %1449 = vmatpush.msra.mxu0 %v164
  %1450 = vmatpush.msra.mxu0 %v158
  %1451 = vmatpush.msra.mxu0 %v152
  %1452 = vmatpush.msra.mxu0 %v146
  %1453 = vmatpush.msra.mxu0 %v140
  %1454 = vmatpush.msra.mxu0 %v134
  %1455 = vmatpush.msra.mxu0 %v128
  %1456 = vmatpush.msra.mxu0 %v122
  %1457 = vmatpush.msra.mxu0 %v116
  %1458 = vmatmul.f32.gmra.mxu0 %v1250
  %v1459 = vpop.f32.mrf.mxu0
  %v1460 = vadd.f32 %v1440, %v1459
  %1461 = vdwg.mxu0
  %1462 = vmatpush.msra.mxu0 %v111
  %1463 = vmatpush.msra.mxu0 %v105
  %1464 = vmatpush.msra.mxu0 %v99
  %1465 = vmatpush.msra.mxu0 %v93
  %1466 = vmatpush.msra.mxu0 %v87
  %1467 = vmatpush.msra.mxu0 %v81
  %1468 = vmatpush.msra.mxu0 %v75
  %1469 = vmatpush.msra.mxu0 %v69
  %1470 = vmatpush.msra.mxu0 %v63
  %1471 = vmatpush.msra.mxu0 %v57
  %1472 = vmatpush.msra.mxu0 %v51
  %1473 = vmatpush.msra.mxu0 %v45
  %1474 = vmatpush.msra.mxu0 %v39
  %1475 = vmatpush.msra.mxu0 %v33
  %1476 = vmatpush.msra.mxu0 %v27
  %1477 = vmatpush.msra.mxu0 %v21
  %1478 = vmatmul.f32.gmra.mxu0 %v1249
  %v1479 = vpop.f32.mrf.mxu0
  %v1480 = vadd.f32 %v215, %v1479
  %1481 = vdwg.mxu0
  %1482 = vmatpush.msra.mxu0 %v207
  %1483 = vmatpush.msra.mxu0 %v201
  %1484 = vmatpush.msra.mxu0 %v195
  %1485 = vmatpush.msra.mxu0 %v189
  %1486 = vmatpush.msra.mxu0 %v183
  %1487 = vmatpush.msra.mxu0 %v177
  %1488 = vmatpush.msra.mxu0 %v171
  %1489 = vmatpush.msra.mxu0 %v165
  %1490 = vmatpush.msra.mxu0 %v159
  %1491 = vmatpush.msra.mxu0 %v153
  %1492 = vmatpush.msra.mxu0 %v147
  %1493 = vmatpush.msra.mxu0 %v141
  %1494 = vmatpush.msra.mxu0 %v135
  %1495 = vmatpush.msra.mxu0 %v129
  %1496 = vmatpush.msra.mxu0 %v123
  %1497 = vmatpush.msra.mxu0 %v117
  %1498 = vmatmul.f32.gmra.mxu0 %v1250
  %v1499 = vpop.f32.mrf.mxu0
  %v1500 = vadd.f32 %v1480, %v1499
  %1501 = vdwg.mxu0
  %v1502 = vadd.f32 %v1256, %v1300
  %v1503 = vadd.f32 %v1257, %v1340
  %v1504 = vxor.u32 %v1502, 2147483648
  %v1505 = vxor.u32 %v1503, 2147483648
  %v1506 = vmul.f32 %v1504, 1.442695
  %v1507 = vpow.pop %v1506
  %v1508 = vmul.f32 %v1505, 1.442695
  %v1509 = vpow.pop %v1508
  %v1510 = vadd.f32 %v1507, 1.0
  %v1511 = vadd.f32 %v1509, 1.0
  %v1512 = vrcp.pop %v1510
  %v1513 = vmul.f32 %v1510, %v1512
  %v1514 = vsub.f32 1.0, %v1513
  %v1515 = vmul.f32 %v1512, %v1514
  %v1516 = vadd.f32 %v1512, %v1515
  %vm1517 = vweird.f32 %v1510
  %vm1518 = vweird.f32 %v1512
  %vm1519 = vmor %vm1517, %vm1518
  %v1520 = vsel %vm1519, %v1512, %v1516
  %v1521 = vand.u32 2147483647, %v1510
  %vm1522 = vcmp.eq.f32.partialorder %v1521, 8.507059e+37
  %v1523 = vand.u32 %v1510, 2147483648
  %v1524 = vor.u32 1.1754944e-38, %v1523
  %v1525 = vsel %vm1522, %v1524, %v1520
  %v1526 = vmul.f32 1.0, %v1525
  %v1527 = vrcp.pop %v1511
  %v1528 = vmul.f32 %v1511, %v1527
  %v1529 = vsub.f32 1.0, %v1528
  %v1530 = vmul.f32 %v1527, %v1529
  %v1531 = vadd.f32 %v1527, %v1530
  %vm1532 = vweird.f32 %v1511
  %vm1533 = vweird.f32 %v1527
  %vm1534 = vmor %vm1532, %vm1533
  %v1535 = vsel %vm1534, %v1527, %v1531
  %v1536 = vand.u32 2147483647, %v1511
  %vm1537 = vcmp.eq.f32.partialorder %v1536, 8.507059e+37
  %v1538 = vand.u32 %v1511, 2147483648
  %v1539 = vor.u32 1.1754944e-38, %v1538
  %v1540 = vsel %vm1537, %v1539, %v1535
  %v1541 = vmul.f32 1.0, %v1540
  %v1542 = vadd.f32 %v1258, %v1380
  %v1543 = vadd.f32 %v1259, %v1420
  %v1544 = vxor.u32 %v1542, 2147483648
  %v1545 = vxor.u32 %v1543, 2147483648
  %v1546 = vmul.f32 %v1544, 1.442695
  %v1547 = vpow.pop %v1546
  %v1548 = vmul.f32 %v1545, 1.442695
  %v1549 = vpow.pop %v1548
  %v1550 = vadd.f32 %v1547, 1.0
  %v1551 = vadd.f32 %v1549, 1.0
  %v1552 = vrcp.pop %v1550
  %v1553 = vmul.f32 %v1550, %v1552
  %v1554 = vsub.f32 1.0, %v1553
  %v1555 = vmul.f32 %v1552, %v1554
  %v1556 = vadd.f32 %v1552, %v1555
  %vm1557 = vweird.f32 %v1550
  %vm1558 = vweird.f32 %v1552
  %vm1559 = vmor %vm1557, %vm1558
  %v1560 = vsel %vm1559, %v1552, %v1556
  %v1561 = vand.u32 2147483647, %v1550
  %vm1562 = vcmp.eq.f32.partialorder %v1561, 8.507059e+37
  %v1563 = vand.u32 %v1550, 2147483648
  %v1564 = vor.u32 1.1754944e-38, %v1563
  %v1565 = vsel %vm1562, %v1564, %v1560
  %v1566 = vmul.f32 1.0, %v1565
  %v1567 = vrcp.pop %v1551
  %v1568 = vmul.f32 %v1551, %v1567
  %v1569 = vsub.f32 1.0, %v1568
  %v1570 = vmul.f32 %v1567, %v1569
  %v1571 = vadd.f32 %v1567, %v1570
  %vm1572 = vweird.f32 %v1551
  %vm1573 = vweird.f32 %v1567
  %vm1574 = vmor %vm1572, %vm1573
  %v1575 = vsel %vm1574, %v1567, %v1571
  %v1576 = vand.u32 2147483647, %v1551
  %vm1577 = vcmp.eq.f32.partialorder %v1576, 8.507059e+37
  %v1578 = vand.u32 %v1551, 2147483648
  %v1579 = vor.u32 1.1754944e-38, %v1578
  %v1580 = vsel %vm1577, %v1579, %v1575
  %v1581 = vmul.f32 1.0, %v1580
  %v1582 = vmul.f32 %v1526, %v1460
  %v1583 = vmul.f32 %v1541, %v1500
  %v1584 = vadd.f32 %v1260, %v1582
  %v1585 = vadd.f32 %v1261, %v1583
  %v1586 = vtanh.pop %v1584
  %v1587 = vtanh.pop %v1585
  %v1588 = vsub.f32 1.0, %v1566
  %v1589 = vsub.f32 1.0, %v1581
  %v1590 = vmul.f32 %v1588, %v1586
  %v1591 = vmul.f32 %v1589, %v1587
  %v1592 = vmul.f32 %v1566, %v1249
  %v1593 = vmul.f32 %v1581, %v1250
  %v1594 = vadd.f32 %v1590, %v1592
  %v1595 = vadd.f32 %v1591, %v1593
  %s1596 = scalar_lea.vmem %s3, 24
  %1597 = vst [vmem:[%s1596] sm:$0xff] %v1594
  %s1598 = scalar_lea.vmem %s4, 32
  %1599 = vst [vmem:[%s1598] sm:$0xff] %v1595
  %s1600 = scalar_lea.vmem %s0, 192
  %v1601 = vld [vmem:[%s1600] sm:$0xff]
  %v1602 = vld [vmem:[%s1600 + $0x8] sm:$0xff]
  %v1603 = vld [vmem:[%s1600 + $0x10] sm:$0xff]
  %v1604 = vld [vmem:[%s1600 + $0x18] sm:$0xff]
  %v1605 = vld [vmem:[%s1600 + $0x20] sm:$0xff]
  %v1606 = vld [vmem:[%s1600 + $0x28] sm:$0xff]
  %1607 = vmatpush.msra.mxu0 %v106
  %1608 = vmatpush.msra.mxu0 %v100
  %1609 = vmatpush.msra.mxu0 %v94
  %1610 = vmatpush.msra.mxu0 %v88
  %1611 = vmatpush.msra.mxu0 %v82
  %1612 = vmatpush.msra.mxu0 %v76
  %1613 = vmatpush.msra.mxu0 %v70
  %1614 = vmatpush.msra.mxu0 %v64
  %1615 = vmatpush.msra.mxu0 %v58
  %1616 = vmatpush.msra.mxu0 %v52
  %1617 = vmatpush.msra.mxu0 %v46
  %1618 = vmatpush.msra.mxu0 %v40
  %1619 = vmatpush.msra.mxu0 %v34
  %1620 = vmatpush.msra.mxu0 %v28
  %1621 = vmatpush.msra.mxu0 %v22
  %1622 = vmatpush.msra.mxu0 %v16
  %1623 = vmatmul.f32.gmra.mxu0 %v1594
  %v1624 = vpop.f32.mrf.mxu0
  %v1625 = vadd.f32 %v210, %v1624
  %1626 = vdwg.mxu0
  %1627 = vmatpush.msra.mxu0 %v202
  %1628 = vmatpush.msra.mxu0 %v196
  %1629 = vmatpush.msra.mxu0 %v190
  %1630 = vmatpush.msra.mxu0 %v184
  %1631 = vmatpush.msra.mxu0 %v178
  %1632 = vmatpush.msra.mxu0 %v172
  %1633 = vmatpush.msra.mxu0 %v166
  %1634 = vmatpush.msra.mxu0 %v160
  %1635 = vmatpush.msra.mxu0 %v154
  %1636 = vmatpush.msra.mxu0 %v148
  %1637 = vmatpush.msra.mxu0 %v142
  %1638 = vmatpush.msra.mxu0 %v136
  %1639 = vmatpush.msra.mxu0 %v130
  %1640 = vmatpush.msra.mxu0 %v124
  %1641 = vmatpush.msra.mxu0 %v118
  %1642 = vmatpush.msra.mxu0 %v112
  %1643 = vmatmul.f32.gmra.mxu0 %v1595
  %v1644 = vpop.f32.mrf.mxu0
  %v1645 = vadd.f32 %v1625, %v1644
  %1646 = vdwg.mxu0
  %1647 = vmatpush.msra.mxu0 %v107
  %1648 = vmatpush.msra.mxu0 %v101
  %1649 = vmatpush.msra.mxu0 %v95
  %1650 = vmatpush.msra.mxu0 %v89
  %1651 = vmatpush.msra.mxu0 %v83
  %1652 = vmatpush.msra.mxu0 %v77
  %1653 = vmatpush.msra.mxu0 %v71
  %1654 = vmatpush.msra.mxu0 %v65
  %1655 = vmatpush.msra.mxu0 %v59
  %1656 = vmatpush.msra.mxu0 %v53
  %1657 = vmatpush.msra.mxu0 %v47
  %1658 = vmatpush.msra.mxu0 %v41
  %1659 = vmatpush.msra.mxu0 %v35
  %1660 = vmatpush.msra.mxu0 %v29
  %1661 = vmatpush.msra.mxu0 %v23
  %1662 = vmatpush.msra.mxu0 %v17
  %1663 = vmatmul.f32.gmra.mxu0 %v1594
  %v1664 = vpop.f32.mrf.mxu0
  %v1665 = vadd.f32 %v211, %v1664
  %1666 = vdwg.mxu0
  %1667 = vmatpush.msra.mxu0 %v203
  %1668 = vmatpush.msra.mxu0 %v197
  %1669 = vmatpush.msra.mxu0 %v191
  %1670 = vmatpush.msra.mxu0 %v185
  %1671 = vmatpush.msra.mxu0 %v179
  %1672 = vmatpush.msra.mxu0 %v173
  %1673 = vmatpush.msra.mxu0 %v167
  %1674 = vmatpush.msra.mxu0 %v161
  %1675 = vmatpush.msra.mxu0 %v155
  %1676 = vmatpush.msra.mxu0 %v149
  %1677 = vmatpush.msra.mxu0 %v143
  %1678 = vmatpush.msra.mxu0 %v137
  %1679 = vmatpush.msra.mxu0 %v131
  %1680 = vmatpush.msra.mxu0 %v125
  %1681 = vmatpush.msra.mxu0 %v119
  %1682 = vmatpush.msra.mxu0 %v113
  %1683 = vmatmul.f32.gmra.mxu0 %v1595
  %v1684 = vpop.f32.mrf.mxu0
  %v1685 = vadd.f32 %v1665, %v1684
  %1686 = vdwg.mxu0
  %1687 = vmatpush.msra.mxu0 %v108
  %1688 = vmatpush.msra.mxu0 %v102
  %1689 = vmatpush.msra.mxu0 %v96
  %1690 = vmatpush.msra.mxu0 %v90
  %1691 = vmatpush.msra.mxu0 %v84
  %1692 = vmatpush.msra.mxu0 %v78
  %1693 = vmatpush.msra.mxu0 %v72
  %1694 = vmatpush.msra.mxu0 %v66
  %1695 = vmatpush.msra.mxu0 %v60
  %1696 = vmatpush.msra.mxu0 %v54
  %1697 = vmatpush.msra.mxu0 %v48
  %1698 = vmatpush.msra.mxu0 %v42
  %1699 = vmatpush.msra.mxu0 %v36
  %1700 = vmatpush.msra.mxu0 %v30
  %1701 = vmatpush.msra.mxu0 %v24
  %1702 = vmatpush.msra.mxu0 %v18
  %1703 = vmatmul.f32.gmra.mxu0 %v1594
  %v1704 = vpop.f32.mrf.mxu0
  %v1705 = vadd.f32 %v212, %v1704
  %1706 = vdwg.mxu0
  %1707 = vmatpush.msra.mxu0 %v204
  %1708 = vmatpush.msra.mxu0 %v198
  %1709 = vmatpush.msra.mxu0 %v192
  %1710 = vmatpush.msra.mxu0 %v186
  %1711 = vmatpush.msra.mxu0 %v180
  %1712 = vmatpush.msra.mxu0 %v174
  %1713 = vmatpush.msra.mxu0 %v168
  %1714 = vmatpush.msra.mxu0 %v162
  %1715 = vmatpush.msra.mxu0 %v156
  %1716 = vmatpush.msra.mxu0 %v150
  %1717 = vmatpush.msra.mxu0 %v144
  %1718 = vmatpush.msra.mxu0 %v138
  %1719 = vmatpush.msra.mxu0 %v132
  %1720 = vmatpush.msra.mxu0 %v126
  %1721 = vmatpush.msra.mxu0 %v120
  %1722 = vmatpush.msra.mxu0 %v114
  %1723 = vmatmul.f32.gmra.mxu0 %v1595
  %v1724 = vpop.f32.mrf.mxu0
  %v1725 = vadd.f32 %v1705, %v1724
  %1726 = vdwg.mxu0
  %1727 = vmatpush.msra.mxu0 %v109
  %1728 = vmatpush.msra.mxu0 %v103
  %1729 = vmatpush.msra.mxu0 %v97
  %1730 = vmatpush.msra.mxu0 %v91
  %1731 = vmatpush.msra.mxu0 %v85
  %1732 = vmatpush.msra.mxu0 %v79
  %1733 = vmatpush.msra.mxu0 %v73
  %1734 = vmatpush.msra.mxu0 %v67
  %1735 = vmatpush.msra.mxu0 %v61
  %1736 = vmatpush.msra.mxu0 %v55
  %1737 = vmatpush.msra.mxu0 %v49
  %1738 = vmatpush.msra.mxu0 %v43
  %1739 = vmatpush.msra.mxu0 %v37
  %1740 = vmatpush.msra.mxu0 %v31
  %1741 = vmatpush.msra.mxu0 %v25
  %1742 = vmatpush.msra.mxu0 %v19
  %1743 = vmatmul.f32.gmra.mxu0 %v1594
  %v1744 = vpop.f32.mrf.mxu0
  %v1745 = vadd.f32 %v213, %v1744
  %1746 = vdwg.mxu0
  %1747 = vmatpush.msra.mxu0 %v205
  %1748 = vmatpush.msra.mxu0 %v199
  %1749 = vmatpush.msra.mxu0 %v193
  %1750 = vmatpush.msra.mxu0 %v187
  %1751 = vmatpush.msra.mxu0 %v181
  %1752 = vmatpush.msra.mxu0 %v175
  %1753 = vmatpush.msra.mxu0 %v169
  %1754 = vmatpush.msra.mxu0 %v163
  %1755 = vmatpush.msra.mxu0 %v157
  %1756 = vmatpush.msra.mxu0 %v151
  %1757 = vmatpush.msra.mxu0 %v145
  %1758 = vmatpush.msra.mxu0 %v139
  %1759 = vmatpush.msra.mxu0 %v133
  %1760 = vmatpush.msra.mxu0 %v127
  %1761 = vmatpush.msra.mxu0 %v121
  %1762 = vmatpush.msra.mxu0 %v115
  %1763 = vmatmul.f32.gmra.mxu0 %v1595
  %v1764 = vpop.f32.mrf.mxu0
  %v1765 = vadd.f32 %v1745, %v1764
  %1766 = vdwg.mxu0
  %1767 = vmatpush.msra.mxu0 %v110
  %1768 = vmatpush.msra.mxu0 %v104
  %1769 = vmatpush.msra.mxu0 %v98
  %1770 = vmatpush.msra.mxu0 %v92
  %1771 = vmatpush.msra.mxu0 %v86
  %1772 = vmatpush.msra.mxu0 %v80
  %1773 = vmatpush.msra.mxu0 %v74
  %1774 = vmatpush.msra.mxu0 %v68
  %1775 = vmatpush.msra.mxu0 %v62
  %1776 = vmatpush.msra.mxu0 %v56
  %1777 = vmatpush.msra.mxu0 %v50
  %1778 = vmatpush.msra.mxu0 %v44
  %1779 = vmatpush.msra.mxu0 %v38
  %1780 = vmatpush.msra.mxu0 %v32
  %1781 = vmatpush.msra.mxu0 %v26
  %1782 = vmatpush.msra.mxu0 %v20
  %1783 = vmatmul.f32.gmra.mxu0 %v1594
  %v1784 = vpop.f32.mrf.mxu0
  %v1785 = vadd.f32 %v214, %v1784
  %1786 = vdwg.mxu0
  %1787 = vmatpush.msra.mxu0 %v206
  %1788 = vmatpush.msra.mxu0 %v200
  %1789 = vmatpush.msra.mxu0 %v194
  %1790 = vmatpush.msra.mxu0 %v188
  %1791 = vmatpush.msra.mxu0 %v182
  %1792 = vmatpush.msra.mxu0 %v176
  %1793 = vmatpush.msra.mxu0 %v170
  %1794 = vmatpush.msra.mxu0 %v164
  %1795 = vmatpush.msra.mxu0 %v158
  %1796 = vmatpush.msra.mxu0 %v152
  %1797 = vmatpush.msra.mxu0 %v146
  %1798 = vmatpush.msra.mxu0 %v140
  %1799 = vmatpush.msra.mxu0 %v134
  %1800 = vmatpush.msra.mxu0 %v128
  %1801 = vmatpush.msra.mxu0 %v122
  %1802 = vmatpush.msra.mxu0 %v116
  %1803 = vmatmul.f32.gmra.mxu0 %v1595
  %v1804 = vpop.f32.mrf.mxu0
  %v1805 = vadd.f32 %v1785, %v1804
  %1806 = vdwg.mxu0
  %1807 = vmatpush.msra.mxu0 %v111
  %1808 = vmatpush.msra.mxu0 %v105
  %1809 = vmatpush.msra.mxu0 %v99
  %1810 = vmatpush.msra.mxu0 %v93
  %1811 = vmatpush.msra.mxu0 %v87
  %1812 = vmatpush.msra.mxu0 %v81
  %1813 = vmatpush.msra.mxu0 %v75
  %1814 = vmatpush.msra.mxu0 %v69
  %1815 = vmatpush.msra.mxu0 %v63
  %1816 = vmatpush.msra.mxu0 %v57
  %1817 = vmatpush.msra.mxu0 %v51
  %1818 = vmatpush.msra.mxu0 %v45
  %1819 = vmatpush.msra.mxu0 %v39
  %1820 = vmatpush.msra.mxu0 %v33
  %1821 = vmatpush.msra.mxu0 %v27
  %1822 = vmatpush.msra.mxu0 %v21
  %1823 = vmatmul.f32.gmra.mxu0 %v1594
  %v1824 = vpop.f32.mrf.mxu0
  %v1825 = vadd.f32 %v215, %v1824
  %1826 = vdwg.mxu0
  %1827 = vmatpush.msra.mxu0 %v207
  %1828 = vmatpush.msra.mxu0 %v201
  %1829 = vmatpush.msra.mxu0 %v195
  %1830 = vmatpush.msra.mxu0 %v189
  %1831 = vmatpush.msra.mxu0 %v183
  %1832 = vmatpush.msra.mxu0 %v177
  %1833 = vmatpush.msra.mxu0 %v171
  %1834 = vmatpush.msra.mxu0 %v165
  %1835 = vmatpush.msra.mxu0 %v159
  %1836 = vmatpush.msra.mxu0 %v153
  %1837 = vmatpush.msra.mxu0 %v147
  %1838 = vmatpush.msra.mxu0 %v141
  %1839 = vmatpush.msra.mxu0 %v135
  %1840 = vmatpush.msra.mxu0 %v129
  %1841 = vmatpush.msra.mxu0 %v123
  %1842 = vmatpush.msra.mxu0 %v117
  %1843 = vmatmul.f32.gmra.mxu0 %v1595
  %v1844 = vpop.f32.mrf.mxu0
  %v1845 = vadd.f32 %v1825, %v1844
  %1846 = vdwg.mxu0
  %v1847 = vadd.f32 %v1601, %v1645
  %v1848 = vadd.f32 %v1602, %v1685
  %v1849 = vxor.u32 %v1847, 2147483648
  %v1850 = vxor.u32 %v1848, 2147483648
  %v1851 = vmul.f32 %v1849, 1.442695
  %v1852 = vpow.pop %v1851
  %v1853 = vmul.f32 %v1850, 1.442695
  %v1854 = vpow.pop %v1853
  %v1855 = vadd.f32 %v1852, 1.0
  %v1856 = vadd.f32 %v1854, 1.0
  %v1857 = vrcp.pop %v1855
  %v1858 = vmul.f32 %v1855, %v1857
  %v1859 = vsub.f32 1.0, %v1858
  %v1860 = vmul.f32 %v1857, %v1859
  %v1861 = vadd.f32 %v1857, %v1860
  %vm1862 = vweird.f32 %v1855
  %vm1863 = vweird.f32 %v1857
  %vm1864 = vmor %vm1862, %vm1863
  %v1865 = vsel %vm1864, %v1857, %v1861
  %v1866 = vand.u32 2147483647, %v1855
  %vm1867 = vcmp.eq.f32.partialorder %v1866, 8.507059e+37
  %v1868 = vand.u32 %v1855, 2147483648
  %v1869 = vor.u32 1.1754944e-38, %v1868
  %v1870 = vsel %vm1867, %v1869, %v1865
  %v1871 = vmul.f32 1.0, %v1870
  %v1872 = vrcp.pop %v1856
  %v1873 = vmul.f32 %v1856, %v1872
  %v1874 = vsub.f32 1.0, %v1873
  %v1875 = vmul.f32 %v1872, %v1874
  %v1876 = vadd.f32 %v1872, %v1875
  %vm1877 = vweird.f32 %v1856
  %vm1878 = vweird.f32 %v1872
  %vm1879 = vmor %vm1877, %vm1878
  %v1880 = vsel %vm1879, %v1872, %v1876
  %v1881 = vand.u32 2147483647, %v1856
  %vm1882 = vcmp.eq.f32.partialorder %v1881, 8.507059e+37
  %v1883 = vand.u32 %v1856, 2147483648
  %v1884 = vor.u32 1.1754944e-38, %v1883
  %v1885 = vsel %vm1882, %v1884, %v1880
  %v1886 = vmul.f32 1.0, %v1885
  %v1887 = vadd.f32 %v1603, %v1725
  %v1888 = vadd.f32 %v1604, %v1765
  %v1889 = vxor.u32 %v1887, 2147483648
  %v1890 = vxor.u32 %v1888, 2147483648
  %v1891 = vmul.f32 %v1889, 1.442695
  %v1892 = vpow.pop %v1891
  %v1893 = vmul.f32 %v1890, 1.442695
  %v1894 = vpow.pop %v1893
  %v1895 = vadd.f32 %v1892, 1.0
  %v1896 = vadd.f32 %v1894, 1.0
  %v1897 = vrcp.pop %v1895
  %v1898 = vmul.f32 %v1895, %v1897
  %v1899 = vsub.f32 1.0, %v1898
  %v1900 = vmul.f32 %v1897, %v1899
  %v1901 = vadd.f32 %v1897, %v1900
  %vm1902 = vweird.f32 %v1895
  %vm1903 = vweird.f32 %v1897
  %vm1904 = vmor %vm1902, %vm1903
  %v1905 = vsel %vm1904, %v1897, %v1901
  %v1906 = vand.u32 2147483647, %v1895
  %vm1907 = vcmp.eq.f32.partialorder %v1906, 8.507059e+37
  %v1908 = vand.u32 %v1895, 2147483648
  %v1909 = vor.u32 1.1754944e-38, %v1908
  %v1910 = vsel %vm1907, %v1909, %v1905
  %v1911 = vmul.f32 1.0, %v1910
  %v1912 = vrcp.pop %v1896
  %v1913 = vmul.f32 %v1896, %v1912
  %v1914 = vsub.f32 1.0, %v1913
  %v1915 = vmul.f32 %v1912, %v1914
  %v1916 = vadd.f32 %v1912, %v1915
  %vm1917 = vweird.f32 %v1896
  %vm1918 = vweird.f32 %v1912
  %vm1919 = vmor %vm1917, %vm1918
  %v1920 = vsel %vm1919, %v1912, %v1916
  %v1921 = vand.u32 2147483647, %v1896
  %vm1922 = vcmp.eq.f32.partialorder %v1921, 8.507059e+37
  %v1923 = vand.u32 %v1896, 2147483648
  %v1924 = vor.u32 1.1754944e-38, %v1923
  %v1925 = vsel %vm1922, %v1924, %v1920
  %v1926 = vmul.f32 1.0, %v1925
  %v1927 = vmul.f32 %v1871, %v1805
  %v1928 = vmul.f32 %v1886, %v1845
  %v1929 = vadd.f32 %v1605, %v1927
  %v1930 = vadd.f32 %v1606, %v1928
  %v1931 = vtanh.pop %v1929
  %v1932 = vtanh.pop %v1930
  %v1933 = vsub.f32 1.0, %v1911
  %v1934 = vsub.f32 1.0, %v1926
  %v1935 = vmul.f32 %v1933, %v1931
  %v1936 = vmul.f32 %v1934, %v1932
  %v1937 = vmul.f32 %v1911, %v1594
  %v1938 = vmul.f32 %v1926, %v1595
  %v1939 = vadd.f32 %v1935, %v1937
  %v1940 = vadd.f32 %v1936, %v1938
  %s1941 = scalar_lea.vmem %s3, 32
  %1942 = vst [vmem:[%s1941] sm:$0xff] %v1939
  %s1943 = scalar_lea.vmem %s4, 24
  %1944 = vst [vmem:[%s1943] sm:$0xff] %v1940
  %s1945 = scalar_lea.vmem %s0, 240
  %v1946 = vld [vmem:[%s1945] sm:$0xff]
  %v1947 = vld [vmem:[%s1945 + $0x8] sm:$0xff]
  %v1948 = vld [vmem:[%s1945 + $0x10] sm:$0xff]
  %v1949 = vld [vmem:[%s1945 + $0x18] sm:$0xff]
  %v1950 = vld [vmem:[%s1945 + $0x20] sm:$0xff]
  %v1951 = vld [vmem:[%s1945 + $0x28] sm:$0xff]
  %1952 = vmatpush.msra.mxu0 %v106
  %1953 = vmatpush.msra.mxu0 %v100
  %1954 = vmatpush.msra.mxu0 %v94
  %1955 = vmatpush.msra.mxu0 %v88
  %1956 = vmatpush.msra.mxu0 %v82
  %1957 = vmatpush.msra.mxu0 %v76
  %1958 = vmatpush.msra.mxu0 %v70
  %1959 = vmatpush.msra.mxu0 %v64
  %1960 = vmatpush.msra.mxu0 %v58
  %1961 = vmatpush.msra.mxu0 %v52
  %1962 = vmatpush.msra.mxu0 %v46
  %1963 = vmatpush.msra.mxu0 %v40
  %1964 = vmatpush.msra.mxu0 %v34
  %1965 = vmatpush.msra.mxu0 %v28
  %1966 = vmatpush.msra.mxu0 %v22
  %1967 = vmatpush.msra.mxu0 %v16
  %1968 = vmatmul.f32.gmra.mxu0 %v1939
  %v1969 = vpop.f32.mrf.mxu0
  %v1970 = vadd.f32 %v210, %v1969
  %1971 = vdwg.mxu0
  %1972 = vmatpush.msra.mxu0 %v202
  %1973 = vmatpush.msra.mxu0 %v196
  %1974 = vmatpush.msra.mxu0 %v190
  %1975 = vmatpush.msra.mxu0 %v184
  %1976 = vmatpush.msra.mxu0 %v178
  %1977 = vmatpush.msra.mxu0 %v172
  %1978 = vmatpush.msra.mxu0 %v166
  %1979 = vmatpush.msra.mxu0 %v160
  %1980 = vmatpush.msra.mxu0 %v154
  %1981 = vmatpush.msra.mxu0 %v148
  %1982 = vmatpush.msra.mxu0 %v142
  %1983 = vmatpush.msra.mxu0 %v136
  %1984 = vmatpush.msra.mxu0 %v130
  %1985 = vmatpush.msra.mxu0 %v124
  %1986 = vmatpush.msra.mxu0 %v118
  %1987 = vmatpush.msra.mxu0 %v112
  %1988 = vmatmul.f32.gmra.mxu0 %v1940
  %v1989 = vpop.f32.mrf.mxu0
  %v1990 = vadd.f32 %v1970, %v1989
  %1991 = vdwg.mxu0
  %1992 = vmatpush.msra.mxu0 %v107
  %1993 = vmatpush.msra.mxu0 %v101
  %1994 = vmatpush.msra.mxu0 %v95
  %1995 = vmatpush.msra.mxu0 %v89
  %1996 = vmatpush.msra.mxu0 %v83
  %1997 = vmatpush.msra.mxu0 %v77
  %1998 = vmatpush.msra.mxu0 %v71
  %1999 = vmatpush.msra.mxu0 %v65
  %2000 = vmatpush.msra.mxu0 %v59
  %2001 = vmatpush.msra.mxu0 %v53
  %2002 = vmatpush.msra.mxu0 %v47
  %2003 = vmatpush.msra.mxu0 %v41
  %2004 = vmatpush.msra.mxu0 %v35
  %2005 = vmatpush.msra.mxu0 %v29
  %2006 = vmatpush.msra.mxu0 %v23
  %2007 = vmatpush.msra.mxu0 %v17
  %2008 = vmatmul.f32.gmra.mxu0 %v1939
  %v2009 = vpop.f32.mrf.mxu0
  %v2010 = vadd.f32 %v211, %v2009
  %2011 = vdwg.mxu0
  %2012 = vmatpush.msra.mxu0 %v203
  %2013 = vmatpush.msra.mxu0 %v197
  %2014 = vmatpush.msra.mxu0 %v191
  %2015 = vmatpush.msra.mxu0 %v185
  %2016 = vmatpush.msra.mxu0 %v179
  %2017 = vmatpush.msra.mxu0 %v173
  %2018 = vmatpush.msra.mxu0 %v167
  %2019 = vmatpush.msra.mxu0 %v161
  %2020 = vmatpush.msra.mxu0 %v155
  %2021 = vmatpush.msra.mxu0 %v149
  %2022 = vmatpush.msra.mxu0 %v143
  %2023 = vmatpush.msra.mxu0 %v137
  %2024 = vmatpush.msra.mxu0 %v131
  %2025 = vmatpush.msra.mxu0 %v125
  %2026 = vmatpush.msra.mxu0 %v119
  %2027 = vmatpush.msra.mxu0 %v113
  %2028 = vmatmul.f32.gmra.mxu0 %v1940
  %v2029 = vpop.f32.mrf.mxu0
  %v2030 = vadd.f32 %v2010, %v2029
  %2031 = vdwg.mxu0
  %2032 = vmatpush.msra.mxu0 %v108
  %2033 = vmatpush.msra.mxu0 %v102
  %2034 = vmatpush.msra.mxu0 %v96
  %2035 = vmatpush.msra.mxu0 %v90
  %2036 = vmatpush.msra.mxu0 %v84
  %2037 = vmatpush.msra.mxu0 %v78
  %2038 = vmatpush.msra.mxu0 %v72
  %2039 = vmatpush.msra.mxu0 %v66
  %2040 = vmatpush.msra.mxu0 %v60
  %2041 = vmatpush.msra.mxu0 %v54
  %2042 = vmatpush.msra.mxu0 %v48
  %2043 = vmatpush.msra.mxu0 %v42
  %2044 = vmatpush.msra.mxu0 %v36
  %2045 = vmatpush.msra.mxu0 %v30
  %2046 = vmatpush.msra.mxu0 %v24
  %2047 = vmatpush.msra.mxu0 %v18
  %2048 = vmatmul.f32.gmra.mxu0 %v1939
  %v2049 = vpop.f32.mrf.mxu0
  %v2050 = vadd.f32 %v212, %v2049
  %2051 = vdwg.mxu0
  %2052 = vmatpush.msra.mxu0 %v204
  %2053 = vmatpush.msra.mxu0 %v198
  %2054 = vmatpush.msra.mxu0 %v192
  %2055 = vmatpush.msra.mxu0 %v186
  %2056 = vmatpush.msra.mxu0 %v180
  %2057 = vmatpush.msra.mxu0 %v174
  %2058 = vmatpush.msra.mxu0 %v168
  %2059 = vmatpush.msra.mxu0 %v162
  %2060 = vmatpush.msra.mxu0 %v156
  %2061 = vmatpush.msra.mxu0 %v150
  %2062 = vmatpush.msra.mxu0 %v144
  %2063 = vmatpush.msra.mxu0 %v138
  %2064 = vmatpush.msra.mxu0 %v132
  %2065 = vmatpush.msra.mxu0 %v126
  %2066 = vmatpush.msra.mxu0 %v120
  %2067 = vmatpush.msra.mxu0 %v114
  %2068 = vmatmul.f32.gmra.mxu0 %v1940
  %v2069 = vpop.f32.mrf.mxu0
  %v2070 = vadd.f32 %v2050, %v2069
  %2071 = vdwg.mxu0
  %2072 = vmatpush.msra.mxu0 %v109
  %2073 = vmatpush.msra.mxu0 %v103
  %2074 = vmatpush.msra.mxu0 %v97
  %2075 = vmatpush.msra.mxu0 %v91
  %2076 = vmatpush.msra.mxu0 %v85
  %2077 = vmatpush.msra.mxu0 %v79
  %2078 = vmatpush.msra.mxu0 %v73
  %2079 = vmatpush.msra.mxu0 %v67
  %2080 = vmatpush.msra.mxu0 %v61
  %2081 = vmatpush.msra.mxu0 %v55
  %2082 = vmatpush.msra.mxu0 %v49
  %2083 = vmatpush.msra.mxu0 %v43
  %2084 = vmatpush.msra.mxu0 %v37
  %2085 = vmatpush.msra.mxu0 %v31
  %2086 = vmatpush.msra.mxu0 %v25
  %2087 = vmatpush.msra.mxu0 %v19
  %2088 = vmatmul.f32.gmra.mxu0 %v1939
  %v2089 = vpop.f32.mrf.mxu0
  %v2090 = vadd.f32 %v213, %v2089
  %2091 = vdwg.mxu0
  %2092 = vmatpush.msra.mxu0 %v205
  %2093 = vmatpush.msra.mxu0 %v199
  %2094 = vmatpush.msra.mxu0 %v193
  %2095 = vmatpush.msra.mxu0 %v187
  %2096 = vmatpush.msra.mxu0 %v181
  %2097 = vmatpush.msra.mxu0 %v175
  %2098 = vmatpush.msra.mxu0 %v169
  %2099 = vmatpush.msra.mxu0 %v163
  %2100 = vmatpush.msra.mxu0 %v157
  %2101 = vmatpush.msra.mxu0 %v151
  %2102 = vmatpush.msra.mxu0 %v145
  %2103 = vmatpush.msra.mxu0 %v139
  %2104 = vmatpush.msra.mxu0 %v133
  %2105 = vmatpush.msra.mxu0 %v127
  %2106 = vmatpush.msra.mxu0 %v121
  %2107 = vmatpush.msra.mxu0 %v115
  %2108 = vmatmul.f32.gmra.mxu0 %v1940
  %v2109 = vpop.f32.mrf.mxu0
  %v2110 = vadd.f32 %v2090, %v2109
  %2111 = vdwg.mxu0
  %2112 = vmatpush.msra.mxu0 %v110
  %2113 = vmatpush.msra.mxu0 %v104
  %2114 = vmatpush.msra.mxu0 %v98
  %2115 = vmatpush.msra.mxu0 %v92
  %2116 = vmatpush.msra.mxu0 %v86
  %2117 = vmatpush.msra.mxu0 %v80
  %2118 = vmatpush.msra.mxu0 %v74
  %2119 = vmatpush.msra.mxu0 %v68
  %2120 = vmatpush.msra.mxu0 %v62
  %2121 = vmatpush.msra.mxu0 %v56
  %2122 = vmatpush.msra.mxu0 %v50
  %2123 = vmatpush.msra.mxu0 %v44
  %2124 = vmatpush.msra.mxu0 %v38
  %2125 = vmatpush.msra.mxu0 %v32
  %2126 = vmatpush.msra.mxu0 %v26
  %2127 = vmatpush.msra.mxu0 %v20
  %2128 = vmatmul.f32.gmra.mxu0 %v1939
  %v2129 = vpop.f32.mrf.mxu0
  %v2130 = vadd.f32 %v214, %v2129
  %2131 = vdwg.mxu0
  %2132 = vmatpush.msra.mxu0 %v206
  %2133 = vmatpush.msra.mxu0 %v200
  %2134 = vmatpush.msra.mxu0 %v194
  %2135 = vmatpush.msra.mxu0 %v188
  %2136 = vmatpush.msra.mxu0 %v182
  %2137 = vmatpush.msra.mxu0 %v176
  %2138 = vmatpush.msra.mxu0 %v170
  %2139 = vmatpush.msra.mxu0 %v164
  %2140 = vmatpush.msra.mxu0 %v158
  %2141 = vmatpush.msra.mxu0 %v152
  %2142 = vmatpush.msra.mxu0 %v146
  %2143 = vmatpush.msra.mxu0 %v140
  %2144 = vmatpush.msra.mxu0 %v134
  %2145 = vmatpush.msra.mxu0 %v128
  %2146 = vmatpush.msra.mxu0 %v122
  %2147 = vmatpush.msra.mxu0 %v116
  %2148 = vmatmul.f32.gmra.mxu0 %v1940
  %v2149 = vpop.f32.mrf.mxu0
  %v2150 = vadd.f32 %v2130, %v2149
  %2151 = vdwg.mxu0
  %2152 = vmatpush.msra.mxu0 %v111
  %2153 = vmatpush.msra.mxu0 %v105
  %2154 = vmatpush.msra.mxu0 %v99
  %2155 = vmatpush.msra.mxu0 %v93
  %2156 = vmatpush.msra.mxu0 %v87
  %2157 = vmatpush.msra.mxu0 %v81
  %2158 = vmatpush.msra.mxu0 %v75
  %2159 = vmatpush.msra.mxu0 %v69
  %2160 = vmatpush.msra.mxu0 %v63
  %2161 = vmatpush.msra.mxu0 %v57
  %2162 = vmatpush.msra.mxu0 %v51
  %2163 = vmatpush.msra.mxu0 %v45
  %2164 = vmatpush.msra.mxu0 %v39
  %2165 = vmatpush.msra.mxu0 %v33
  %2166 = vmatpush.msra.mxu0 %v27
  %2167 = vmatpush.msra.mxu0 %v21
  %2168 = vmatmul.f32.gmra.mxu0 %v1939
  %v2169 = vpop.f32.mrf.mxu0
  %v2170 = vadd.f32 %v215, %v2169
  %2171 = vdwg.mxu0
  %2172 = vmatpush.msra.mxu0 %v207
  %2173 = vmatpush.msra.mxu0 %v201
  %2174 = vmatpush.msra.mxu0 %v195
  %2175 = vmatpush.msra.mxu0 %v189
  %2176 = vmatpush.msra.mxu0 %v183
  %2177 = vmatpush.msra.mxu0 %v177
  %2178 = vmatpush.msra.mxu0 %v171
  %2179 = vmatpush.msra.mxu0 %v165
  %2180 = vmatpush.msra.mxu0 %v159
  %2181 = vmatpush.msra.mxu0 %v153
  %2182 = vmatpush.msra.mxu0 %v147
  %2183 = vmatpush.msra.mxu0 %v141
  %2184 = vmatpush.msra.mxu0 %v135
  %2185 = vmatpush.msra.mxu0 %v129
  %2186 = vmatpush.msra.mxu0 %v123
  %2187 = vmatpush.msra.mxu0 %v117
  %2188 = vmatmul.f32.gmra.mxu0 %v1940
  %v2189 = vpop.f32.mrf.mxu0
  %v2190 = vadd.f32 %v2170, %v2189
  %2191 = vdwg.mxu0
  %v2192 = vadd.f32 %v1946, %v1990
  %v2193 = vadd.f32 %v1947, %v2030
  %v2194 = vxor.u32 %v2192, 2147483648
  %v2195 = vxor.u32 %v2193, 2147483648
  %v2196 = vmul.f32 %v2194, 1.442695
  %v2197 = vpow.pop %v2196
  %v2198 = vmul.f32 %v2195, 1.442695
  %v2199 = vpow.pop %v2198
  %v2200 = vadd.f32 %v2197, 1.0
  %v2201 = vadd.f32 %v2199, 1.0
  %v2202 = vrcp.pop %v2200
  %v2203 = vmul.f32 %v2200, %v2202
  %v2204 = vsub.f32 1.0, %v2203
  %v2205 = vmul.f32 %v2202, %v2204
  %v2206 = vadd.f32 %v2202, %v2205
  %vm2207 = vweird.f32 %v2200
  %vm2208 = vweird.f32 %v2202
  %vm2209 = vmor %vm2207, %vm2208
  %v2210 = vsel %vm2209, %v2202, %v2206
  %v2211 = vand.u32 2147483647, %v2200
  %vm2212 = vcmp.eq.f32.partialorder %v2211, 8.507059e+37
  %v2213 = vand.u32 %v2200, 2147483648
  %v2214 = vor.u32 1.1754944e-38, %v2213
  %v2215 = vsel %vm2212, %v2214, %v2210
  %v2216 = vmul.f32 1.0, %v2215
  %v2217 = vrcp.pop %v2201
  %v2218 = vmul.f32 %v2201, %v2217
  %v2219 = vsub.f32 1.0, %v2218
  %v2220 = vmul.f32 %v2217, %v2219
  %v2221 = vadd.f32 %v2217, %v2220
  %vm2222 = vweird.f32 %v2201
  %vm2223 = vweird.f32 %v2217
  %vm2224 = vmor %vm2222, %vm2223
  %v2225 = vsel %vm2224, %v2217, %v2221
  %v2226 = vand.u32 2147483647, %v2201
  %vm2227 = vcmp.eq.f32.partialorder %v2226, 8.507059e+37
  %v2228 = vand.u32 %v2201, 2147483648
  %v2229 = vor.u32 1.1754944e-38, %v2228
  %v2230 = vsel %vm2227, %v2229, %v2225
  %v2231 = vmul.f32 1.0, %v2230
  %v2232 = vadd.f32 %v1948, %v2070
  %v2233 = vadd.f32 %v1949, %v2110
  %v2234 = vxor.u32 %v2232, 2147483648
  %v2235 = vxor.u32 %v2233, 2147483648
  %v2236 = vmul.f32 %v2234, 1.442695
  %v2237 = vpow.pop %v2236
  %v2238 = vmul.f32 %v2235, 1.442695
  %v2239 = vpow.pop %v2238
  %v2240 = vadd.f32 %v2237, 1.0
  %v2241 = vadd.f32 %v2239, 1.0
  %v2242 = vrcp.pop %v2240
  %v2243 = vmul.f32 %v2240, %v2242
  %v2244 = vsub.f32 1.0, %v2243
  %v2245 = vmul.f32 %v2242, %v2244
  %v2246 = vadd.f32 %v2242, %v2245
  %vm2247 = vweird.f32 %v2240
  %vm2248 = vweird.f32 %v2242
  %vm2249 = vmor %vm2247, %vm2248
  %v2250 = vsel %vm2249, %v2242, %v2246
  %v2251 = vand.u32 2147483647, %v2240
  %vm2252 = vcmp.eq.f32.partialorder %v2251, 8.507059e+37
  %v2253 = vand.u32 %v2240, 2147483648
  %v2254 = vor.u32 1.1754944e-38, %v2253
  %v2255 = vsel %vm2252, %v2254, %v2250
  %v2256 = vmul.f32 1.0, %v2255
  %v2257 = vrcp.pop %v2241
  %v2258 = vmul.f32 %v2241, %v2257
  %v2259 = vsub.f32 1.0, %v2258
  %v2260 = vmul.f32 %v2257, %v2259
  %v2261 = vadd.f32 %v2257, %v2260
  %vm2262 = vweird.f32 %v2241
  %vm2263 = vweird.f32 %v2257
  %vm2264 = vmor %vm2262, %vm2263
  %v2265 = vsel %vm2264, %v2257, %v2261
  %v2266 = vand.u32 2147483647, %v2241
  %vm2267 = vcmp.eq.f32.partialorder %v2266, 8.507059e+37
  %v2268 = vand.u32 %v2241, 2147483648
  %v2269 = vor.u32 1.1754944e-38, %v2268
  %v2270 = vsel %vm2267, %v2269, %v2265
  %v2271 = vmul.f32 1.0, %v2270
  %v2272 = vmul.f32 %v2216, %v2150
  %v2273 = vmul.f32 %v2231, %v2190
  %v2274 = vadd.f32 %v1950, %v2272
  %v2275 = vadd.f32 %v1951, %v2273
  %v2276 = vtanh.pop %v2274
  %v2277 = vtanh.pop %v2275
  %v2278 = vsub.f32 1.0, %v2256
  %v2279 = vsub.f32 1.0, %v2271
  %v2280 = vmul.f32 %v2278, %v2276
  %v2281 = vmul.f32 %v2279, %v2277
  %v2282 = vmul.f32 %v2256, %v1939
  %v2283 = vmul.f32 %v2271, %v1940
  %v2284 = vadd.f32 %v2280, %v2282
  %v2285 = vadd.f32 %v2281, %v2283
  %s2286 = scalar_lea.vmem %s3, 40
  %2287 = vst [vmem:[%s2286] sm:$0xff] %v2284
  %s2288 = scalar_lea.vmem %s4, 16
  %2289 = vst [vmem:[%s2288] sm:$0xff] %v2285
  %s2290 = scalar_lea.vmem %s0, 288
  %v2291 = vld [vmem:[%s2290] sm:$0xff]
  %v2292 = vld [vmem:[%s2290 + $0x8] sm:$0xff]
  %v2293 = vld [vmem:[%s2290 + $0x10] sm:$0xff]
  %v2294 = vld [vmem:[%s2290 + $0x18] sm:$0xff]
  %v2295 = vld [vmem:[%s2290 + $0x20] sm:$0xff]
  %v2296 = vld [vmem:[%s2290 + $0x28] sm:$0xff]
  %2297 = vmatpush.msra.mxu0 %v106
  %2298 = vmatpush.msra.mxu0 %v100
  %2299 = vmatpush.msra.mxu0 %v94
  %2300 = vmatpush.msra.mxu0 %v88
  %2301 = vmatpush.msra.mxu0 %v82
  %2302 = vmatpush.msra.mxu0 %v76
  %2303 = vmatpush.msra.mxu0 %v70
  %2304 = vmatpush.msra.mxu0 %v64
  %2305 = vmatpush.msra.mxu0 %v58
  %2306 = vmatpush.msra.mxu0 %v52
  %2307 = vmatpush.msra.mxu0 %v46
  %2308 = vmatpush.msra.mxu0 %v40
  %2309 = vmatpush.msra.mxu0 %v34
  %2310 = vmatpush.msra.mxu0 %v28
  %2311 = vmatpush.msra.mxu0 %v22
  %2312 = vmatpush.msra.mxu0 %v16
  %2313 = vmatmul.f32.gmra.mxu0 %v2284
  %v2314 = vpop.f32.mrf.mxu0
  %v2315 = vadd.f32 %v210, %v2314
  %2316 = vdwg.mxu0
  %2317 = vmatpush.msra.mxu0 %v202
  %2318 = vmatpush.msra.mxu0 %v196
  %2319 = vmatpush.msra.mxu0 %v190
  %2320 = vmatpush.msra.mxu0 %v184
  %2321 = vmatpush.msra.mxu0 %v178
  %2322 = vmatpush.msra.mxu0 %v172
  %2323 = vmatpush.msra.mxu0 %v166
  %2324 = vmatpush.msra.mxu0 %v160
  %2325 = vmatpush.msra.mxu0 %v154
  %2326 = vmatpush.msra.mxu0 %v148
  %2327 = vmatpush.msra.mxu0 %v142
  %2328 = vmatpush.msra.mxu0 %v136
  %2329 = vmatpush.msra.mxu0 %v130
  %2330 = vmatpush.msra.mxu0 %v124
  %2331 = vmatpush.msra.mxu0 %v118
  %2332 = vmatpush.msra.mxu0 %v112
  %2333 = vmatmul.f32.gmra.mxu0 %v2285
  %v2334 = vpop.f32.mrf.mxu0
  %v2335 = vadd.f32 %v2315, %v2334
  %2336 = vdwg.mxu0
  %2337 = vmatpush.msra.mxu0 %v107
  %2338 = vmatpush.msra.mxu0 %v101
  %2339 = vmatpush.msra.mxu0 %v95
  %2340 = vmatpush.msra.mxu0 %v89
  %2341 = vmatpush.msra.mxu0 %v83
  %2342 = vmatpush.msra.mxu0 %v77
  %2343 = vmatpush.msra.mxu0 %v71
  %2344 = vmatpush.msra.mxu0 %v65
  %2345 = vmatpush.msra.mxu0 %v59
  %2346 = vmatpush.msra.mxu0 %v53
  %2347 = vmatpush.msra.mxu0 %v47
  %2348 = vmatpush.msra.mxu0 %v41
  %2349 = vmatpush.msra.mxu0 %v35
  %2350 = vmatpush.msra.mxu0 %v29
  %2351 = vmatpush.msra.mxu0 %v23
  %2352 = vmatpush.msra.mxu0 %v17
  %2353 = vmatmul.f32.gmra.mxu0 %v2284
  %v2354 = vpop.f32.mrf.mxu0
  %v2355 = vadd.f32 %v211, %v2354
  %2356 = vdwg.mxu0
  %2357 = vmatpush.msra.mxu0 %v203
  %2358 = vmatpush.msra.mxu0 %v197
  %2359 = vmatpush.msra.mxu0 %v191
  %2360 = vmatpush.msra.mxu0 %v185
  %2361 = vmatpush.msra.mxu0 %v179
  %2362 = vmatpush.msra.mxu0 %v173
  %2363 = vmatpush.msra.mxu0 %v167
  %2364 = vmatpush.msra.mxu0 %v161
  %2365 = vmatpush.msra.mxu0 %v155
  %2366 = vmatpush.msra.mxu0 %v149
  %2367 = vmatpush.msra.mxu0 %v143
  %2368 = vmatpush.msra.mxu0 %v137
  %2369 = vmatpush.msra.mxu0 %v131
  %2370 = vmatpush.msra.mxu0 %v125
  %2371 = vmatpush.msra.mxu0 %v119
  %2372 = vmatpush.msra.mxu0 %v113
  %2373 = vmatmul.f32.gmra.mxu0 %v2285
  %v2374 = vpop.f32.mrf.mxu0
  %v2375 = vadd.f32 %v2355, %v2374
  %2376 = vdwg.mxu0
  %2377 = vmatpush.msra.mxu0 %v108
  %2378 = vmatpush.msra.mxu0 %v102
  %2379 = vmatpush.msra.mxu0 %v96
  %2380 = vmatpush.msra.mxu0 %v90
  %2381 = vmatpush.msra.mxu0 %v84
  %2382 = vmatpush.msra.mxu0 %v78
  %2383 = vmatpush.msra.mxu0 %v72
  %2384 = vmatpush.msra.mxu0 %v66
  %2385 = vmatpush.msra.mxu0 %v60
  %2386 = vmatpush.msra.mxu0 %v54
  %2387 = vmatpush.msra.mxu0 %v48
  %2388 = vmatpush.msra.mxu0 %v42
  %2389 = vmatpush.msra.mxu0 %v36
  %2390 = vmatpush.msra.mxu0 %v30
  %2391 = vmatpush.msra.mxu0 %v24
  %2392 = vmatpush.msra.mxu0 %v18
  %2393 = vmatmul.f32.gmra.mxu0 %v2284
  %v2394 = vpop.f32.mrf.mxu0
  %v2395 = vadd.f32 %v212, %v2394
  %2396 = vdwg.mxu0
  %2397 = vmatpush.msra.mxu0 %v204
  %2398 = vmatpush.msra.mxu0 %v198
  %2399 = vmatpush.msra.mxu0 %v192
  %2400 = vmatpush.msra.mxu0 %v186
  %2401 = vmatpush.msra.mxu0 %v180
  %2402 = vmatpush.msra.mxu0 %v174
  %2403 = vmatpush.msra.mxu0 %v168
  %2404 = vmatpush.msra.mxu0 %v162
  %2405 = vmatpush.msra.mxu0 %v156
  %2406 = vmatpush.msra.mxu0 %v150
  %2407 = vmatpush.msra.mxu0 %v144
  %2408 = vmatpush.msra.mxu0 %v138
  %2409 = vmatpush.msra.mxu0 %v132
  %2410 = vmatpush.msra.mxu0 %v126
  %2411 = vmatpush.msra.mxu0 %v120
  %2412 = vmatpush.msra.mxu0 %v114
  %2413 = vmatmul.f32.gmra.mxu0 %v2285
  %v2414 = vpop.f32.mrf.mxu0
  %v2415 = vadd.f32 %v2395, %v2414
  %2416 = vdwg.mxu0
  %2417 = vmatpush.msra.mxu0 %v109
  %2418 = vmatpush.msra.mxu0 %v103
  %2419 = vmatpush.msra.mxu0 %v97
  %2420 = vmatpush.msra.mxu0 %v91
  %2421 = vmatpush.msra.mxu0 %v85
  %2422 = vmatpush.msra.mxu0 %v79
  %2423 = vmatpush.msra.mxu0 %v73
  %2424 = vmatpush.msra.mxu0 %v67
  %2425 = vmatpush.msra.mxu0 %v61
  %2426 = vmatpush.msra.mxu0 %v55
  %2427 = vmatpush.msra.mxu0 %v49
  %2428 = vmatpush.msra.mxu0 %v43
  %2429 = vmatpush.msra.mxu0 %v37
  %2430 = vmatpush.msra.mxu0 %v31
  %2431 = vmatpush.msra.mxu0 %v25
  %2432 = vmatpush.msra.mxu0 %v19
  %2433 = vmatmul.f32.gmra.mxu0 %v2284
  %v2434 = vpop.f32.mrf.mxu0
  %v2435 = vadd.f32 %v213, %v2434
  %2436 = vdwg.mxu0
  %2437 = vmatpush.msra.mxu0 %v205
  %2438 = vmatpush.msra.mxu0 %v199
  %2439 = vmatpush.msra.mxu0 %v193
  %2440 = vmatpush.msra.mxu0 %v187
  %2441 = vmatpush.msra.mxu0 %v181
  %2442 = vmatpush.msra.mxu0 %v175
  %2443 = vmatpush.msra.mxu0 %v169
  %2444 = vmatpush.msra.mxu0 %v163
  %2445 = vmatpush.msra.mxu0 %v157
  %2446 = vmatpush.msra.mxu0 %v151
  %2447 = vmatpush.msra.mxu0 %v145
  %2448 = vmatpush.msra.mxu0 %v139
  %2449 = vmatpush.msra.mxu0 %v133
  %2450 = vmatpush.msra.mxu0 %v127
  %2451 = vmatpush.msra.mxu0 %v121
  %2452 = vmatpush.msra.mxu0 %v115
  %2453 = vmatmul.f32.gmra.mxu0 %v2285
  %v2454 = vpop.f32.mrf.mxu0
  %v2455 = vadd.f32 %v2435, %v2454
  %2456 = vdwg.mxu0
  %2457 = vmatpush.msra.mxu0 %v110
  %2458 = vmatpush.msra.mxu0 %v104
  %2459 = vmatpush.msra.mxu0 %v98
  %2460 = vmatpush.msra.mxu0 %v92
  %2461 = vmatpush.msra.mxu0 %v86
  %2462 = vmatpush.msra.mxu0 %v80
  %2463 = vmatpush.msra.mxu0 %v74
  %2464 = vmatpush.msra.mxu0 %v68
  %2465 = vmatpush.msra.mxu0 %v62
  %2466 = vmatpush.msra.mxu0 %v56
  %2467 = vmatpush.msra.mxu0 %v50
  %2468 = vmatpush.msra.mxu0 %v44
  %2469 = vmatpush.msra.mxu0 %v38
  %2470 = vmatpush.msra.mxu0 %v32
  %2471 = vmatpush.msra.mxu0 %v26
  %2472 = vmatpush.msra.mxu0 %v20
  %2473 = vmatmul.f32.gmra.mxu0 %v2284
  %v2474 = vpop.f32.mrf.mxu0
  %v2475 = vadd.f32 %v214, %v2474
  %2476 = vdwg.mxu0
  %2477 = vmatpush.msra.mxu0 %v206
  %2478 = vmatpush.msra.mxu0 %v200
  %2479 = vmatpush.msra.mxu0 %v194
  %2480 = vmatpush.msra.mxu0 %v188
  %2481 = vmatpush.msra.mxu0 %v182
  %2482 = vmatpush.msra.mxu0 %v176
  %2483 = vmatpush.msra.mxu0 %v170
  %2484 = vmatpush.msra.mxu0 %v164
  %2485 = vmatpush.msra.mxu0 %v158
  %2486 = vmatpush.msra.mxu0 %v152
  %2487 = vmatpush.msra.mxu0 %v146
  %2488 = vmatpush.msra.mxu0 %v140
  %2489 = vmatpush.msra.mxu0 %v134
  %2490 = vmatpush.msra.mxu0 %v128
  %2491 = vmatpush.msra.mxu0 %v122
  %2492 = vmatpush.msra.mxu0 %v116
  %2493 = vmatmul.f32.gmra.mxu0 %v2285
  %v2494 = vpop.f32.mrf.mxu0
  %v2495 = vadd.f32 %v2475, %v2494
  %2496 = vdwg.mxu0
  %2497 = vmatpush.msra.mxu0 %v111
  %2498 = vmatpush.msra.mxu0 %v105
  %2499 = vmatpush.msra.mxu0 %v99
  %2500 = vmatpush.msra.mxu0 %v93
  %2501 = vmatpush.msra.mxu0 %v87
  %2502 = vmatpush.msra.mxu0 %v81
  %2503 = vmatpush.msra.mxu0 %v75
  %2504 = vmatpush.msra.mxu0 %v69
  %2505 = vmatpush.msra.mxu0 %v63
  %2506 = vmatpush.msra.mxu0 %v57
  %2507 = vmatpush.msra.mxu0 %v51
  %2508 = vmatpush.msra.mxu0 %v45
  %2509 = vmatpush.msra.mxu0 %v39
  %2510 = vmatpush.msra.mxu0 %v33
  %2511 = vmatpush.msra.mxu0 %v27
  %2512 = vmatpush.msra.mxu0 %v21
  %2513 = vmatmul.f32.gmra.mxu0 %v2284
  %v2514 = vpop.f32.mrf.mxu0
  %v2515 = vadd.f32 %v215, %v2514
  %2516 = vdwg.mxu0
  %2517 = vmatpush.msra.mxu0 %v207
  %2518 = vmatpush.msra.mxu0 %v201
  %2519 = vmatpush.msra.mxu0 %v195
  %2520 = vmatpush.msra.mxu0 %v189
  %2521 = vmatpush.msra.mxu0 %v183
  %2522 = vmatpush.msra.mxu0 %v177
  %2523 = vmatpush.msra.mxu0 %v171
  %2524 = vmatpush.msra.mxu0 %v165
  %2525 = vmatpush.msra.mxu0 %v159
  %2526 = vmatpush.msra.mxu0 %v153
  %2527 = vmatpush.msra.mxu0 %v147
  %2528 = vmatpush.msra.mxu0 %v141
  %2529 = vmatpush.msra.mxu0 %v135
  %2530 = vmatpush.msra.mxu0 %v129
  %2531 = vmatpush.msra.mxu0 %v123
  %2532 = vmatpush.msra.mxu0 %v117
  %2533 = vmatmul.f32.gmra.mxu0 %v2285
  %v2534 = vpop.f32.mrf.mxu0
  %v2535 = vadd.f32 %v2515, %v2534
  %2536 = vdwg.mxu0
  %v2537 = vadd.f32 %v2291, %v2335
  %v2538 = vadd.f32 %v2292, %v2375
  %v2539 = vxor.u32 %v2537, 2147483648
  %v2540 = vxor.u32 %v2538, 2147483648
  %v2541 = vmul.f32 %v2539, 1.442695
  %v2542 = vpow.pop %v2541
  %v2543 = vmul.f32 %v2540, 1.442695
  %v2544 = vpow.pop %v2543
  %v2545 = vadd.f32 %v2542, 1.0
  %v2546 = vadd.f32 %v2544, 1.0
  %v2547 = vrcp.pop %v2545
  %v2548 = vmul.f32 %v2545, %v2547
  %v2549 = vsub.f32 1.0, %v2548
  %v2550 = vmul.f32 %v2547, %v2549
  %v2551 = vadd.f32 %v2547, %v2550
  %vm2552 = vweird.f32 %v2545
  %vm2553 = vweird.f32 %v2547
  %vm2554 = vmor %vm2552, %vm2553
  %v2555 = vsel %vm2554, %v2547, %v2551
  %v2556 = vand.u32 2147483647, %v2545
  %vm2557 = vcmp.eq.f32.partialorder %v2556, 8.507059e+37
  %v2558 = vand.u32 %v2545, 2147483648
  %v2559 = vor.u32 1.1754944e-38, %v2558
  %v2560 = vsel %vm2557, %v2559, %v2555
  %v2561 = vmul.f32 1.0, %v2560
  %v2562 = vrcp.pop %v2546
  %v2563 = vmul.f32 %v2546, %v2562
  %v2564 = vsub.f32 1.0, %v2563
  %v2565 = vmul.f32 %v2562, %v2564
  %v2566 = vadd.f32 %v2562, %v2565
  %vm2567 = vweird.f32 %v2546
  %vm2568 = vweird.f32 %v2562
  %vm2569 = vmor %vm2567, %vm2568
  %v2570 = vsel %vm2569, %v2562, %v2566
  %v2571 = vand.u32 2147483647, %v2546
  %vm2572 = vcmp.eq.f32.partialorder %v2571, 8.507059e+37
  %v2573 = vand.u32 %v2546, 2147483648
  %v2574 = vor.u32 1.1754944e-38, %v2573
  %v2575 = vsel %vm2572, %v2574, %v2570
  %v2576 = vmul.f32 1.0, %v2575
  %v2577 = vadd.f32 %v2293, %v2415
  %v2578 = vadd.f32 %v2294, %v2455
  %v2579 = vxor.u32 %v2577, 2147483648
  %v2580 = vxor.u32 %v2578, 2147483648
  %v2581 = vmul.f32 %v2579, 1.442695
  %v2582 = vpow.pop %v2581
  %v2583 = vmul.f32 %v2580, 1.442695
  %v2584 = vpow.pop %v2583
  %v2585 = vadd.f32 %v2582, 1.0
  %v2586 = vadd.f32 %v2584, 1.0
  %v2587 = vrcp.pop %v2585
  %v2588 = vmul.f32 %v2585, %v2587
  %v2589 = vsub.f32 1.0, %v2588
  %v2590 = vmul.f32 %v2587, %v2589
  %v2591 = vadd.f32 %v2587, %v2590
  %vm2592 = vweird.f32 %v2585
  %vm2593 = vweird.f32 %v2587
  %vm2594 = vmor %vm2592, %vm2593
  %v2595 = vsel %vm2594, %v2587, %v2591
  %v2596 = vand.u32 2147483647, %v2585
  %vm2597 = vcmp.eq.f32.partialorder %v2596, 8.507059e+37
  %v2598 = vand.u32 %v2585, 2147483648
  %v2599 = vor.u32 1.1754944e-38, %v2598
  %v2600 = vsel %vm2597, %v2599, %v2595
  %v2601 = vmul.f32 1.0, %v2600
  %v2602 = vrcp.pop %v2586
  %v2603 = vmul.f32 %v2586, %v2602
  %v2604 = vsub.f32 1.0, %v2603
  %v2605 = vmul.f32 %v2602, %v2604
  %v2606 = vadd.f32 %v2602, %v2605
  %vm2607 = vweird.f32 %v2586
  %vm2608 = vweird.f32 %v2602
  %vm2609 = vmor %vm2607, %vm2608
  %v2610 = vsel %vm2609, %v2602, %v2606
  %v2611 = vand.u32 2147483647, %v2586
  %vm2612 = vcmp.eq.f32.partialorder %v2611, 8.507059e+37
  %v2613 = vand.u32 %v2586, 2147483648
  %v2614 = vor.u32 1.1754944e-38, %v2613
  %v2615 = vsel %vm2612, %v2614, %v2610
  %v2616 = vmul.f32 1.0, %v2615
  %v2617 = vmul.f32 %v2561, %v2495
  %v2618 = vmul.f32 %v2576, %v2535
  %v2619 = vadd.f32 %v2295, %v2617
  %v2620 = vadd.f32 %v2296, %v2618
  %v2621 = vtanh.pop %v2619
  %v2622 = vtanh.pop %v2620
  %v2623 = vsub.f32 1.0, %v2601
  %v2624 = vsub.f32 1.0, %v2616
  %v2625 = vmul.f32 %v2623, %v2621
  %v2626 = vmul.f32 %v2624, %v2622
  %v2627 = vmul.f32 %v2601, %v2284
  %v2628 = vmul.f32 %v2616, %v2285
  %v2629 = vadd.f32 %v2625, %v2627
  %v2630 = vadd.f32 %v2626, %v2628
  %s2631 = scalar_lea.vmem %s3, 48
  %2632 = vst [vmem:[%s2631] sm:$0xff] %v2629
  %s2633 = scalar_lea.vmem %s4, 8
  %2634 = vst [vmem:[%s2633] sm:$0xff] %v2630
  %s2635 = scalar_lea.vmem %s0, 336
  %v2636 = vld [vmem:[%s2635] sm:$0xff]
  %v2637 = vld [vmem:[%s2635 + $0x8] sm:$0xff]
  %v2638 = vld [vmem:[%s2635 + $0x10] sm:$0xff]
  %v2639 = vld [vmem:[%s2635 + $0x18] sm:$0xff]
  %v2640 = vld [vmem:[%s2635 + $0x20] sm:$0xff]
  %v2641 = vld [vmem:[%s2635 + $0x28] sm:$0xff]
  %2642 = vmatpush.msra.mxu0 %v106
  %2643 = vmatpush.msra.mxu0 %v100
  %2644 = vmatpush.msra.mxu0 %v94
  %2645 = vmatpush.msra.mxu0 %v88
  %2646 = vmatpush.msra.mxu0 %v82
  %2647 = vmatpush.msra.mxu0 %v76
  %2648 = vmatpush.msra.mxu0 %v70
  %2649 = vmatpush.msra.mxu0 %v64
  %2650 = vmatpush.msra.mxu0 %v58
  %2651 = vmatpush.msra.mxu0 %v52
  %2652 = vmatpush.msra.mxu0 %v46
  %2653 = vmatpush.msra.mxu0 %v40
  %2654 = vmatpush.msra.mxu0 %v34
  %2655 = vmatpush.msra.mxu0 %v28
  %2656 = vmatpush.msra.mxu0 %v22
  %2657 = vmatpush.msra.mxu0 %v16
  %2658 = vmatmul.f32.gmra.mxu0 %v2629
  %v2659 = vpop.f32.mrf.mxu0
  %v2660 = vadd.f32 %v210, %v2659
  %2661 = vdwg.mxu0
  %2662 = vmatpush.msra.mxu0 %v202
  %2663 = vmatpush.msra.mxu0 %v196
  %2664 = vmatpush.msra.mxu0 %v190
  %2665 = vmatpush.msra.mxu0 %v184
  %2666 = vmatpush.msra.mxu0 %v178
  %2667 = vmatpush.msra.mxu0 %v172
  %2668 = vmatpush.msra.mxu0 %v166
  %2669 = vmatpush.msra.mxu0 %v160
  %2670 = vmatpush.msra.mxu0 %v154
  %2671 = vmatpush.msra.mxu0 %v148
  %2672 = vmatpush.msra.mxu0 %v142
  %2673 = vmatpush.msra.mxu0 %v136
  %2674 = vmatpush.msra.mxu0 %v130
  %2675 = vmatpush.msra.mxu0 %v124
  %2676 = vmatpush.msra.mxu0 %v118
  %2677 = vmatpush.msra.mxu0 %v112
  %2678 = vmatmul.f32.gmra.mxu0 %v2630
  %v2679 = vpop.f32.mrf.mxu0
  %v2680 = vadd.f32 %v2660, %v2679
  %2681 = vdwg.mxu0
  %2682 = vmatpush.msra.mxu0 %v107
  %2683 = vmatpush.msra.mxu0 %v101
  %2684 = vmatpush.msra.mxu0 %v95
  %2685 = vmatpush.msra.mxu0 %v89
  %2686 = vmatpush.msra.mxu0 %v83
  %2687 = vmatpush.msra.mxu0 %v77
  %2688 = vmatpush.msra.mxu0 %v71
  %2689 = vmatpush.msra.mxu0 %v65
  %2690 = vmatpush.msra.mxu0 %v59
  %2691 = vmatpush.msra.mxu0 %v53
  %2692 = vmatpush.msra.mxu0 %v47
  %2693 = vmatpush.msra.mxu0 %v41
  %2694 = vmatpush.msra.mxu0 %v35
  %2695 = vmatpush.msra.mxu0 %v29
  %2696 = vmatpush.msra.mxu0 %v23
  %2697 = vmatpush.msra.mxu0 %v17
  %2698 = vmatmul.f32.gmra.mxu0 %v2629
  %v2699 = vpop.f32.mrf.mxu0
  %v2700 = vadd.f32 %v211, %v2699
  %2701 = vdwg.mxu0
  %2702 = vmatpush.msra.mxu0 %v203
  %2703 = vmatpush.msra.mxu0 %v197
  %2704 = vmatpush.msra.mxu0 %v191
  %2705 = vmatpush.msra.mxu0 %v185
  %2706 = vmatpush.msra.mxu0 %v179
  %2707 = vmatpush.msra.mxu0 %v173
  %2708 = vmatpush.msra.mxu0 %v167
  %2709 = vmatpush.msra.mxu0 %v161
  %2710 = vmatpush.msra.mxu0 %v155
  %2711 = vmatpush.msra.mxu0 %v149
  %2712 = vmatpush.msra.mxu0 %v143
  %2713 = vmatpush.msra.mxu0 %v137
  %2714 = vmatpush.msra.mxu0 %v131
  %2715 = vmatpush.msra.mxu0 %v125
  %2716 = vmatpush.msra.mxu0 %v119
  %2717 = vmatpush.msra.mxu0 %v113
  %2718 = vmatmul.f32.gmra.mxu0 %v2630
  %v2719 = vpop.f32.mrf.mxu0
  %v2720 = vadd.f32 %v2700, %v2719
  %2721 = vdwg.mxu0
  %2722 = vmatpush.msra.mxu0 %v108
  %2723 = vmatpush.msra.mxu0 %v102
  %2724 = vmatpush.msra.mxu0 %v96
  %2725 = vmatpush.msra.mxu0 %v90
  %2726 = vmatpush.msra.mxu0 %v84
  %2727 = vmatpush.msra.mxu0 %v78
  %2728 = vmatpush.msra.mxu0 %v72
  %2729 = vmatpush.msra.mxu0 %v66
  %2730 = vmatpush.msra.mxu0 %v60
  %2731 = vmatpush.msra.mxu0 %v54
  %2732 = vmatpush.msra.mxu0 %v48
  %2733 = vmatpush.msra.mxu0 %v42
  %2734 = vmatpush.msra.mxu0 %v36
  %2735 = vmatpush.msra.mxu0 %v30
  %2736 = vmatpush.msra.mxu0 %v24
  %2737 = vmatpush.msra.mxu0 %v18
  %2738 = vmatmul.f32.gmra.mxu0 %v2629
  %v2739 = vpop.f32.mrf.mxu0
  %v2740 = vadd.f32 %v212, %v2739
  %2741 = vdwg.mxu0
  %2742 = vmatpush.msra.mxu0 %v204
  %2743 = vmatpush.msra.mxu0 %v198
  %2744 = vmatpush.msra.mxu0 %v192
  %2745 = vmatpush.msra.mxu0 %v186
  %2746 = vmatpush.msra.mxu0 %v180
  %2747 = vmatpush.msra.mxu0 %v174
  %2748 = vmatpush.msra.mxu0 %v168
  %2749 = vmatpush.msra.mxu0 %v162
  %2750 = vmatpush.msra.mxu0 %v156
  %2751 = vmatpush.msra.mxu0 %v150
  %2752 = vmatpush.msra.mxu0 %v144
  %2753 = vmatpush.msra.mxu0 %v138
  %2754 = vmatpush.msra.mxu0 %v132
  %2755 = vmatpush.msra.mxu0 %v126
  %2756 = vmatpush.msra.mxu0 %v120
  %2757 = vmatpush.msra.mxu0 %v114
  %2758 = vmatmul.f32.gmra.mxu0 %v2630
  %v2759 = vpop.f32.mrf.mxu0
  %v2760 = vadd.f32 %v2740, %v2759
  %2761 = vdwg.mxu0
  %2762 = vmatpush.msra.mxu0 %v109
  %2763 = vmatpush.msra.mxu0 %v103
  %2764 = vmatpush.msra.mxu0 %v97
  %2765 = vmatpush.msra.mxu0 %v91
  %2766 = vmatpush.msra.mxu0 %v85
  %2767 = vmatpush.msra.mxu0 %v79
  %2768 = vmatpush.msra.mxu0 %v73
  %2769 = vmatpush.msra.mxu0 %v67
  %2770 = vmatpush.msra.mxu0 %v61
  %2771 = vmatpush.msra.mxu0 %v55
  %2772 = vmatpush.msra.mxu0 %v49
  %2773 = vmatpush.msra.mxu0 %v43
  %2774 = vmatpush.msra.mxu0 %v37
  %2775 = vmatpush.msra.mxu0 %v31
  %2776 = vmatpush.msra.mxu0 %v25
  %2777 = vmatpush.msra.mxu0 %v19
  %2778 = vmatmul.f32.gmra.mxu0 %v2629
  %v2779 = vpop.f32.mrf.mxu0
  %v2780 = vadd.f32 %v213, %v2779
  %2781 = vdwg.mxu0
  %2782 = vmatpush.msra.mxu0 %v205
  %2783 = vmatpush.msra.mxu0 %v199
  %2784 = vmatpush.msra.mxu0 %v193
  %2785 = vmatpush.msra.mxu0 %v187
  %2786 = vmatpush.msra.mxu0 %v181
  %2787 = vmatpush.msra.mxu0 %v175
  %2788 = vmatpush.msra.mxu0 %v169
  %2789 = vmatpush.msra.mxu0 %v163
  %2790 = vmatpush.msra.mxu0 %v157
  %2791 = vmatpush.msra.mxu0 %v151
  %2792 = vmatpush.msra.mxu0 %v145
  %2793 = vmatpush.msra.mxu0 %v139
  %2794 = vmatpush.msra.mxu0 %v133
  %2795 = vmatpush.msra.mxu0 %v127
  %2796 = vmatpush.msra.mxu0 %v121
  %2797 = vmatpush.msra.mxu0 %v115
  %2798 = vmatmul.f32.gmra.mxu0 %v2630
  %v2799 = vpop.f32.mrf.mxu0
  %v2800 = vadd.f32 %v2780, %v2799
  %2801 = vdwg.mxu0
  %2802 = vmatpush.msra.mxu0 %v110
  %2803 = vmatpush.msra.mxu0 %v104
  %2804 = vmatpush.msra.mxu0 %v98
  %2805 = vmatpush.msra.mxu0 %v92
  %2806 = vmatpush.msra.mxu0 %v86
  %2807 = vmatpush.msra.mxu0 %v80
  %2808 = vmatpush.msra.mxu0 %v74
  %2809 = vmatpush.msra.mxu0 %v68
  %2810 = vmatpush.msra.mxu0 %v62
  %2811 = vmatpush.msra.mxu0 %v56
  %2812 = vmatpush.msra.mxu0 %v50
  %2813 = vmatpush.msra.mxu0 %v44
  %2814 = vmatpush.msra.mxu0 %v38
  %2815 = vmatpush.msra.mxu0 %v32
  %2816 = vmatpush.msra.mxu0 %v26
  %2817 = vmatpush.msra.mxu0 %v20
  %2818 = vmatmul.f32.gmra.mxu0 %v2629
  %v2819 = vpop.f32.mrf.mxu0
  %v2820 = vadd.f32 %v214, %v2819
  %2821 = vdwg.mxu0
  %2822 = vmatpush.msra.mxu0 %v206
  %2823 = vmatpush.msra.mxu0 %v200
  %2824 = vmatpush.msra.mxu0 %v194
  %2825 = vmatpush.msra.mxu0 %v188
  %2826 = vmatpush.msra.mxu0 %v182
  %2827 = vmatpush.msra.mxu0 %v176
  %2828 = vmatpush.msra.mxu0 %v170
  %2829 = vmatpush.msra.mxu0 %v164
  %2830 = vmatpush.msra.mxu0 %v158
  %2831 = vmatpush.msra.mxu0 %v152
  %2832 = vmatpush.msra.mxu0 %v146
  %2833 = vmatpush.msra.mxu0 %v140
  %2834 = vmatpush.msra.mxu0 %v134
  %2835 = vmatpush.msra.mxu0 %v128
  %2836 = vmatpush.msra.mxu0 %v122
  %2837 = vmatpush.msra.mxu0 %v116
  %2838 = vmatmul.f32.gmra.mxu0 %v2630
  %v2839 = vpop.f32.mrf.mxu0
  %v2840 = vadd.f32 %v2820, %v2839
  %2841 = vdwg.mxu0
  %2842 = vmatpush.msra.mxu0 %v111
  %2843 = vmatpush.msra.mxu0 %v105
  %2844 = vmatpush.msra.mxu0 %v99
  %2845 = vmatpush.msra.mxu0 %v93
  %2846 = vmatpush.msra.mxu0 %v87
  %2847 = vmatpush.msra.mxu0 %v81
  %2848 = vmatpush.msra.mxu0 %v75
  %2849 = vmatpush.msra.mxu0 %v69
  %2850 = vmatpush.msra.mxu0 %v63
  %2851 = vmatpush.msra.mxu0 %v57
  %2852 = vmatpush.msra.mxu0 %v51
  %2853 = vmatpush.msra.mxu0 %v45
  %2854 = vmatpush.msra.mxu0 %v39
  %2855 = vmatpush.msra.mxu0 %v33
  %2856 = vmatpush.msra.mxu0 %v27
  %2857 = vmatpush.msra.mxu0 %v21
  %2858 = vmatmul.f32.gmra.mxu0 %v2629
  %v2859 = vpop.f32.mrf.mxu0
  %v2860 = vadd.f32 %v215, %v2859
  %2861 = vdwg.mxu0
  %2862 = vmatpush.msra.mxu0 %v207
  %2863 = vmatpush.msra.mxu0 %v201
  %2864 = vmatpush.msra.mxu0 %v195
  %2865 = vmatpush.msra.mxu0 %v189
  %2866 = vmatpush.msra.mxu0 %v183
  %2867 = vmatpush.msra.mxu0 %v177
  %2868 = vmatpush.msra.mxu0 %v171
  %2869 = vmatpush.msra.mxu0 %v165
  %2870 = vmatpush.msra.mxu0 %v159
  %2871 = vmatpush.msra.mxu0 %v153
  %2872 = vmatpush.msra.mxu0 %v147
  %2873 = vmatpush.msra.mxu0 %v141
  %2874 = vmatpush.msra.mxu0 %v135
  %2875 = vmatpush.msra.mxu0 %v129
  %2876 = vmatpush.msra.mxu0 %v123
  %2877 = vmatpush.msra.mxu0 %v117
  %2878 = vmatmul.f32.gmra.mxu0 %v2630
  %v2879 = vpop.f32.mrf.mxu0
  %v2880 = vadd.f32 %v2860, %v2879
  %2881 = vdwg.mxu0
  %v2882 = vadd.f32 %v2636, %v2680
  %v2883 = vadd.f32 %v2637, %v2720
  %v2884 = vxor.u32 %v2882, 2147483648
  %v2885 = vxor.u32 %v2883, 2147483648
  %v2886 = vmul.f32 %v2884, 1.442695
  %v2887 = vpow.pop %v2886
  %v2888 = vmul.f32 %v2885, 1.442695
  %v2889 = vpow.pop %v2888
  %v2890 = vadd.f32 %v2887, 1.0
  %v2891 = vadd.f32 %v2889, 1.0
  %v2892 = vrcp.pop %v2890
  %v2893 = vmul.f32 %v2890, %v2892
  %v2894 = vsub.f32 1.0, %v2893
  %v2895 = vmul.f32 %v2892, %v2894
  %v2896 = vadd.f32 %v2892, %v2895
  %vm2897 = vweird.f32 %v2890
  %vm2898 = vweird.f32 %v2892
  %vm2899 = vmor %vm2897, %vm2898
  %v2900 = vsel %vm2899, %v2892, %v2896
  %v2901 = vand.u32 2147483647, %v2890
  %vm2902 = vcmp.eq.f32.partialorder %v2901, 8.507059e+37
  %v2903 = vand.u32 %v2890, 2147483648
  %v2904 = vor.u32 1.1754944e-38, %v2903
  %v2905 = vsel %vm2902, %v2904, %v2900
  %v2906 = vmul.f32 1.0, %v2905
  %v2907 = vrcp.pop %v2891
  %v2908 = vmul.f32 %v2891, %v2907
  %v2909 = vsub.f32 1.0, %v2908
  %v2910 = vmul.f32 %v2907, %v2909
  %v2911 = vadd.f32 %v2907, %v2910
  %vm2912 = vweird.f32 %v2891
  %vm2913 = vweird.f32 %v2907
  %vm2914 = vmor %vm2912, %vm2913
  %v2915 = vsel %vm2914, %v2907, %v2911
  %v2916 = vand.u32 2147483647, %v2891
  %vm2917 = vcmp.eq.f32.partialorder %v2916, 8.507059e+37
  %v2918 = vand.u32 %v2891, 2147483648
  %v2919 = vor.u32 1.1754944e-38, %v2918
  %v2920 = vsel %vm2917, %v2919, %v2915
  %v2921 = vmul.f32 1.0, %v2920
  %v2922 = vadd.f32 %v2638, %v2760
  %v2923 = vadd.f32 %v2639, %v2800
  %v2924 = vxor.u32 %v2922, 2147483648
  %v2925 = vxor.u32 %v2923, 2147483648
  %v2926 = vmul.f32 %v2924, 1.442695
  %v2927 = vpow.pop %v2926
  %v2928 = vmul.f32 %v2925, 1.442695
  %v2929 = vpow.pop %v2928
  %v2930 = vadd.f32 %v2927, 1.0
  %v2931 = vadd.f32 %v2929, 1.0
  %v2932 = vrcp.pop %v2930
  %v2933 = vmul.f32 %v2930, %v2932
  %v2934 = vsub.f32 1.0, %v2933
  %v2935 = vmul.f32 %v2932, %v2934
  %v2936 = vadd.f32 %v2932, %v2935
  %vm2937 = vweird.f32 %v2930
  %vm2938 = vweird.f32 %v2932
  %vm2939 = vmor %vm2937, %vm2938
  %v2940 = vsel %vm2939, %v2932, %v2936
  %v2941 = vand.u32 2147483647, %v2930
  %vm2942 = vcmp.eq.f32.partialorder %v2941, 8.507059e+37
  %v2943 = vand.u32 %v2930, 2147483648
  %v2944 = vor.u32 1.1754944e-38, %v2943
  %v2945 = vsel %vm2942, %v2944, %v2940
  %v2946 = vmul.f32 1.0, %v2945
  %v2947 = vrcp.pop %v2931
  %v2948 = vmul.f32 %v2931, %v2947
  %v2949 = vsub.f32 1.0, %v2948
  %v2950 = vmul.f32 %v2947, %v2949
  %v2951 = vadd.f32 %v2947, %v2950
  %vm2952 = vweird.f32 %v2931
  %vm2953 = vweird.f32 %v2947
  %vm2954 = vmor %vm2952, %vm2953
  %v2955 = vsel %vm2954, %v2947, %v2951
  %v2956 = vand.u32 2147483647, %v2931
  %vm2957 = vcmp.eq.f32.partialorder %v2956, 8.507059e+37
  %v2958 = vand.u32 %v2931, 2147483648
  %v2959 = vor.u32 1.1754944e-38, %v2958
  %v2960 = vsel %vm2957, %v2959, %v2955
  %v2961 = vmul.f32 1.0, %v2960
  %v2962 = vmul.f32 %v2906, %v2840
  %v2963 = vmul.f32 %v2921, %v2880
  %v2964 = vadd.f32 %v2640, %v2962
  %v2965 = vadd.f32 %v2641, %v2963
  %v2966 = vtanh.pop %v2964
  %v2967 = vtanh.pop %v2965
  %v2968 = vsub.f32 1.0, %v2946
  %v2969 = vsub.f32 1.0, %v2961
  %v2970 = vmul.f32 %v2968, %v2966
  %v2971 = vmul.f32 %v2969, %v2967
  %v2972 = vmul.f32 %v2946, %v2629
  %v2973 = vmul.f32 %v2961, %v2630
  %v2974 = vadd.f32 %v2970, %v2972
  %v2975 = vadd.f32 %v2971, %v2973
  %s2976 = scalar_lea.vmem %s3, 56
  %2977 = vst [vmem:[%s2976] sm:$0xff] %v2974
  %2978 = vst [vmem:[%s4] sm:$0xff] %v2975
  // Predicated region
  $region14: #{encoder_forward.2} parent=0 // pred_check
    _
  $region15: #{encoder_forward.2} parent=0 // pred_check_branch
    %2980 = sbr.rel (0) target = $region17
  $region16: #{encoder_forward.2} parent=0 // pred_region
    _
  $region17: #{encoder_forward.2} parent=0 // pred_fallthru
    _
  // Predicated region
  $region18: #{encoder_forward.2} parent=0 // pred_check
    _
  $region19: #{encoder_forward.2} parent=0 // pred_check_branch
    %2982 = sbr.rel (0) target = $region21
  $region20: #{encoder_forward.2} parent=0 // pred_region
    _
  $region21: #{encoder_forward.2} parent=0 // pred_fallthru
    _
  // Predicated region
  $region22: #{encoder_forward.2} parent=0 // pred_check
    _
  $region23: #{encoder_forward.2} parent=0 // pred_check_branch
    %2984 = sbr.rel (0) target = $region25
  $region24: #{encoder_forward.2} parent=0 // pred_region
    _
  $region25: #{encoder_forward.2} parent=0 // pred_fallthru
    _
  // Predicated region
  $region26: #{encoder_forward.2} parent=0 // pred_check
    _
  $region27: #{encoder_forward.2} parent=0 // pred_check_branch
    %2986 = sbr.rel (0) target = $region29
  $region28: #{encoder_forward.2} parent=0 // pred_region
    _
  $region29: #{encoder_forward.2} parent=0 // pred_fallthru
    _

// kernel: encoder_forward.3
$region0: #{encoder_forward.3}
  #allocation0 [shape = 'u32[]', space=smem, size = 0x4, offset = 0x4, fixed_abs, tag = 'smem constant byte address 0x4 - core index']
  #allocation1 [shape = 'u32[72,128]{1,0:T(1,128)}', space=vmem, size = 0x9000, scoped, tag = 'internal scratch']
  %s0 = inlined_call_operand.vmem [shape: f32[3,2,768], index: 0, kind: input, shape index: {}]
  %s1 = inlined_call_operand.vmem [shape: f32[256,768], index: 1, kind: input, shape index: {}]
  %s2 = inlined_call_operand.vmem [shape: f32[1,768], index: 2, kind: input, shape index: {}]
  %s3 = inlined_call_operand.vmem [shape: f32[3,2,128], index: 3, kind: output, shape index: {0}]
  %s4 = inlined_call_operand.vmem [shape: f32[3,2,128], index: 4, kind: output, shape index: {1}]
  %5 = xla_tuple %s3, %s4
  %s6 = sld [smem:[#allocation0]]
  $region30: #{encoder_forward.3} parent=0
    _
  %s8 = ssub.s32 1, %s6
  %s9 = scalar_select 0, %s8, %s6
  // Predicated region
  $region2: #{encoder_forward.3} parent=0 // pred_check
    _
  $region3: #{encoder_forward.3} parent=0 // pred_check_branch
    %11 = sbr.rel (0) target = $region5
  $region4: #{encoder_forward.3} parent=0 // pred_region
    _
  $region5: #{encoder_forward.3} parent=0 // pred_fallthru
    _
  // Predicated region
  $region6: #{encoder_forward.3} parent=0 // pred_check
    _
  $region7: #{encoder_forward.3} parent=0 // pred_check_branch
    %13 = sbr.rel (0) target = $region9
  $region8: #{encoder_forward.3} parent=0 // pred_region
    _
  $region9: #{encoder_forward.3} parent=0 // pred_fallthru
    _
  // Predicated region
  $region10: #{encoder_forward.3} parent=0 // pred_check
    _
  $region11: #{encoder_forward.3} parent=0 // pred_check_branch
    %15 = sbr.rel (0) target = $region13
  $region12: #{encoder_forward.3} parent=0 // pred_region
    _
  $region13: #{encoder_forward.3} parent=0 // pred_fallthru
    _
  %v16 = vld [vmem:[%s1] sm:$0xff]
  %v17 = vld [vmem:[%s1 + $0x8] sm:$0xff]
  %v18 = vld [vmem:[%s1 + $0x10] sm:$0xff]
  %v19 = vld [vmem:[%s1 + $0x18] sm:$0xff]
  %v20 = vld [vmem:[%s1 + $0x20] sm:$0xff]
  %v21 = vld [vmem:[%s1 + $0x28] sm:$0xff]
  %v22 = vld [vmem:[%s1 + $0x30] sm:$0xff]
  %v23 = vld [vmem:[%s1 + $0x38] sm:$0xff]
  %v24 = vld [vmem:[%s1 + $0x40] sm:$0xff]
  %v25 = vld [vmem:[%s1 + $0x48] sm:$0xff]
  %v26 = vld [vmem:[%s1 + $0x50] sm:$0xff]
  %v27 = vld [vmem:[%s1 + $0x58] sm:$0xff]
  %v28 = vld [vmem:[%s1 + $0x60] sm:$0xff]
  %v29 = vld [vmem:[%s1 + $0x68] sm:$0xff]
  %v30 = vld [vmem:[%s1 + $0x70] sm:$0xff]
  %v31 = vld [vmem:[%s1 + $0x78] sm:$0xff]
  %v32 = vld [vmem:[%s1 + $0x80] sm:$0xff]
  %v33 = vld [vmem:[%s1 + $0x88] sm:$0xff]
  %v34 = vld [vmem:[%s1 + $0x90] sm:$0xff]
  %v35 = vld [vmem:[%s1 + $0x98] sm:$0xff]
  %v36 = vld [vmem:[%s1 + $0xa0] sm:$0xff]
  %v37 = vld [vmem:[%s1 + $0xa8] sm:$0xff]
  %v38 = vld [vmem:[%s1 + $0xb0] sm:$0xff]
  %v39 = vld [vmem:[%s1 + $0xb8] sm:$0xff]
  %v40 = vld [vmem:[%s1 + $0xc0] sm:$0xff]
  %v41 = vld [vmem:[%s1 + $0xc8] sm:$0xff]
  %v42 = vld [vmem:[%s1 + $0xd0] sm:$0xff]
  %v43 = vld [vmem:[%s1 + $0xd8] sm:$0xff]
  %v44 = vld [vmem:[%s1 + $0xe0] sm:$0xff]
  %v45 = vld [vmem:[%s1 + $0xe8] sm:$0xff]
  %v46 = vld [vmem:[%s1 + $0xf0] sm:$0xff]
  %v47 = vld [vmem:[%s1 + $0xf8] sm:$0xff]
  %v48 = vld [vmem:[%s1 + $0x100] sm:$0xff]
  %v49 = vld [vmem:[%s1 + $0x108] sm:$0xff]
  %v50 = vld [vmem:[%s1 + $0x110] sm:$0xff]
  %v51 = vld [vmem:[%s1 + $0x118] sm:$0xff]
  %v52 = vld [vmem:[%s1 + $0x120] sm:$0xff]
  %v53 = vld [vmem:[%s1 + $0x128] sm:$0xff]
  %v54 = vld [vmem:[%s1 + $0x130] sm:$0xff]
  %v55 = vld [vmem:[%s1 + $0x138] sm:$0xff]
  %v56 = vld [vmem:[%s1 + $0x140] sm:$0xff]
  %v57 = vld [vmem:[%s1 + $0x148] sm:$0xff]
  %v58 = vld [vmem:[%s1 + $0x150] sm:$0xff]
  %v59 = vld [vmem:[%s1 + $0x158] sm:$0xff]
  %v60 = vld [vmem:[%s1 + $0x160] sm:$0xff]
  %v61 = vld [vmem:[%s1 + $0x168] sm:$0xff]
  %v62 = vld [vmem:[%s1 + $0x170] sm:$0xff]
  %v63 = vld [vmem:[%s1 + $0x178] sm:$0xff]
  %v64 = vld [vmem:[%s1 + $0x180] sm:$0xff]
  %v65 = vld [vmem:[%s1 + $0x188] sm:$0xff]
  %v66 = vld [vmem:[%s1 + $0x190] sm:$0xff]
  %v67 = vld [vmem:[%s1 + $0x198] sm:$0xff]
  %v68 = vld [vmem:[%s1 + $0x1a0] sm:$0xff]
  %v69 = vld [vmem:[%s1 + $0x1a8] sm:$0xff]
  %v70 = vld [vmem:[%s1 + $0x1b0] sm:$0xff]
  %v71 = vld [vmem:[%s1 + $0x1b8] sm:$0xff]
  %v72 = vld [vmem:[%s1 + $0x1c0] sm:$0xff]
  %v73 = vld [vmem:[%s1 + $0x1c8] sm:$0xff]
  %v74 = vld [vmem:[%s1 + $0x1d0] sm:$0xff]
  %v75 = vld [vmem:[%s1 + $0x1d8] sm:$0xff]
  %v76 = vld [vmem:[%s1 + $0x1e0] sm:$0xff]
  %v77 = vld [vmem:[%s1 + $0x1e8] sm:$0xff]
  %v78 = vld [vmem:[%s1 + $0x1f0] sm:$0xff]
  %v79 = vld [vmem:[%s1 + $0x1f8] sm:$0xff]
  %v80 = vld [vmem:[%s1 + $0x200] sm:$0xff]
  %v81 = vld [vmem:[%s1 + $0x208] sm:$0xff]
  %v82 = vld [vmem:[%s1 + $0x210] sm:$0xff]
  %v83 = vld [vmem:[%s1 + $0x218] sm:$0xff]
  %v84 = vld [vmem:[%s1 + $0x220] sm:$0xff]
  %v85 = vld [vmem:[%s1 + $0x228] sm:$0xff]
  %v86 = vld [vmem:[%s1 + $0x230] sm:$0xff]
  %v87 = vld [vmem:[%s1 + $0x238] sm:$0xff]
  %v88 = vld [vmem:[%s1 + $0x240] sm:$0xff]
  %v89 = vld [vmem:[%s1 + $0x248] sm:$0xff]
  %v90 = vld [vmem:[%s1 + $0x250] sm:$0xff]
  %v91 = vld [vmem:[%s1 + $0x258] sm:$0xff]
  %v92 = vld [vmem:[%s1 + $0x260] sm:$0xff]
  %v93 = vld [vmem:[%s1 + $0x268] sm:$0xff]
  %v94 = vld [vmem:[%s1 + $0x270] sm:$0xff]
  %v95 = vld [vmem:[%s1 + $0x278] sm:$0xff]
  %v96 = vld [vmem:[%s1 + $0x280] sm:$0xff]
  %v97 = vld [vmem:[%s1 + $0x288] sm:$0xff]
  %v98 = vld [vmem:[%s1 + $0x290] sm:$0xff]
  %v99 = vld [vmem:[%s1 + $0x298] sm:$0xff]
  %v100 = vld [vmem:[%s1 + $0x2a0] sm:$0xff]
  %v101 = vld [vmem:[%s1 + $0x2a8] sm:$0xff]
  %v102 = vld [vmem:[%s1 + $0x2b0] sm:$0xff]
  %v103 = vld [vmem:[%s1 + $0x2b8] sm:$0xff]
  %v104 = vld [vmem:[%s1 + $0x2c0] sm:$0xff]
  %v105 = vld [vmem:[%s1 + $0x2c8] sm:$0xff]
  %v106 = vld [vmem:[%s1 + $0x2d0] sm:$0xff]
  %v107 = vld [vmem:[%s1 + $0x2d8] sm:$0xff]
  %v108 = vld [vmem:[%s1 + $0x2e0] sm:$0xff]
  %v109 = vld [vmem:[%s1 + $0x2e8] sm:$0xff]
  %v110 = vld [vmem:[%s1 + $0x2f0] sm:$0xff]
  %v111 = vld [vmem:[%s1 + $0x2f8] sm:$0xff]
  %v112 = vld [vmem:[%s1 + $0x300] sm:$0xff]
  %v113 = vld [vmem:[%s1 + $0x308] sm:$0xff]
  %v114 = vld [vmem:[%s1 + $0x310] sm:$0xff]
  %v115 = vld [vmem:[%s1 + $0x318] sm:$0xff]
  %v116 = vld [vmem:[%s1 + $0x320] sm:$0xff]
  %v117 = vld [vmem:[%s1 + $0x328] sm:$0xff]
  %v118 = vld [vmem:[%s1 + $0x330] sm:$0xff]
  %v119 = vld [vmem:[%s1 + $0x338] sm:$0xff]
  %v120 = vld [vmem:[%s1 + $0x340] sm:$0xff]
  %v121 = vld [vmem:[%s1 + $0x348] sm:$0xff]
  %v122 = vld [vmem:[%s1 + $0x350] sm:$0xff]
  %v123 = vld [vmem:[%s1 + $0x358] sm:$0xff]
  %v124 = vld [vmem:[%s1 + $0x360] sm:$0xff]
  %v125 = vld [vmem:[%s1 + $0x368] sm:$0xff]
  %v126 = vld [vmem:[%s1 + $0x370] sm:$0xff]
  %v127 = vld [vmem:[%s1 + $0x378] sm:$0xff]
  %v128 = vld [vmem:[%s1 + $0x380] sm:$0xff]
  %v129 = vld [vmem:[%s1 + $0x388] sm:$0xff]
  %v130 = vld [vmem:[%s1 + $0x390] sm:$0xff]
  %v131 = vld [vmem:[%s1 + $0x398] sm:$0xff]
  %v132 = vld [vmem:[%s1 + $0x3a0] sm:$0xff]
  %v133 = vld [vmem:[%s1 + $0x3a8] sm:$0xff]
  %v134 = vld [vmem:[%s1 + $0x3b0] sm:$0xff]
  %v135 = vld [vmem:[%s1 + $0x3b8] sm:$0xff]
  %v136 = vld [vmem:[%s1 + $0x3c0] sm:$0xff]
  %v137 = vld [vmem:[%s1 + $0x3c8] sm:$0xff]
  %v138 = vld [vmem:[%s1 + $0x3d0] sm:$0xff]
  %v139 = vld [vmem:[%s1 + $0x3d8] sm:$0xff]
  %v140 = vld [vmem:[%s1 + $0x3e0] sm:$0xff]
  %v141 = vld [vmem:[%s1 + $0x3e8] sm:$0xff]
  %v142 = vld [vmem:[%s1 + $0x3f0] sm:$0xff]
  %v143 = vld [vmem:[%s1 + $0x3f8] sm:$0xff]
  %v144 = vld [vmem:[%s1 + $0x400] sm:$0xff]
  %v145 = vld [vmem:[%s1 + $0x408] sm:$0xff]
  %v146 = vld [vmem:[%s1 + $0x410] sm:$0xff]
  %v147 = vld [vmem:[%s1 + $0x418] sm:$0xff]
  %v148 = vld [vmem:[%s1 + $0x420] sm:$0xff]
  %v149 = vld [vmem:[%s1 + $0x428] sm:$0xff]
  %v150 = vld [vmem:[%s1 + $0x430] sm:$0xff]
  %v151 = vld [vmem:[%s1 + $0x438] sm:$0xff]
  %v152 = vld [vmem:[%s1 + $0x440] sm:$0xff]
  %v153 = vld [vmem:[%s1 + $0x448] sm:$0xff]
  %v154 = vld [vmem:[%s1 + $0x450] sm:$0xff]
  %v155 = vld [vmem:[%s1 + $0x458] sm:$0xff]
  %v156 = vld [vmem:[%s1 + $0x460] sm:$0xff]
  %v157 = vld [vmem:[%s1 + $0x468] sm:$0xff]
  %v158 = vld [vmem:[%s1 + $0x470] sm:$0xff]
  %v159 = vld [vmem:[%s1 + $0x478] sm:$0xff]
  %v160 = vld [vmem:[%s1 + $0x480] sm:$0xff]
  %v161 = vld [vmem:[%s1 + $0x488] sm:$0xff]
  %v162 = vld [vmem:[%s1 + $0x490] sm:$0xff]
  %v163 = vld [vmem:[%s1 + $0x498] sm:$0xff]
  %v164 = vld [vmem:[%s1 + $0x4a0] sm:$0xff]
  %v165 = vld [vmem:[%s1 + $0x4a8] sm:$0xff]
  %v166 = vld [vmem:[%s1 + $0x4b0] sm:$0xff]
  %v167 = vld [vmem:[%s1 + $0x4b8] sm:$0xff]
  %v168 = vld [vmem:[%s1 + $0x4c0] sm:$0xff]
  %v169 = vld [vmem:[%s1 + $0x4c8] sm:$0xff]
  %v170 = vld [vmem:[%s1 + $0x4d0] sm:$0xff]
  %v171 = vld [vmem:[%s1 + $0x4d8] sm:$0xff]
  %v172 = vld [vmem:[%s1 + $0x4e0] sm:$0xff]
  %v173 = vld [vmem:[%s1 + $0x4e8] sm:$0xff]
  %v174 = vld [vmem:[%s1 + $0x4f0] sm:$0xff]
  %v175 = vld [vmem:[%s1 + $0x4f8] sm:$0xff]
  %v176 = vld [vmem:[%s1 + $0x500] sm:$0xff]
  %v177 = vld [vmem:[%s1 + $0x508] sm:$0xff]
  %v178 = vld [vmem:[%s1 + $0x510] sm:$0xff]
  %v179 = vld [vmem:[%s1 + $0x518] sm:$0xff]
  %v180 = vld [vmem:[%s1 + $0x520] sm:$0xff]
  %v181 = vld [vmem:[%s1 + $0x528] sm:$0xff]
  %v182 = vld [vmem:[%s1 + $0x530] sm:$0xff]
  %v183 = vld [vmem:[%s1 + $0x538] sm:$0xff]
  %v184 = vld [vmem:[%s1 + $0x540] sm:$0xff]
  %v185 = vld [vmem:[%s1 + $0x548] sm:$0xff]
  %v186 = vld [vmem:[%s1 + $0x550] sm:$0xff]
  %v187 = vld [vmem:[%s1 + $0x558] sm:$0xff]
  %v188 = vld [vmem:[%s1 + $0x560] sm:$0xff]
  %v189 = vld [vmem:[%s1 + $0x568] sm:$0xff]
  %v190 = vld [vmem:[%s1 + $0x570] sm:$0xff]
  %v191 = vld [vmem:[%s1 + $0x578] sm:$0xff]
  %v192 = vld [vmem:[%s1 + $0x580] sm:$0xff]
  %v193 = vld [vmem:[%s1 + $0x588] sm:$0xff]
  %v194 = vld [vmem:[%s1 + $0x590] sm:$0xff]
  %v195 = vld [vmem:[%s1 + $0x598] sm:$0xff]
  %v196 = vld [vmem:[%s1 + $0x5a0] sm:$0xff]
  %v197 = vld [vmem:[%s1 + $0x5a8] sm:$0xff]
  %v198 = vld [vmem:[%s1 + $0x5b0] sm:$0xff]
  %v199 = vld [vmem:[%s1 + $0x5b8] sm:$0xff]
  %v200 = vld [vmem:[%s1 + $0x5c0] sm:$0xff]
  %v201 = vld [vmem:[%s1 + $0x5c8] sm:$0xff]
  %v202 = vld [vmem:[%s1 + $0x5d0] sm:$0xff]
  %v203 = vld [vmem:[%s1 + $0x5d8] sm:$0xff]
  %v204 = vld [vmem:[%s1 + $0x5e0] sm:$0xff]
  %v205 = vld [vmem:[%s1 + $0x5e8] sm:$0xff]
  %v206 = vld [vmem:[%s1 + $0x5f0] sm:$0xff]
  %v207 = vld [vmem:[%s1 + $0x5f8] sm:$0xff]
  %v208 = vld [vmem:[%s2] sm:$0x3f]
  %v210 = vperm.slane %v208, 0
  %v211 = vperm.slane %v208, 1
  %v212 = vperm.slane %v208, 2
  %v213 = vperm.slane %v208, 3
  %v214 = vperm.slane %v208, 4
  %v215 = vperm.slane %v208, 5
  %v222 = vld [vmem:[%s0] sm:$0xff]
  %v223 = vld [vmem:[%s0 + $0x8] sm:$0xf]
  %224 = vmatpush.msra.mxu0 %v106
  %225 = vmatpush.msra.mxu0 %v100
  %226 = vmatpush.msra.mxu0 %v94
  %227 = vmatpush.msra.mxu0 %v88
  %228 = vmatpush.msra.mxu0 %v82
  %229 = vmatpush.msra.mxu0 %v76
  %230 = vmatpush.msra.mxu0 %v70
  %231 = vmatpush.msra.mxu0 %v64
  %232 = vmatpush.msra.mxu0 %v58
  %233 = vmatpush.msra.mxu0 %v52
  %234 = vmatpush.msra.mxu0 %v46
  %235 = vmatpush.msra.mxu0 %v40
  %236 = vmatpush.msra.mxu0 %v34
  %237 = vmatpush.msra.mxu0 %v28
  %238 = vmatpush.msra.mxu0 %v22
  %239 = vmatpush.msra.mxu0 %v16
  %240 = vmatmul.f32.gmra.mxu0 0.0
  %v241 = vpop.f32.mrf.mxu0
  %v242 = vadd.f32 %v210, %v241
  %243 = vdwg.mxu0
  %244 = vmatpush.msra.mxu0 %v202
  %245 = vmatpush.msra.mxu0 %v196
  %246 = vmatpush.msra.mxu0 %v190
  %247 = vmatpush.msra.mxu0 %v184
  %248 = vmatpush.msra.mxu0 %v178
  %249 = vmatpush.msra.mxu0 %v172
  %250 = vmatpush.msra.mxu0 %v166
  %251 = vmatpush.msra.mxu0 %v160
  %252 = vmatpush.msra.mxu0 %v154
  %253 = vmatpush.msra.mxu0 %v148
  %254 = vmatpush.msra.mxu0 %v142
  %255 = vmatpush.msra.mxu0 %v136
  %256 = vmatpush.msra.mxu0 %v130
  %257 = vmatpush.msra.mxu0 %v124
  %258 = vmatpush.msra.mxu0 %v118
  %259 = vmatpush.msra.mxu0 %v112
  %260 = vmatmul.f32.gmra.mxu0 0.0
  %v261 = vpop.f32.mrf.mxu0
  %v262 = vadd.f32 %v242, %v261
  %263 = vdwg.mxu0
  %264 = vmatpush.msra.mxu0 %v107
  %265 = vmatpush.msra.mxu0 %v101
  %266 = vmatpush.msra.mxu0 %v95
  %267 = vmatpush.msra.mxu0 %v89
  %268 = vmatpush.msra.mxu0 %v83
  %269 = vmatpush.msra.mxu0 %v77
  %270 = vmatpush.msra.mxu0 %v71
  %271 = vmatpush.msra.mxu0 %v65
  %272 = vmatpush.msra.mxu0 %v59
  %273 = vmatpush.msra.mxu0 %v53
  %274 = vmatpush.msra.mxu0 %v47
  %275 = vmatpush.msra.mxu0 %v41
  %276 = vmatpush.msra.mxu0 %v35
  %277 = vmatpush.msra.mxu0 %v29
  %278 = vmatpush.msra.mxu0 %v23
  %279 = vmatpush.msra.mxu0 %v17
  %280 = vmatmul.f32.gmra.mxu0 0.0
  %v281 = vpop.f32.mrf.mxu0
  %v282 = vadd.f32 %v211, %v281
  %283 = vdwg.mxu0
  %284 = vmatpush.msra.mxu0 %v203
  %285 = vmatpush.msra.mxu0 %v197
  %286 = vmatpush.msra.mxu0 %v191
  %287 = vmatpush.msra.mxu0 %v185
  %288 = vmatpush.msra.mxu0 %v179
  %289 = vmatpush.msra.mxu0 %v173
  %290 = vmatpush.msra.mxu0 %v167
  %291 = vmatpush.msra.mxu0 %v161
  %292 = vmatpush.msra.mxu0 %v155
  %293 = vmatpush.msra.mxu0 %v149
  %294 = vmatpush.msra.mxu0 %v143
  %295 = vmatpush.msra.mxu0 %v137
  %296 = vmatpush.msra.mxu0 %v131
  %297 = vmatpush.msra.mxu0 %v125
  %298 = vmatpush.msra.mxu0 %v119
  %299 = vmatpush.msra.mxu0 %v113
  %300 = vmatmul.f32.gmra.mxu0 0.0
  %v301 = vpop.f32.mrf.mxu0
  %v302 = vadd.f32 %v282, %v301
  %303 = vdwg.mxu0
  %304 = vmatpush.msra.mxu0 %v108
  %305 = vmatpush.msra.mxu0 %v102
  %306 = vmatpush.msra.mxu0 %v96
  %307 = vmatpush.msra.mxu0 %v90
  %308 = vmatpush.msra.mxu0 %v84
  %309 = vmatpush.msra.mxu0 %v78
  %310 = vmatpush.msra.mxu0 %v72
  %311 = vmatpush.msra.mxu0 %v66
  %312 = vmatpush.msra.mxu0 %v60
  %313 = vmatpush.msra.mxu0 %v54
  %314 = vmatpush.msra.mxu0 %v48
  %315 = vmatpush.msra.mxu0 %v42
  %316 = vmatpush.msra.mxu0 %v36
  %317 = vmatpush.msra.mxu0 %v30
  %318 = vmatpush.msra.mxu0 %v24
  %319 = vmatpush.msra.mxu0 %v18
  %320 = vmatmul.f32.gmra.mxu0 0.0
  %v321 = vpop.f32.mrf.mxu0
  %v322 = vadd.f32 %v212, %v321
  %323 = vdwg.mxu0
  %324 = vmatpush.msra.mxu0 %v204
  %325 = vmatpush.msra.mxu0 %v198
  %326 = vmatpush.msra.mxu0 %v192
  %327 = vmatpush.msra.mxu0 %v186
  %328 = vmatpush.msra.mxu0 %v180
  %329 = vmatpush.msra.mxu0 %v174
  %330 = vmatpush.msra.mxu0 %v168
  %331 = vmatpush.msra.mxu0 %v162
  %332 = vmatpush.msra.mxu0 %v156
  %333 = vmatpush.msra.mxu0 %v150
  %334 = vmatpush.msra.mxu0 %v144
  %335 = vmatpush.msra.mxu0 %v138
  %336 = vmatpush.msra.mxu0 %v132
  %337 = vmatpush.msra.mxu0 %v126
  %338 = vmatpush.msra.mxu0 %v120
  %339 = vmatpush.msra.mxu0 %v114
  %340 = vmatmul.f32.gmra.mxu0 0.0
  %v341 = vpop.f32.mrf.mxu0
  %v342 = vadd.f32 %v322, %v341
  %343 = vdwg.mxu0
  %344 = vmatpush.msra.mxu0 %v109
  %345 = vmatpush.msra.mxu0 %v103
  %346 = vmatpush.msra.mxu0 %v97
  %347 = vmatpush.msra.mxu0 %v91
  %348 = vmatpush.msra.mxu0 %v85
  %349 = vmatpush.msra.mxu0 %v79
  %350 = vmatpush.msra.mxu0 %v73
  %351 = vmatpush.msra.mxu0 %v67
  %352 = vmatpush.msra.mxu0 %v61
  %353 = vmatpush.msra.mxu0 %v55
  %354 = vmatpush.msra.mxu0 %v49
  %355 = vmatpush.msra.mxu0 %v43
  %356 = vmatpush.msra.mxu0 %v37
  %357 = vmatpush.msra.mxu0 %v31
  %358 = vmatpush.msra.mxu0 %v25
  %359 = vmatpush.msra.mxu0 %v19
  %360 = vmatmul.f32.gmra.mxu0 0.0
  %v361 = vpop.f32.mrf.mxu0
  %v362 = vadd.f32 %v213, %v361
  %363 = vdwg.mxu0
  %364 = vmatpush.msra.mxu0 %v205
  %365 = vmatpush.msra.mxu0 %v199
  %366 = vmatpush.msra.mxu0 %v193
  %367 = vmatpush.msra.mxu0 %v187
  %368 = vmatpush.msra.mxu0 %v181
  %369 = vmatpush.msra.mxu0 %v175
  %370 = vmatpush.msra.mxu0 %v169
  %371 = vmatpush.msra.mxu0 %v163
  %372 = vmatpush.msra.mxu0 %v157
  %373 = vmatpush.msra.mxu0 %v151
  %374 = vmatpush.msra.mxu0 %v145
  %375 = vmatpush.msra.mxu0 %v139
  %376 = vmatpush.msra.mxu0 %v133
  %377 = vmatpush.msra.mxu0 %v127
  %378 = vmatpush.msra.mxu0 %v121
  %379 = vmatpush.msra.mxu0 %v115
  %380 = vmatmul.f32.gmra.mxu0 0.0
  %v381 = vpop.f32.mrf.mxu0
  %v382 = vadd.f32 %v362, %v381
  %383 = vdwg.mxu0
  %384 = vmatpush.msra.mxu0 %v110
  %385 = vmatpush.msra.mxu0 %v104
  %386 = vmatpush.msra.mxu0 %v98
  %387 = vmatpush.msra.mxu0 %v92
  %388 = vmatpush.msra.mxu0 %v86
  %389 = vmatpush.msra.mxu0 %v80
  %390 = vmatpush.msra.mxu0 %v74
  %391 = vmatpush.msra.mxu0 %v68
  %392 = vmatpush.msra.mxu0 %v62
  %393 = vmatpush.msra.mxu0 %v56
  %394 = vmatpush.msra.mxu0 %v50
  %395 = vmatpush.msra.mxu0 %v44
  %396 = vmatpush.msra.mxu0 %v38
  %397 = vmatpush.msra.mxu0 %v32
  %398 = vmatpush.msra.mxu0 %v26
  %399 = vmatpush.msra.mxu0 %v20
  %400 = vmatmul.f32.gmra.mxu0 0.0
  %v401 = vpop.f32.mrf.mxu0
  %v402 = vadd.f32 %v214, %v401
  %403 = vdwg.mxu0
  %404 = vmatpush.msra.mxu0 %v206
  %405 = vmatpush.msra.mxu0 %v200
  %406 = vmatpush.msra.mxu0 %v194
  %407 = vmatpush.msra.mxu0 %v188
  %408 = vmatpush.msra.mxu0 %v182
  %409 = vmatpush.msra.mxu0 %v176
  %410 = vmatpush.msra.mxu0 %v170
  %411 = vmatpush.msra.mxu0 %v164
  %412 = vmatpush.msra.mxu0 %v158
  %413 = vmatpush.msra.mxu0 %v152
  %414 = vmatpush.msra.mxu0 %v146
  %415 = vmatpush.msra.mxu0 %v140
  %416 = vmatpush.msra.mxu0 %v134
  %417 = vmatpush.msra.mxu0 %v128
  %418 = vmatpush.msra.mxu0 %v122
  %419 = vmatpush.msra.mxu0 %v116
  %420 = vmatmul.f32.gmra.mxu0 0.0
  %v421 = vpop.f32.mrf.mxu0
  %v422 = vadd.f32 %v402, %v421
  %423 = vdwg.mxu0
  %424 = vmatpush.msra.mxu0 %v111
  %425 = vmatpush.msra.mxu0 %v105
  %426 = vmatpush.msra.mxu0 %v99
  %427 = vmatpush.msra.mxu0 %v93
  %428 = vmatpush.msra.mxu0 %v87
  %429 = vmatpush.msra.mxu0 %v81
  %430 = vmatpush.msra.mxu0 %v75
  %431 = vmatpush.msra.mxu0 %v69
  %432 = vmatpush.msra.mxu0 %v63
  %433 = vmatpush.msra.mxu0 %v57
  %434 = vmatpush.msra.mxu0 %v51
  %435 = vmatpush.msra.mxu0 %v45
  %436 = vmatpush.msra.mxu0 %v39
  %437 = vmatpush.msra.mxu0 %v33
  %438 = vmatpush.msra.mxu0 %v27
  %439 = vmatpush.msra.mxu0 %v21
  %440 = vmatmul.f32.gmra.mxu0 0.0
  %v441 = vpop.f32.mrf.mxu0
  %v442 = vadd.f32 %v215, %v441
  %443 = vdwg.mxu0
  %444 = vmatpush.msra.mxu0 %v207
  %445 = vmatpush.msra.mxu0 %v201
  %446 = vmatpush.msra.mxu0 %v195
  %447 = vmatpush.msra.mxu0 %v189
  %448 = vmatpush.msra.mxu0 %v183
  %449 = vmatpush.msra.mxu0 %v177
  %450 = vmatpush.msra.mxu0 %v171
  %451 = vmatpush.msra.mxu0 %v165
  %452 = vmatpush.msra.mxu0 %v159
  %453 = vmatpush.msra.mxu0 %v153
  %454 = vmatpush.msra.mxu0 %v147
  %455 = vmatpush.msra.mxu0 %v141
  %456 = vmatpush.msra.mxu0 %v135
  %457 = vmatpush.msra.mxu0 %v129
  %458 = vmatpush.msra.mxu0 %v123
  %459 = vmatpush.msra.mxu0 %v117
  %460 = vmatmul.f32.gmra.mxu0 0.0
  %v461 = vpop.f32.mrf.mxu0
  %v462 = vadd.f32 %v442, %v461
  %463 = vdwg.mxu0
  %v466 = vrot.slane %v302, 6
  %vm467 = vcmask 1041408
  %v468 = vsel %vm467, %v262, %v466
  %v470 = vadd.f32 %v222, %v468
  %v471 = vxor.u32 %v470, 2147483648
  %v472 = vmul.f32 %v471, 1.442695
  %v473 = vpow.pop %v472
  %v474 = vadd.f32 %v473, 1.0
  %v475 = vrcp.pop %v474
  %v476 = vmul.f32 %v474, %v475
  %v477 = vsub.f32 1.0, %v476
  %v478 = vmul.f32 %v475, %v477
  %v479 = vadd.f32 %v475, %v478
  %vm480 = vweird.f32 %v474
  %vm481 = vweird.f32 %v475
  %vm482 = vmor %vm480, %vm481
  %v483 = vsel %vm482, %v475, %v479
  %v484 = vand.u32 2147483647, %v474
  %vm485 = vcmp.eq.f32.partialorder %v484, 8.507059e+37
  %v486 = vand.u32 %v474, 2147483648
  %v487 = vor.u32 1.1754944e-38, %v486
  %v488 = vsel %vm485, %v487, %v483
  %v489 = vmul.f32 1.0, %v488
  %v491 = vrot.slane %v222, 4
  %v495 = vrot.slane %v382, 6
  %v496 = vsel %vm467, %v342, %v495
  %v498 = vadd.f32 %v491, %v496
  %v499 = vxor.u32 %v498, 2147483648
  %v500 = vmul.f32 %v499, 1.442695
  %v501 = vpow.pop %v500
  %v502 = vadd.f32 %v501, 1.0
  %v503 = vrcp.pop %v502
  %v504 = vmul.f32 %v502, %v503
  %v505 = vsub.f32 1.0, %v504
  %v506 = vmul.f32 %v503, %v505
  %v507 = vadd.f32 %v503, %v506
  %vm508 = vweird.f32 %v502
  %vm509 = vweird.f32 %v503
  %vm510 = vmor %vm508, %vm509
  %v511 = vsel %vm510, %v503, %v507
  %v512 = vand.u32 2147483647, %v502
  %vm513 = vcmp.eq.f32.partialorder %v512, 8.507059e+37
  %v514 = vand.u32 %v502, 2147483648
  %v515 = vor.u32 1.1754944e-38, %v514
  %v516 = vsel %vm513, %v515, %v511
  %v517 = vmul.f32 1.0, %v516
  %v520 = vrot.slane %v462, 6
  %v521 = vsel %vm467, %v422, %v520
  %v523 = vmul.f32 %v489, %v521
  %v524 = vadd.f32 %v223, %v523
  %v525 = vtanh.pop %v524
  %v526 = vsub.f32 1.0, %v517
  %v527 = vmul.f32 %v526, %v525
  %v528 = vmul.f32 %v517, 0.0
  %v529 = vadd.f32 %v527, %v528
  %530 = vst [vmem:[%s3] sm:$0x3] %v529
  %v532 = vrot.slane %v529, 2
  %s534 = scalar_lea.vmem %s4, 4
  %535 = vst [vmem:[%s534] sm:$0x3] %v532
  %s536 = scalar_lea.vmem %s0, 12
  %v537 = vld [vmem:[%s536] sm:$0xff]
  %v538 = vld [vmem:[%s536 + $0x8] sm:$0xf]
  %539 = vst [vmem:[#allocation1] ss:$4 sm:$0xff] %v529
  %v540 = vld.sshfl [vmem:[#allocation1] sm:$0xff pattern:$0x73625140]
  %v541 = vld.sshfl [vmem:[#allocation1 + $0x8] sm:$0xff pattern:$0x73625140]
  %544 = vmatpush.msra.mxu0 %v106
  %545 = vmatpush.msra.mxu0 %v100
  %546 = vmatpush.msra.mxu0 %v94
  %547 = vmatpush.msra.mxu0 %v88
  %548 = vmatpush.msra.mxu0 %v82
  %549 = vmatpush.msra.mxu0 %v76
  %550 = vmatpush.msra.mxu0 %v70
  %551 = vmatpush.msra.mxu0 %v64
  %552 = vmatpush.msra.mxu0 %v58
  %553 = vmatpush.msra.mxu0 %v52
  %554 = vmatpush.msra.mxu0 %v46
  %555 = vmatpush.msra.mxu0 %v40
  %556 = vmatpush.msra.mxu0 %v34
  %557 = vmatpush.msra.mxu0 %v28
  %558 = vmatpush.msra.mxu0 %v22
  %559 = vmatpush.msra.mxu0 %v16
  %560 = vmatmul.f32.gmra.mxu0 %v540
  %v561 = vpop.f32.mrf.mxu0
  %v562 = vadd.f32 %v210, %v561
  %563 = vdwg.mxu0
  %564 = vmatpush.msra.mxu0 %v202
  %565 = vmatpush.msra.mxu0 %v196
  %566 = vmatpush.msra.mxu0 %v190
  %567 = vmatpush.msra.mxu0 %v184
  %568 = vmatpush.msra.mxu0 %v178
  %569 = vmatpush.msra.mxu0 %v172
  %570 = vmatpush.msra.mxu0 %v166
  %571 = vmatpush.msra.mxu0 %v160
  %572 = vmatpush.msra.mxu0 %v154
  %573 = vmatpush.msra.mxu0 %v148
  %574 = vmatpush.msra.mxu0 %v142
  %575 = vmatpush.msra.mxu0 %v136
  %576 = vmatpush.msra.mxu0 %v130
  %577 = vmatpush.msra.mxu0 %v124
  %578 = vmatpush.msra.mxu0 %v118
  %579 = vmatpush.msra.mxu0 %v112
  %580 = vmatmul.f32.gmra.mxu0 %v541
  %v581 = vpop.f32.mrf.mxu0
  %v582 = vadd.f32 %v562, %v581
  %583 = vdwg.mxu0
  %584 = vmatpush.msra.mxu0 %v107
  %585 = vmatpush.msra.mxu0 %v101
  %586 = vmatpush.msra.mxu0 %v95
  %587 = vmatpush.msra.mxu0 %v89
  %588 = vmatpush.msra.mxu0 %v83
  %589 = vmatpush.msra.mxu0 %v77
  %590 = vmatpush.msra.mxu0 %v71
  %591 = vmatpush.msra.mxu0 %v65
  %592 = vmatpush.msra.mxu0 %v59
  %593 = vmatpush.msra.mxu0 %v53
  %594 = vmatpush.msra.mxu0 %v47
  %595 = vmatpush.msra.mxu0 %v41
  %596 = vmatpush.msra.mxu0 %v35
  %597 = vmatpush.msra.mxu0 %v29
  %598 = vmatpush.msra.mxu0 %v23
  %599 = vmatpush.msra.mxu0 %v17
  %600 = vmatmul.f32.gmra.mxu0 %v540
  %v601 = vpop.f32.mrf.mxu0
  %v602 = vadd.f32 %v211, %v601
  %603 = vdwg.mxu0
  %604 = vmatpush.msra.mxu0 %v203
  %605 = vmatpush.msra.mxu0 %v197
  %606 = vmatpush.msra.mxu0 %v191
  %607 = vmatpush.msra.mxu0 %v185
  %608 = vmatpush.msra.mxu0 %v179
  %609 = vmatpush.msra.mxu0 %v173
  %610 = vmatpush.msra.mxu0 %v167
  %611 = vmatpush.msra.mxu0 %v161
  %612 = vmatpush.msra.mxu0 %v155
  %613 = vmatpush.msra.mxu0 %v149
  %614 = vmatpush.msra.mxu0 %v143
  %615 = vmatpush.msra.mxu0 %v137
  %616 = vmatpush.msra.mxu0 %v131
  %617 = vmatpush.msra.mxu0 %v125
  %618 = vmatpush.msra.mxu0 %v119
  %619 = vmatpush.msra.mxu0 %v113
  %620 = vmatmul.f32.gmra.mxu0 %v541
  %v621 = vpop.f32.mrf.mxu0
  %v622 = vadd.f32 %v602, %v621
  %623 = vdwg.mxu0
  %624 = vmatpush.msra.mxu0 %v108
  %625 = vmatpush.msra.mxu0 %v102
  %626 = vmatpush.msra.mxu0 %v96
  %627 = vmatpush.msra.mxu0 %v90
  %628 = vmatpush.msra.mxu0 %v84
  %629 = vmatpush.msra.mxu0 %v78
  %630 = vmatpush.msra.mxu0 %v72
  %631 = vmatpush.msra.mxu0 %v66
  %632 = vmatpush.msra.mxu0 %v60
  %633 = vmatpush.msra.mxu0 %v54
  %634 = vmatpush.msra.mxu0 %v48
  %635 = vmatpush.msra.mxu0 %v42
  %636 = vmatpush.msra.mxu0 %v36
  %637 = vmatpush.msra.mxu0 %v30
  %638 = vmatpush.msra.mxu0 %v24
  %639 = vmatpush.msra.mxu0 %v18
  %640 = vmatmul.f32.gmra.mxu0 %v540
  %v641 = vpop.f32.mrf.mxu0
  %v642 = vadd.f32 %v212, %v641
  %643 = vdwg.mxu0
  %644 = vmatpush.msra.mxu0 %v204
  %645 = vmatpush.msra.mxu0 %v198
  %646 = vmatpush.msra.mxu0 %v192
  %647 = vmatpush.msra.mxu0 %v186
  %648 = vmatpush.msra.mxu0 %v180
  %649 = vmatpush.msra.mxu0 %v174
  %650 = vmatpush.msra.mxu0 %v168
  %651 = vmatpush.msra.mxu0 %v162
  %652 = vmatpush.msra.mxu0 %v156
  %653 = vmatpush.msra.mxu0 %v150
  %654 = vmatpush.msra.mxu0 %v144
  %655 = vmatpush.msra.mxu0 %v138
  %656 = vmatpush.msra.mxu0 %v132
  %657 = vmatpush.msra.mxu0 %v126
  %658 = vmatpush.msra.mxu0 %v120
  %659 = vmatpush.msra.mxu0 %v114
  %660 = vmatmul.f32.gmra.mxu0 %v541
  %v661 = vpop.f32.mrf.mxu0
  %v662 = vadd.f32 %v642, %v661
  %663 = vdwg.mxu0
  %664 = vmatpush.msra.mxu0 %v109
  %665 = vmatpush.msra.mxu0 %v103
  %666 = vmatpush.msra.mxu0 %v97
  %667 = vmatpush.msra.mxu0 %v91
  %668 = vmatpush.msra.mxu0 %v85
  %669 = vmatpush.msra.mxu0 %v79
  %670 = vmatpush.msra.mxu0 %v73
  %671 = vmatpush.msra.mxu0 %v67
  %672 = vmatpush.msra.mxu0 %v61
  %673 = vmatpush.msra.mxu0 %v55
  %674 = vmatpush.msra.mxu0 %v49
  %675 = vmatpush.msra.mxu0 %v43
  %676 = vmatpush.msra.mxu0 %v37
  %677 = vmatpush.msra.mxu0 %v31
  %678 = vmatpush.msra.mxu0 %v25
  %679 = vmatpush.msra.mxu0 %v19
  %680 = vmatmul.f32.gmra.mxu0 %v540
  %v681 = vpop.f32.mrf.mxu0
  %v682 = vadd.f32 %v213, %v681
  %683 = vdwg.mxu0
  %684 = vmatpush.msra.mxu0 %v205
  %685 = vmatpush.msra.mxu0 %v199
  %686 = vmatpush.msra.mxu0 %v193
  %687 = vmatpush.msra.mxu0 %v187
  %688 = vmatpush.msra.mxu0 %v181
  %689 = vmatpush.msra.mxu0 %v175
  %690 = vmatpush.msra.mxu0 %v169
  %691 = vmatpush.msra.mxu0 %v163
  %692 = vmatpush.msra.mxu0 %v157
  %693 = vmatpush.msra.mxu0 %v151
  %694 = vmatpush.msra.mxu0 %v145
  %695 = vmatpush.msra.mxu0 %v139
  %696 = vmatpush.msra.mxu0 %v133
  %697 = vmatpush.msra.mxu0 %v127
  %698 = vmatpush.msra.mxu0 %v121
  %699 = vmatpush.msra.mxu0 %v115
  %700 = vmatmul.f32.gmra.mxu0 %v541
  %v701 = vpop.f32.mrf.mxu0
  %v702 = vadd.f32 %v682, %v701
  %703 = vdwg.mxu0
  %704 = vmatpush.msra.mxu0 %v110
  %705 = vmatpush.msra.mxu0 %v104
  %706 = vmatpush.msra.mxu0 %v98
  %707 = vmatpush.msra.mxu0 %v92
  %708 = vmatpush.msra.mxu0 %v86
  %709 = vmatpush.msra.mxu0 %v80
  %710 = vmatpush.msra.mxu0 %v74
  %711 = vmatpush.msra.mxu0 %v68
  %712 = vmatpush.msra.mxu0 %v62
  %713 = vmatpush.msra.mxu0 %v56
  %714 = vmatpush.msra.mxu0 %v50
  %715 = vmatpush.msra.mxu0 %v44
  %716 = vmatpush.msra.mxu0 %v38
  %717 = vmatpush.msra.mxu0 %v32
  %718 = vmatpush.msra.mxu0 %v26
  %719 = vmatpush.msra.mxu0 %v20
  %720 = vmatmul.f32.gmra.mxu0 %v540
  %v721 = vpop.f32.mrf.mxu0
  %v722 = vadd.f32 %v214, %v721
  %723 = vdwg.mxu0
  %724 = vmatpush.msra.mxu0 %v206
  %725 = vmatpush.msra.mxu0 %v200
  %726 = vmatpush.msra.mxu0 %v194
  %727 = vmatpush.msra.mxu0 %v188
  %728 = vmatpush.msra.mxu0 %v182
  %729 = vmatpush.msra.mxu0 %v176
  %730 = vmatpush.msra.mxu0 %v170
  %731 = vmatpush.msra.mxu0 %v164
  %732 = vmatpush.msra.mxu0 %v158
  %733 = vmatpush.msra.mxu0 %v152
  %734 = vmatpush.msra.mxu0 %v146
  %735 = vmatpush.msra.mxu0 %v140
  %736 = vmatpush.msra.mxu0 %v134
  %737 = vmatpush.msra.mxu0 %v128
  %738 = vmatpush.msra.mxu0 %v122
  %739 = vmatpush.msra.mxu0 %v116
  %740 = vmatmul.f32.gmra.mxu0 %v541
  %v741 = vpop.f32.mrf.mxu0
  %v742 = vadd.f32 %v722, %v741
  %743 = vdwg.mxu0
  %744 = vmatpush.msra.mxu0 %v111
  %745 = vmatpush.msra.mxu0 %v105
  %746 = vmatpush.msra.mxu0 %v99
  %747 = vmatpush.msra.mxu0 %v93
  %748 = vmatpush.msra.mxu0 %v87
  %749 = vmatpush.msra.mxu0 %v81
  %750 = vmatpush.msra.mxu0 %v75
  %751 = vmatpush.msra.mxu0 %v69
  %752 = vmatpush.msra.mxu0 %v63
  %753 = vmatpush.msra.mxu0 %v57
  %754 = vmatpush.msra.mxu0 %v51
  %755 = vmatpush.msra.mxu0 %v45
  %756 = vmatpush.msra.mxu0 %v39
  %757 = vmatpush.msra.mxu0 %v33
  %758 = vmatpush.msra.mxu0 %v27
  %759 = vmatpush.msra.mxu0 %v21
  %760 = vmatmul.f32.gmra.mxu0 %v540
  %v761 = vpop.f32.mrf.mxu0
  %v762 = vadd.f32 %v215, %v761
  %763 = vdwg.mxu0
  %764 = vmatpush.msra.mxu0 %v207
  %765 = vmatpush.msra.mxu0 %v201
  %766 = vmatpush.msra.mxu0 %v195
  %767 = vmatpush.msra.mxu0 %v189
  %768 = vmatpush.msra.mxu0 %v183
  %769 = vmatpush.msra.mxu0 %v177
  %770 = vmatpush.msra.mxu0 %v171
  %771 = vmatpush.msra.mxu0 %v165
  %772 = vmatpush.msra.mxu0 %v159
  %773 = vmatpush.msra.mxu0 %v153
  %774 = vmatpush.msra.mxu0 %v147
  %775 = vmatpush.msra.mxu0 %v141
  %776 = vmatpush.msra.mxu0 %v135
  %777 = vmatpush.msra.mxu0 %v129
  %778 = vmatpush.msra.mxu0 %v123
  %779 = vmatpush.msra.mxu0 %v117
  %780 = vmatmul.f32.gmra.mxu0 %v541
  %v781 = vpop.f32.mrf.mxu0
  %v782 = vadd.f32 %v762, %v781
  %783 = vdwg.mxu0
  %v786 = vrot.slane %v622, 6
  %v787 = vsel %vm467, %v582, %v786
  %v789 = vadd.f32 %v537, %v787
  %v790 = vxor.u32 %v789, 2147483648
  %v791 = vmul.f32 %v790, 1.442695
  %v792 = vpow.pop %v791
  %v793 = vadd.f32 %v792, 1.0
  %v794 = vrcp.pop %v793
  %v795 = vmul.f32 %v793, %v794
  %v796 = vsub.f32 1.0, %v795
  %v797 = vmul.f32 %v794, %v796
  %v798 = vadd.f32 %v794, %v797
  %vm799 = vweird.f32 %v793
  %vm800 = vweird.f32 %v794
  %vm801 = vmor %vm799, %vm800
  %v802 = vsel %vm801, %v794, %v798
  %v803 = vand.u32 2147483647, %v793
  %vm804 = vcmp.eq.f32.partialorder %v803, 8.507059e+37
  %v805 = vand.u32 %v793, 2147483648
  %v806 = vor.u32 1.1754944e-38, %v805
  %v807 = vsel %vm804, %v806, %v802
  %v808 = vmul.f32 1.0, %v807
  %v810 = vrot.slane %v537, 4
  %v814 = vrot.slane %v702, 6
  %v815 = vsel %vm467, %v662, %v814
  %v817 = vadd.f32 %v810, %v815
  %v818 = vxor.u32 %v817, 2147483648
  %v819 = vmul.f32 %v818, 1.442695
  %v820 = vpow.pop %v819
  %v821 = vadd.f32 %v820, 1.0
  %v822 = vrcp.pop %v821
  %v823 = vmul.f32 %v821, %v822
  %v824 = vsub.f32 1.0, %v823
  %v825 = vmul.f32 %v822, %v824
  %v826 = vadd.f32 %v822, %v825
  %vm827 = vweird.f32 %v821
  %vm828 = vweird.f32 %v822
  %vm829 = vmor %vm827, %vm828
  %v830 = vsel %vm829, %v822, %v826
  %v831 = vand.u32 2147483647, %v821
  %vm832 = vcmp.eq.f32.partialorder %v831, 8.507059e+37
  %v833 = vand.u32 %v821, 2147483648
  %v834 = vor.u32 1.1754944e-38, %v833
  %v835 = vsel %vm832, %v834, %v830
  %v836 = vmul.f32 1.0, %v835
  %v839 = vrot.slane %v782, 6
  %v840 = vsel %vm467, %v742, %v839
  %v842 = vmul.f32 %v808, %v840
  %v843 = vadd.f32 %v538, %v842
  %v844 = vtanh.pop %v843
  %v845 = vsub.f32 1.0, %v836
  %v846 = vmul.f32 %v845, %v844
  %v847 = vmul.f32 %v836, %v529
  %v848 = vadd.f32 %v846, %v847
  %s849 = scalar_lea.vmem %s3, 2
  %850 = vst [vmem:[%s849] sm:$0x3] %v848
  %v852 = vrot.slane %v848, 2
  %s854 = scalar_lea.vmem %s4, 2
  %855 = vst [vmem:[%s854] sm:$0x3] %v852
  %s856 = scalar_lea.vmem %s0, 24
  %v857 = vld [vmem:[%s856] sm:$0xff]
  %v858 = vld [vmem:[%s856 + $0x8] sm:$0xf]
  %859 = vst [vmem:[#allocation1] ss:$4 sm:$0xff] %v848
  %v860 = vld.sshfl [vmem:[#allocation1] sm:$0xff pattern:$0x73625140]
  %v861 = vld.sshfl [vmem:[#allocation1 + $0x8] sm:$0xff pattern:$0x73625140]
  %864 = vmatpush.msra.mxu0 %v106
  %865 = vmatpush.msra.mxu0 %v100
  %866 = vmatpush.msra.mxu0 %v94
  %867 = vmatpush.msra.mxu0 %v88
  %868 = vmatpush.msra.mxu0 %v82
  %869 = vmatpush.msra.mxu0 %v76
  %870 = vmatpush.msra.mxu0 %v70
  %871 = vmatpush.msra.mxu0 %v64
  %872 = vmatpush.msra.mxu0 %v58
  %873 = vmatpush.msra.mxu0 %v52
  %874 = vmatpush.msra.mxu0 %v46
  %875 = vmatpush.msra.mxu0 %v40
  %876 = vmatpush.msra.mxu0 %v34
  %877 = vmatpush.msra.mxu0 %v28
  %878 = vmatpush.msra.mxu0 %v22
  %879 = vmatpush.msra.mxu0 %v16
  %880 = vmatmul.f32.gmra.mxu0 %v860
  %v881 = vpop.f32.mrf.mxu0
  %v882 = vadd.f32 %v210, %v881
  %883 = vdwg.mxu0
  %884 = vmatpush.msra.mxu0 %v202
  %885 = vmatpush.msra.mxu0 %v196
  %886 = vmatpush.msra.mxu0 %v190
  %887 = vmatpush.msra.mxu0 %v184
  %888 = vmatpush.msra.mxu0 %v178
  %889 = vmatpush.msra.mxu0 %v172
  %890 = vmatpush.msra.mxu0 %v166
  %891 = vmatpush.msra.mxu0 %v160
  %892 = vmatpush.msra.mxu0 %v154
  %893 = vmatpush.msra.mxu0 %v148
  %894 = vmatpush.msra.mxu0 %v142
  %895 = vmatpush.msra.mxu0 %v136
  %896 = vmatpush.msra.mxu0 %v130
  %897 = vmatpush.msra.mxu0 %v124
  %898 = vmatpush.msra.mxu0 %v118
  %899 = vmatpush.msra.mxu0 %v112
  %900 = vmatmul.f32.gmra.mxu0 %v861
  %v901 = vpop.f32.mrf.mxu0
  %v902 = vadd.f32 %v882, %v901
  %903 = vdwg.mxu0
  %904 = vmatpush.msra.mxu0 %v107
  %905 = vmatpush.msra.mxu0 %v101
  %906 = vmatpush.msra.mxu0 %v95
  %907 = vmatpush.msra.mxu0 %v89
  %908 = vmatpush.msra.mxu0 %v83
  %909 = vmatpush.msra.mxu0 %v77
  %910 = vmatpush.msra.mxu0 %v71
  %911 = vmatpush.msra.mxu0 %v65
  %912 = vmatpush.msra.mxu0 %v59
  %913 = vmatpush.msra.mxu0 %v53
  %914 = vmatpush.msra.mxu0 %v47
  %915 = vmatpush.msra.mxu0 %v41
  %916 = vmatpush.msra.mxu0 %v35
  %917 = vmatpush.msra.mxu0 %v29
  %918 = vmatpush.msra.mxu0 %v23
  %919 = vmatpush.msra.mxu0 %v17
  %920 = vmatmul.f32.gmra.mxu0 %v860
  %v921 = vpop.f32.mrf.mxu0
  %v922 = vadd.f32 %v211, %v921
  %923 = vdwg.mxu0
  %924 = vmatpush.msra.mxu0 %v203
  %925 = vmatpush.msra.mxu0 %v197
  %926 = vmatpush.msra.mxu0 %v191
  %927 = vmatpush.msra.mxu0 %v185
  %928 = vmatpush.msra.mxu0 %v179
  %929 = vmatpush.msra.mxu0 %v173
  %930 = vmatpush.msra.mxu0 %v167
  %931 = vmatpush.msra.mxu0 %v161
  %932 = vmatpush.msra.mxu0 %v155
  %933 = vmatpush.msra.mxu0 %v149
  %934 = vmatpush.msra.mxu0 %v143
  %935 = vmatpush.msra.mxu0 %v137
  %936 = vmatpush.msra.mxu0 %v131
  %937 = vmatpush.msra.mxu0 %v125
  %938 = vmatpush.msra.mxu0 %v119
  %939 = vmatpush.msra.mxu0 %v113
  %940 = vmatmul.f32.gmra.mxu0 %v861
  %v941 = vpop.f32.mrf.mxu0
  %v942 = vadd.f32 %v922, %v941
  %943 = vdwg.mxu0
  %944 = vmatpush.msra.mxu0 %v108
  %945 = vmatpush.msra.mxu0 %v102
  %946 = vmatpush.msra.mxu0 %v96
  %947 = vmatpush.msra.mxu0 %v90
  %948 = vmatpush.msra.mxu0 %v84
  %949 = vmatpush.msra.mxu0 %v78
  %950 = vmatpush.msra.mxu0 %v72
  %951 = vmatpush.msra.mxu0 %v66
  %952 = vmatpush.msra.mxu0 %v60
  %953 = vmatpush.msra.mxu0 %v54
  %954 = vmatpush.msra.mxu0 %v48
  %955 = vmatpush.msra.mxu0 %v42
  %956 = vmatpush.msra.mxu0 %v36
  %957 = vmatpush.msra.mxu0 %v30
  %958 = vmatpush.msra.mxu0 %v24
  %959 = vmatpush.msra.mxu0 %v18
  %960 = vmatmul.f32.gmra.mxu0 %v860
  %v961 = vpop.f32.mrf.mxu0
  %v962 = vadd.f32 %v212, %v961
  %963 = vdwg.mxu0
  %964 = vmatpush.msra.mxu0 %v204
  %965 = vmatpush.msra.mxu0 %v198
  %966 = vmatpush.msra.mxu0 %v192
  %967 = vmatpush.msra.mxu0 %v186
  %968 = vmatpush.msra.mxu0 %v180
  %969 = vmatpush.msra.mxu0 %v174
  %970 = vmatpush.msra.mxu0 %v168
  %971 = vmatpush.msra.mxu0 %v162
  %972 = vmatpush.msra.mxu0 %v156
  %973 = vmatpush.msra.mxu0 %v150
  %974 = vmatpush.msra.mxu0 %v144
  %975 = vmatpush.msra.mxu0 %v138
  %976 = vmatpush.msra.mxu0 %v132
  %977 = vmatpush.msra.mxu0 %v126
  %978 = vmatpush.msra.mxu0 %v120
  %979 = vmatpush.msra.mxu0 %v114
  %980 = vmatmul.f32.gmra.mxu0 %v861
  %v981 = vpop.f32.mrf.mxu0
  %v982 = vadd.f32 %v962, %v981
  %983 = vdwg.mxu0
  %984 = vmatpush.msra.mxu0 %v109
  %985 = vmatpush.msra.mxu0 %v103
  %986 = vmatpush.msra.mxu0 %v97
  %987 = vmatpush.msra.mxu0 %v91
  %988 = vmatpush.msra.mxu0 %v85
  %989 = vmatpush.msra.mxu0 %v79
  %990 = vmatpush.msra.mxu0 %v73
  %991 = vmatpush.msra.mxu0 %v67
  %992 = vmatpush.msra.mxu0 %v61
  %993 = vmatpush.msra.mxu0 %v55
  %994 = vmatpush.msra.mxu0 %v49
  %995 = vmatpush.msra.mxu0 %v43
  %996 = vmatpush.msra.mxu0 %v37
  %997 = vmatpush.msra.mxu0 %v31
  %998 = vmatpush.msra.mxu0 %v25
  %999 = vmatpush.msra.mxu0 %v19
  %1000 = vmatmul.f32.gmra.mxu0 %v860
  %v1001 = vpop.f32.mrf.mxu0
  %v1002 = vadd.f32 %v213, %v1001
  %1003 = vdwg.mxu0
  %1004 = vmatpush.msra.mxu0 %v205
  %1005 = vmatpush.msra.mxu0 %v199
  %1006 = vmatpush.msra.mxu0 %v193
  %1007 = vmatpush.msra.mxu0 %v187
  %1008 = vmatpush.msra.mxu0 %v181
  %1009 = vmatpush.msra.mxu0 %v175
  %1010 = vmatpush.msra.mxu0 %v169
  %1011 = vmatpush.msra.mxu0 %v163
  %1012 = vmatpush.msra.mxu0 %v157
  %1013 = vmatpush.msra.mxu0 %v151
  %1014 = vmatpush.msra.mxu0 %v145
  %1015 = vmatpush.msra.mxu0 %v139
  %1016 = vmatpush.msra.mxu0 %v133
  %1017 = vmatpush.msra.mxu0 %v127
  %1018 = vmatpush.msra.mxu0 %v121
  %1019 = vmatpush.msra.mxu0 %v115
  %1020 = vmatmul.f32.gmra.mxu0 %v861
  %v1021 = vpop.f32.mrf.mxu0
  %v1022 = vadd.f32 %v1002, %v1021
  %1023 = vdwg.mxu0
  %1024 = vmatpush.msra.mxu0 %v110
  %1025 = vmatpush.msra.mxu0 %v104
  %1026 = vmatpush.msra.mxu0 %v98
  %1027 = vmatpush.msra.mxu0 %v92
  %1028 = vmatpush.msra.mxu0 %v86
  %1029 = vmatpush.msra.mxu0 %v80
  %1030 = vmatpush.msra.mxu0 %v74
  %1031 = vmatpush.msra.mxu0 %v68
  %1032 = vmatpush.msra.mxu0 %v62
  %1033 = vmatpush.msra.mxu0 %v56
  %1034 = vmatpush.msra.mxu0 %v50
  %1035 = vmatpush.msra.mxu0 %v44
  %1036 = vmatpush.msra.mxu0 %v38
  %1037 = vmatpush.msra.mxu0 %v32
  %1038 = vmatpush.msra.mxu0 %v26
  %1039 = vmatpush.msra.mxu0 %v20
  %1040 = vmatmul.f32.gmra.mxu0 %v860
  %v1041 = vpop.f32.mrf.mxu0
  %v1042 = vadd.f32 %v214, %v1041
  %1043 = vdwg.mxu0
  %1044 = vmatpush.msra.mxu0 %v206
  %1045 = vmatpush.msra.mxu0 %v200
  %1046 = vmatpush.msra.mxu0 %v194
  %1047 = vmatpush.msra.mxu0 %v188
  %1048 = vmatpush.msra.mxu0 %v182
  %1049 = vmatpush.msra.mxu0 %v176
  %1050 = vmatpush.msra.mxu0 %v170
  %1051 = vmatpush.msra.mxu0 %v164
  %1052 = vmatpush.msra.mxu0 %v158
  %1053 = vmatpush.msra.mxu0 %v152
  %1054 = vmatpush.msra.mxu0 %v146
  %1055 = vmatpush.msra.mxu0 %v140
  %1056 = vmatpush.msra.mxu0 %v134
  %1057 = vmatpush.msra.mxu0 %v128
  %1058 = vmatpush.msra.mxu0 %v122
  %1059 = vmatpush.msra.mxu0 %v116
  %1060 = vmatmul.f32.gmra.mxu0 %v861
  %v1061 = vpop.f32.mrf.mxu0
  %v1062 = vadd.f32 %v1042, %v1061
  %1063 = vdwg.mxu0
  %1064 = vmatpush.msra.mxu0 %v111
  %1065 = vmatpush.msra.mxu0 %v105
  %1066 = vmatpush.msra.mxu0 %v99
  %1067 = vmatpush.msra.mxu0 %v93
  %1068 = vmatpush.msra.mxu0 %v87
  %1069 = vmatpush.msra.mxu0 %v81
  %1070 = vmatpush.msra.mxu0 %v75
  %1071 = vmatpush.msra.mxu0 %v69
  %1072 = vmatpush.msra.mxu0 %v63
  %1073 = vmatpush.msra.mxu0 %v57
  %1074 = vmatpush.msra.mxu0 %v51
  %1075 = vmatpush.msra.mxu0 %v45
  %1076 = vmatpush.msra.mxu0 %v39
  %1077 = vmatpush.msra.mxu0 %v33
  %1078 = vmatpush.msra.mxu0 %v27
  %1079 = vmatpush.msra.mxu0 %v21
  %1080 = vmatmul.f32.gmra.mxu0 %v860
  %v1081 = vpop.f32.mrf.mxu0
  %v1082 = vadd.f32 %v215, %v1081
  %1083 = vdwg.mxu0
  %1084 = vmatpush.msra.mxu0 %v207
  %1085 = vmatpush.msra.mxu0 %v201
  %1086 = vmatpush.msra.mxu0 %v195
  %1087 = vmatpush.msra.mxu0 %v189
  %1088 = vmatpush.msra.mxu0 %v183
  %1089 = vmatpush.msra.mxu0 %v177
  %1090 = vmatpush.msra.mxu0 %v171
  %1091 = vmatpush.msra.mxu0 %v165
  %1092 = vmatpush.msra.mxu0 %v159
  %1093 = vmatpush.msra.mxu0 %v153
  %1094 = vmatpush.msra.mxu0 %v147
  %1095 = vmatpush.msra.mxu0 %v141
  %1096 = vmatpush.msra.mxu0 %v135
  %1097 = vmatpush.msra.mxu0 %v129
  %1098 = vmatpush.msra.mxu0 %v123
  %1099 = vmatpush.msra.mxu0 %v117
  %1100 = vmatmul.f32.gmra.mxu0 %v861
  %v1101 = vpop.f32.mrf.mxu0
  %v1102 = vadd.f32 %v1082, %v1101
  %1103 = vdwg.mxu0
  %v1106 = vrot.slane %v942, 6
  %v1107 = vsel %vm467, %v902, %v1106
  %v1109 = vadd.f32 %v857, %v1107
  %v1110 = vxor.u32 %v1109, 2147483648
  %v1111 = vmul.f32 %v1110, 1.442695
  %v1112 = vpow.pop %v1111
  %v1113 = vadd.f32 %v1112, 1.0
  %v1114 = vrcp.pop %v1113
  %v1115 = vmul.f32 %v1113, %v1114
  %v1116 = vsub.f32 1.0, %v1115
  %v1117 = vmul.f32 %v1114, %v1116
  %v1118 = vadd.f32 %v1114, %v1117
  %vm1119 = vweird.f32 %v1113
  %vm1120 = vweird.f32 %v1114
  %vm1121 = vmor %vm1119, %vm1120
  %v1122 = vsel %vm1121, %v1114, %v1118
  %v1123 = vand.u32 2147483647, %v1113
  %vm1124 = vcmp.eq.f32.partialorder %v1123, 8.507059e+37
  %v1125 = vand.u32 %v1113, 2147483648
  %v1126 = vor.u32 1.1754944e-38, %v1125
  %v1127 = vsel %vm1124, %v1126, %v1122
  %v1128 = vmul.f32 1.0, %v1127
  %v1130 = vrot.slane %v857, 4
  %v1134 = vrot.slane %v1022, 6
  %v1135 = vsel %vm467, %v982, %v1134
  %v1137 = vadd.f32 %v1130, %v1135
  %v1138 = vxor.u32 %v1137, 2147483648
  %v1139 = vmul.f32 %v1138, 1.442695
  %v1140 = vpow.pop %v1139
  %v1141 = vadd.f32 %v1140, 1.0
  %v1142 = vrcp.pop %v1141
  %v1143 = vmul.f32 %v1141, %v1142
  %v1144 = vsub.f32 1.0, %v1143
  %v1145 = vmul.f32 %v1142, %v1144
  %v1146 = vadd.f32 %v1142, %v1145
  %vm1147 = vweird.f32 %v1141
  %vm1148 = vweird.f32 %v1142
  %vm1149 = vmor %vm1147, %vm1148
  %v1150 = vsel %vm1149, %v1142, %v1146
  %v1151 = vand.u32 2147483647, %v1141
  %vm1152 = vcmp.eq.f32.partialorder %v1151, 8.507059e+37
  %v1153 = vand.u32 %v1141, 2147483648
  %v1154 = vor.u32 1.1754944e-38, %v1153
  %v1155 = vsel %vm1152, %v1154, %v1150
  %v1156 = vmul.f32 1.0, %v1155
  %v1159 = vrot.slane %v1102, 6
  %v1160 = vsel %vm467, %v1062, %v1159
  %v1162 = vmul.f32 %v1128, %v1160
  %v1163 = vadd.f32 %v858, %v1162
  %v1164 = vtanh.pop %v1163
  %v1165 = vsub.f32 1.0, %v1156
  %v1166 = vmul.f32 %v1165, %v1164
  %v1167 = vmul.f32 %v1156, %v848
  %v1168 = vadd.f32 %v1166, %v1167
  %s1169 = scalar_lea.vmem %s3, 4
  %1170 = vst [vmem:[%s1169] sm:$0x3] %v1168
  %v1172 = vrot.slane %v1168, 2
  %1174 = vst [vmem:[%s4] sm:$0x3] %v1172
  // Predicated region
  $region14: #{encoder_forward.3} parent=0 // pred_check
    _
  $region15: #{encoder_forward.3} parent=0 // pred_check_branch
    %1176 = sbr.rel (0) target = $region17
  $region16: #{encoder_forward.3} parent=0 // pred_region
    _
  $region17: #{encoder_forward.3} parent=0 // pred_fallthru
    _
  // Predicated region
  $region18: #{encoder_forward.3} parent=0 // pred_check
    _
  $region19: #{encoder_forward.3} parent=0 // pred_check_branch
    %1178 = sbr.rel (0) target = $region21
  $region20: #{encoder_forward.3} parent=0 // pred_region
    _
  $region21: #{encoder_forward.3} parent=0 // pred_fallthru
    _
  // Predicated region
  $region22: #{encoder_forward.3} parent=0 // pred_check
    _
  $region23: #{encoder_forward.3} parent=0 // pred_check_branch
    %1180 = sbr.rel (0) target = $region25
  $region24: #{encoder_forward.3} parent=0 // pred_region
    _
  $region25: #{encoder_forward.3} parent=0 // pred_fallthru
    _
  // Predicated region
  $region26: #{encoder_forward.3} parent=0 // pred_check
    _
  $region27: #{encoder_forward.3} parent=0 // pred_check_branch
    %1182 = sbr.rel (0) target = $region29
  $region28: #{encoder_forward.3} parent=0 // pred_region
    _
  $region29: #{encoder_forward.3} parent=0 // pred_fallthru
    _

</llo_original>
